<compile_context>
chip_gen: v6e
topology: v6e:2x2x1
jax: 0.10.0
libtpu: 0.0.40
codegen_flags: <defaults>
</compile_context>

<pallas_src>
import functools

import numpy as np

import jax
import jax.numpy as jnp
from jax.experimental import pallas as pl
from jax.experimental.pallas import tpu as pltpu


# Packed-layout constants for 28x28 inputs (required by fc1 = Linear(64*5*5,.)).
_WB = 8    # packed row stride: col-blocks of input / col-pairs of pooled1
_R1 = 72   # packed input rows per image: 9 row-blocks x 8 col-blocks
_M1 = 56   # conv1 GEMM rows: 7 row-pairs x 8 col-pairs (last col junk)
_M2 = 40   # conv2 GEMM rows: 5 output rows x 8 cols (cols 5..7 junk)


# ----------------------------------------------------------------------------
# Pallas kernels
# ----------------------------------------------------------------------------
def _conv_stack_kernel(x_ref, w1_ref, b1_ref, w2_ref, b2_ref, o_ref, *,
                       tb, wb, m1, m2, c1, c2):
    """Fused conv1+sigmoid+pool1 + conv2+sigmoid+pool2 for `tb` images.

    x_ref : (tb, R1, 16*Cin)   4x4-superblock packed input, lanes (r, s, cin)
    w1_ref: (4, 16*Cin, 16*C1) conv1 slab weights, cols (dh, dw, p, q, co)
    b1_ref: (1, 16*C1)         conv1 bias tiled over (dh, dw, p, q)
    w2_ref: (4, 4*C1, 4*C2)    conv2 slab weights (rows (p,q,cin), cols (dh,dw,co))
    b2_ref: (1, 4*C2)          conv2 bias tiled over (dh, dw)
    o_ref : (tb, M2, C2)       pooled conv2 output, rows (I, J) with J>=5 junk
    """
    g1 = 4 * c1                                    # pooled1 lane width (= 128)
    for t in range(tb):
        x = x_ref[t]                               # (R1, 16*Cin), VMEM resident
        # ---- conv1: in-VMEM im2col via 4 shifted slabs, f32 MXU accumulation
        acc1 = None
        for a in range(2):
            for u in range(2):
                s = a * wb + u
                part = jnp.dot(x[s:s + m1, :], w1_ref[2 * a + u],
                               preferred_element_type=jnp.float32)
                acc1 = part if acc1 is None else acc1 + part
        acc1 = jax.nn.sigmoid(acc1 + b1_ref[...])  # (m1, 16*c1)
        # 2x2 max-pool == max over the 4 leading (dh, dw) lane groups; what is
        # left has lanes (p, q, co): exactly conv2's packed-lane layout.
        p01 = jnp.maximum(acc1[:, 0 * g1:1 * g1], acc1[:, 1 * g1:2 * g1])
        p23 = jnp.maximum(acc1[:, 2 * g1:3 * g1], acc1[:, 3 * g1:4 * g1])
        pooled1 = jnp.maximum(p01, p23)            # (m1, 4*c1)  -- no relayout
        # ---- conv2: same slab trick on the VMEM-resident pooled1 value
        acc2 = None
        for a in range(2):
            for u in range(2):
                s = a * wb + u
                part = jnp.dot(pooled1[s:s + m2, :], w2_ref[2 * a + u],
                               preferred_element_type=jnp.float32)
                acc2 = part if acc2 is None else acc2 + part
        acc2 = jax.nn.sigmoid(acc2 + b2_ref[...])  # (m2, 4*c2)
        q01 = jnp.maximum(acc2[:, 0 * c2:1 * c2], acc2[:, 1 * c2:2 * c2])
        q23 = jnp.maximum(acc2[:, 2 * c2:3 * c2], acc2[:, 3 * c2:4 * c2])
        o_ref[t] = jnp.maximum(q01, q23)           # (m2, c2)


def _fc_fused_kernel(x_ref, w1_ref, b1_ref, w2_ref, b2_ref, o_ref):
    """Fused fc1 -> sigmoid -> fc2 on a row tile; weights VMEM-resident."""
    h = jnp.dot(x_ref[...], w1_ref[...], preferred_element_type=jnp.float32)
    h = jax.nn.sigmoid(h + b1_ref[...])
    y = jnp.dot(h, w2_ref[...], preferred_element_type=jnp.float32) + b2_ref[...]
    o_ref[...] = y.astype(o_ref.dtype)


# ----------------------------------------------------------------------------
# Layer wrappers
# ----------------------------------------------------------------------------
def conv_stack(xp, w1q, b1t, w2q, b2t):
    """One pallas_call for conv1+sig+pool1+conv2+sig+pool2 over the batch."""
    N, R1, K1 = xp.shape
    c1 = w2q.shape[1] // 4          # 32
    c2 = w2q.shape[2] // 4          # 64
    tb = 1
    for cand in (4, 2):             # images per grid step (amortize step cost)
        if N % cand == 0:
            tb = cand
            break
    kernel = functools.partial(_conv_stack_kernel, tb=tb, wb=_WB,
                               m1=_M1, m2=_M2, c1=c1, c2=c2)
    return pl.pallas_call(
        kernel,
        out_shape=jax.ShapeDtypeStruct((N, _M2, c2), jnp.float32),
        grid=(N // tb,),
        in_specs=[
            pl.BlockSpec((tb, R1, K1), lambda n: (n, 0, 0)),
            pl.BlockSpec(w1q.shape, lambda n: (0, 0, 0)),
            pl.BlockSpec(b1t.shape, lambda n: (0, 0)),
            pl.BlockSpec(w2q.shape, lambda n: (0, 0, 0)),
            pl.BlockSpec(b2t.shape, lambda n: (0, 0)),
        ],
        out_specs=pl.BlockSpec((tb, _M2, c2), lambda n: (n, 0, 0)),
        compiler_params=pltpu.CompilerParams(
            dimension_semantics=("parallel",),
            vmem_limit_bytes=32 * 1024 * 1024),
    )(xp, w1q, b1t, w2q, b2t)


def fc_fused(x, w1, b1, w2, b2):
    """y = sigmoid(x @ w1 + b1) @ w2 + b2, one pallas_call, row-tiled."""
    N, K = x.shape
    F1 = w1.shape[1]
    F2 = w2.shape[1]
    tm = N
    for cand in (512, 256, 128, 64, 32, 16, 8):    # largest row tile dividing N
        if N % cand == 0:
            tm = cand
            break
    return pl.pallas_call(
        _fc_fused_kernel,
        out_shape=jax.ShapeDtypeStruct((N, F2), jnp.float32),
        grid=(N // tm,),
        in_specs=[
            pl.BlockSpec((tm, K), lambda i: (i, 0)),
            pl.BlockSpec((K, F1), lambda i: (0, 0)),
            pl.BlockSpec((1, F1), lambda i: (0, 0)),
            pl.BlockSpec((F1, F2), lambda i: (0, 0)),
            pl.BlockSpec((1, F2), lambda i: (0, 0)),
        ],
        out_specs=pl.BlockSpec((tm, F2), lambda i: (i, 0)),
        compiler_params=pltpu.CompilerParams(
            dimension_semantics=("parallel",),
            vmem_limit_bytes=32 * 1024 * 1024),
    )(x, w1, b1, w2, b2)


# ----------------------------------------------------------------------------
# One-time parameter layout preparation (hoisted off the forward path)
# ----------------------------------------------------------------------------
def _make_superblock_weight(w_oihw):
    """(Cout,Cin,3,3) -> (4, 16*Cin, 16*Cout) conv1 fused conv+pool GEMM weight.

    Input lanes are (r, s, cin) of a 4x4 superblock; GEMM row (H, W) of slab
    (a, u) reads superblock (H+a, W+u); column (dh, dw, p, q, co) embeds the
    3x3 tap (kh, kw) = (4a + r - 2p - dh, 4u + s - 2q - dw), zero elsewhere.
    Pooling over the leading (dh, dw) groups leaves lanes (p, q, co).
    """
    w = np.asarray(jax.device_get(w_oihw))
    Cout, Cin, KH, KW = w.shape
    w_hwio = np.transpose(w, (2, 3, 1, 0))                   # (KH, KW, Cin, Cout)
    out = np.zeros((4, 16 * Cin, 16 * Cout), np.float32)
    for a in range(2):
        for u in range(2):
            slab = 2 * a + u
            for r in range(4):
                for s in range(4):
                    row0 = (r * 4 + s) * Cin
                    for dh in range(2):
                        for dw in range(2):
                            for p in range(2):
                                for q in range(2):
                                    kh = 4 * a + r - 2 * p - dh
                                    kw = 4 * u + s - 2 * q - dw
                                    if 0 <= kh < KH and 0 <= kw < KW:
                                        col0 = ((((dh * 2 + dw) * 2 + p) * 2 + q)
                                                * Cout)
                                        out[slab, row0:row0 + Cin,
                                            col0:col0 + Cout] = w_hwio[kh, kw]
    return jnp.asarray(out)


def _make_quadrant_weight(w_oihw):
    """(Cout,Cin,3,3) -> (4, 4*Cin, 4*Cout) conv2 fused conv+pool GEMM weight.

    Input lanes (p, q, cin); GEMM row (I, J) of slab (a, u) reads packed row
    (I+a, J+u); column (dh, dw, co) embeds tap (2a+p-dh, 2u+q-dw), zero else.
    """
    w = np.asarray(jax.device_get(w_oihw))
    Cout, Cin, KH, KW = w.shape
    w_hwio = np.transpose(w, (2, 3, 1, 0))
    out = np.zeros((4, 4 * Cin, 4 * Cout), np.float32)
    for a in range(2):
        for u in range(2):
            slab = 2 * a + u
            for p in range(2):
                for q in range(2):
                    row0 = (p * 2 + q) * Cin
                    for dh in range(2):
                        for dw in range(2):
                            kh = 2 * a + p - dh
                            kw = 2 * u + q - dw
                            if 0 <= kh < KH and 0 <= kw < KW:
                                col0 = (dh * 2 + dw) * Cout
                                out[slab, row0:row0 + Cin,
                                    col0:col0 + Cout] = w_hwio[kh, kw]
    return jnp.asarray(out)


def prepare_params(params):
    c2 = params["conv2_w"].shape[0]                           # 64
    f1 = params["fc1_w"].shape[1]                             # 128
    # Fold the torch NCHW flatten AND the junk-column drop into fc1's weight:
    # the conv kernel's output features are ordered (I, J in [0,8), c); J>=5
    # rows get zero weight so the flatten is a free reshape.
    w = np.asarray(jax.device_get(params["fc1_w"])).reshape(c2, 5, 5, f1)
    w = np.transpose(w, (1, 2, 0, 3))                         # (I, J, c, f)
    w = np.pad(w, ((0, 0), (0, 3), (0, 0), (0, 0)))           # pad J -> 8
    fc1_w = jnp.asarray(w.reshape(5 * 8 * c2, f1))            # (2560, 128)
    return dict(
        conv1_wq=_make_superblock_weight(params["conv1_w"]),  # (4, 16, 512)
        conv1_b=jnp.tile(params["conv1_b"], 16)[None, :],     # (1, 512)
        conv2_wq=_make_quadrant_weight(params["conv2_w"]),    # (4, 128, 256)
        conv2_b=jnp.tile(params["conv2_b"], 4)[None, :],      # (1, 256)
        fc1_w=fc1_w,                                          # (2560, 128)
        fc1_b=params["fc1_b"][None, :],                       # (1, 128)
        fc2_w=params["fc2_w"],                                # (128, 10)
        fc2_b=params["fc2_b"][None, :],                       # (1, 10)
    )


# ----------------------------------------------------------------------------
# Forward pass
# ----------------------------------------------------------------------------
def net_sigmoid_forward(prep, x_nchw):
    N, _, H, W = x_nchw.shape
    assert H == 28 and W == 28, "NetSigmoid's fc1 requires 28x28 inputs"
    # Pack the input into 4x4 superblocks: rows (Hb, Wb), lanes (r, s, cin).
    # (Only wrapper-side layout glue left in the whole forward pass.)
    x = jnp.transpose(x_nchw, (0, 2, 3, 1))                   # (N, 28, 28, 1)
    x = jnp.pad(x, ((0, 0), (0, 8), (0, 4), (0, 0)))          # (N, 36, 32, 1)
    x = x.reshape(N, 9, 4, 8, 4, 1).transpose(0, 1, 3, 2, 4, 5)
    xp = x.reshape(N, _R1, 16)                                # (N, 72, 16)
    conv_out = conv_stack(xp, prep["conv1_wq"], prep["conv1_b"],
                          prep["conv2_wq"], prep["conv2_b"])  # (N, 40, 64)
    feats = conv_out.reshape(N, _M2 * 64)                     # free collapse
    return fc_fused(feats, prep["fc1_w"], prep["fc1_b"],
                    prep["fc2_w"], prep["fc2_b"])             # (N, 10)


# ----------------------------------------------------------------------------
# Deterministic parameter init (PyTorch-like uniform(-1/sqrt(fan_in), ...))
# ----------------------------------------------------------------------------
def init_params(key):
    ks = jax.random.split(key, 8)

    def u(k, shape, fan_in):
        bound = 1.0 / float(fan_in) ** 0.5
        return jax.random.uniform(k, shape, jnp.float32, -bound, bound)

    return dict(
        conv1_w=u(ks[0], (32, 1, 3, 3), 1 * 3 * 3),
        conv1_b=u(ks[1], (32,), 1 * 3 * 3),
        conv2_w=u(ks[2], (64, 32, 3, 3), 32 * 3 * 3),
        conv2_b=u(ks[3], (64,), 32 * 3 * 3),
        fc1_w=u(ks[4], (64 * 5 * 5, 128), 64 * 5 * 5),  # rows in torch NCHW order
        fc1_b=u(ks[5], (128,), 64 * 5 * 5),
        fc2_w=u(ks[6], (128, 10), 128),
        fc2_b=u(ks[7], (10,), 128),
    )


# ----------------------------------------------------------------------------
# Pure-JAX reference for correctness check
# ----------------------------------------------------------------------------
def reference_forward(params, x_nchw):
    y = jax.lax.conv_general_dilated(
        x_nchw, params["conv1_w"], (1, 1), "VALID",
        dimension_numbers=("NCHW", "OIHW", "NCHW"))
    y = jax.nn.sigmoid(y + params["conv1_b"][None, :, None, None])
    y = jax.lax.reduce_window(y, -jnp.inf, jax.lax.max,
                              (1, 1, 2, 2), (1, 1, 2, 2), "VALID")
    y = jax.lax.conv_general_dilated(
        y, params["conv2_w"], (1, 1), "VALID",
        dimension_numbers=("NCHW", "OIHW", "NCHW"))
    y = jax.nn.sigmoid(y + params["conv2_b"][None, :, None, None])
    y = jax.lax.reduce_window(y, -jnp.inf, jax.lax.max,
                              (1, 1, 2, 2), (1, 1, 2, 2), "VALID")
    y = y.reshape(y.shape[0], -1)
    y = jax.nn.sigmoid(y @ params["fc1_w"] + params["fc1_b"])
    return y @ params["fc2_w"] + params["fc2_b"]


if __name__ == "__main__":
    key = jax.random.PRNGKey(0)
    pkey, xkey = jax.random.split(key)
    params = init_params(pkey)
    prep = prepare_params(params)
    # fc1 expects 64*5*5 features -> spatial input must be 28x28 (MNIST-like).
    x = jax.random.normal(xkey, (2, 1, 28, 28), dtype=jnp.float32)

    fwd = jax.jit(net_sigmoid_forward)
    out = jax.block_until_ready(fwd(prep, x))
    assert out.shape == (2, 10), out.shape

    ref = jax.block_until_ready(reference_forward(params, x))
    assert jnp.allclose(out, ref, rtol=1e-4, atol=1e-4), (
        float(jnp.max(jnp.abs(out - ref))))

    print("KERNEL_OK")
</pallas_src>

<mosaic_0001>
module attributes {stable_mosaic.version = 11 : i64} {
  func.func @_conv_stack_kernel(%arg0: i32, %arg1: memref<2x72x16xf32, #tpu.memory_space<vmem>>, %arg2: memref<4x16x512xf32, #tpu.memory_space<vmem>>, %arg3: memref<1x512xf32, #tpu.memory_space<vmem>>, %arg4: memref<4x128x256xf32, #tpu.memory_space<vmem>>, %arg5: memref<1x256xf32, #tpu.memory_space<vmem>>, %arg6: memref<2x40x64xf32, #tpu.memory_space<vmem>>) attributes {dimension_semantics = [#tpu.dimension_semantics<parallel>], iteration_bounds = array<i64: 1>, scalar_prefetch = 0 : i64, scratch_operands = 0 : i64, tpu.core_type = #tpu.core_type<tc>, window_params = [{transform_indices = @transform_0, window_bounds = array<i64: 2, 72, 16>}, {pipeline_mode = #tpu.pipeline_mode<synchronous>, transform_indices = @transform_1, window_bounds = array<i64: 4, 16, 512>}, {pipeline_mode = #tpu.pipeline_mode<synchronous>, transform_indices = @transform_2, window_bounds = array<i64: 1, 512>}, {pipeline_mode = #tpu.pipeline_mode<synchronous>, transform_indices = @transform_3, window_bounds = array<i64: 4, 128, 256>}, {pipeline_mode = #tpu.pipeline_mode<synchronous>, transform_indices = @transform_4, window_bounds = array<i64: 1, 256>}, {transform_indices = @transform_5, window_bounds = array<i64: 2, 40, 64>}]} {
    %c0 = arith.constant 0 : index
    %c0_0 = arith.constant 0 : index
    %c0_1 = arith.constant 0 : index
    %0 = vector.load %arg1[%c0, %c0_0, %c0_1] : memref<2x72x16xf32, #tpu.memory_space<vmem>>, vector<1x72x16xf32>
    %1 = vector.shape_cast %0 : vector<1x72x16xf32> to vector<72x16xf32>
    %2 = vector.extract_strided_slice %1 {offsets = [0, 0], sizes = [56, 16], strides = [1, 1]} : vector<72x16xf32> to vector<56x16xf32>
    %c0_2 = arith.constant 0 : index
    %c0_3 = arith.constant 0 : index
    %c0_4 = arith.constant 0 : index
    %3 = vector.load %arg2[%c0_2, %c0_3, %c0_4] : memref<4x16x512xf32, #tpu.memory_space<vmem>>, vector<1x16x512xf32>
    %4 = vector.shape_cast %3 : vector<1x16x512xf32> to vector<16x512xf32>
    %cst = arith.constant dense<0.000000e+00> : vector<56x512xf32>
    %5 = tpu.matmul %2, %4, %cst {dimension_numbers = #tpu.dot_dimension_numbers<[1], [0], [0], [1], [0, 0, 1, 1], [], []>} : vector<56x16xf32>, vector<16x512xf32>, vector<56x512xf32> -> vector<56x512xf32>
    %6 = vector.extract_strided_slice %1 {offsets = [1, 0], sizes = [56, 16], strides = [1, 1]} : vector<72x16xf32> to vector<56x16xf32>
    %c1 = arith.constant 1 : index
    %c0_5 = arith.constant 0 : index
    %c0_6 = arith.constant 0 : index
    %7 = vector.load %arg2[%c1, %c0_5, %c0_6] : memref<4x16x512xf32, #tpu.memory_space<vmem>>, vector<1x16x512xf32>
    %8 = vector.shape_cast %7 : vector<1x16x512xf32> to vector<16x512xf32>
    %cst_7 = arith.constant dense<0.000000e+00> : vector<56x512xf32>
    %9 = tpu.matmul %6, %8, %cst_7 {dimension_numbers = #tpu.dot_dimension_numbers<[1], [0], [0], [1], [0, 0, 1, 1], [], []>} : vector<56x16xf32>, vector<16x512xf32>, vector<56x512xf32> -> vector<56x512xf32>
    %10 = arith.addf %5, %9 : vector<56x512xf32>
    %11 = vector.extract_strided_slice %1 {offsets = [8, 0], sizes = [56, 16], strides = [1, 1]} : vector<72x16xf32> to vector<56x16xf32>
    %c2 = arith.constant 2 : index
    %c0_8 = arith.constant 0 : index
    %c0_9 = arith.constant 0 : index
    %12 = vector.load %arg2[%c2, %c0_8, %c0_9] : memref<4x16x512xf32, #tpu.memory_space<vmem>>, vector<1x16x512xf32>
    %13 = vector.shape_cast %12 : vector<1x16x512xf32> to vector<16x512xf32>
    %cst_10 = arith.constant dense<0.000000e+00> : vector<56x512xf32>
    %14 = tpu.matmul %11, %13, %cst_10 {dimension_numbers = #tpu.dot_dimension_numbers<[1], [0], [0], [1], [0, 0, 1, 1], [], []>} : vector<56x16xf32>, vector<16x512xf32>, vector<56x512xf32> -> vector<56x512xf32>
    %15 = arith.addf %10, %14 : vector<56x512xf32>
    %16 = vector.extract_strided_slice %1 {offsets = [9, 0], sizes = [56, 16], strides = [1, 1]} : vector<72x16xf32> to vector<56x16xf32>
    %c3 = arith.constant 3 : index
    %c0_11 = arith.constant 0 : index
    %c0_12 = arith.constant 0 : index
    %17 = vector.load %arg2[%c3, %c0_11, %c0_12] : memref<4x16x512xf32, #tpu.memory_space<vmem>>, vector<1x16x512xf32>
    %18 = vector.shape_cast %17 : vector<1x16x512xf32> to vector<16x512xf32>
    %cst_13 = arith.constant dense<0.000000e+00> : vector<56x512xf32>
    %19 = tpu.matmul %16, %18, %cst_13 {dimension_numbers = #tpu.dot_dimension_numbers<[1], [0], [0], [1], [0, 0, 1, 1], [], []>} : vector<56x16xf32>, vector<16x512xf32>, vector<56x512xf32> -> vector<56x512xf32>
    %20 = arith.addf %15, %19 : vector<56x512xf32>
    %c0_14 = arith.constant 0 : index
    %c0_15 = arith.constant 0 : index
    %21 = vector.load %arg3[%c0_14, %c0_15] : memref<1x512xf32, #tpu.memory_space<vmem>>, vector<1x512xf32>
    %22 = vector.broadcast %21 : vector<1x512xf32> to vector<56x512xf32>
    %23 = arith.addf %20, %22 : vector<56x512xf32>
    %24 = arith.negf %23 : vector<56x512xf32>
    %25 = math.exp %24 : vector<56x512xf32>
    %cst_16 = arith.constant 1.000000e+00 : f32
    %26 = vector.broadcast %cst_16 : f32 to vector<56x512xf32>
    %27 = arith.addf %26, %25 : vector<56x512xf32>
    %28 = arith.divf %26, %27 : vector<56x512xf32>
    %29 = vector.extract_strided_slice %28 {offsets = [0, 0], sizes = [56, 128], strides = [1, 1]} : vector<56x512xf32> to vector<56x128xf32>
    %30 = vector.extract_strided_slice %28 {offsets = [0, 128], sizes = [56, 128], strides = [1, 1]} : vector<56x512xf32> to vector<56x128xf32>
    %31 = arith.maximumf %29, %30 : vector<56x128xf32>
    %32 = vector.extract_strided_slice %28 {offsets = [0, 256], sizes = [56, 128], strides = [1, 1]} : vector<56x512xf32> to vector<56x128xf32>
    %33 = vector.extract_strided_slice %28 {offsets = [0, 384], sizes = [56, 128], strides = [1, 1]} : vector<56x512xf32> to vector<56x128xf32>
    %34 = arith.maximumf %32, %33 : vector<56x128xf32>
    %35 = arith.maximumf %31, %34 : vector<56x128xf32>
    %36 = vector.extract_strided_slice %35 {offsets = [0, 0], sizes = [40, 128], strides = [1, 1]} : vector<56x128xf32> to vector<40x128xf32>
    %c0_17 = arith.constant 0 : index
    %c0_18 = arith.constant 0 : index
    %c0_19 = arith.constant 0 : index
    %37 = vector.load %arg4[%c0_17, %c0_18, %c0_19] : memref<4x128x256xf32, #tpu.memory_space<vmem>>, vector<1x128x256xf32>
    %38 = vector.shape_cast %37 : vector<1x128x256xf32> to vector<128x256xf32>
    %cst_20 = arith.constant dense<0.000000e+00> : vector<40x256xf32>
    %39 = tpu.matmul %36, %38, %cst_20 {dimension_numbers = #tpu.dot_dimension_numbers<[1], [0], [0], [1], [0, 0, 1, 1], [], []>} : vector<40x128xf32>, vector<128x256xf32>, vector<40x256xf32> -> vector<40x256xf32>
    %40 = vector.extract_strided_slice %35 {offsets = [1, 0], sizes = [40, 128], strides = [1, 1]} : vector<56x128xf32> to vector<40x128xf32>
    %c1_21 = arith.constant 1 : index
    %c0_22 = arith.constant 0 : index
    %c0_23 = arith.constant 0 : index
    %41 = vector.load %arg4[%c1_21, %c0_22, %c0_23] : memref<4x128x256xf32, #tpu.memory_space<vmem>>, vector<1x128x256xf32>
    %42 = vector.shape_cast %41 : vector<1x128x256xf32> to vector<128x256xf32>
    %cst_24 = arith.constant dense<0.000000e+00> : vector<40x256xf32>
    %43 = tpu.matmul %40, %42, %cst_24 {dimension_numbers = #tpu.dot_dimension_numbers<[1], [0], [0], [1], [0, 0, 1, 1], [], []>} : vector<40x128xf32>, vector<128x256xf32>, vector<40x256xf32> -> vector<40x256xf32>
    %44 = arith.addf %39, %43 : vector<40x256xf32>
    %45 = vector.extract_strided_slice %35 {offsets = [8, 0], sizes = [40, 128], strides = [1, 1]} : vector<56x128xf32> to vector<40x128xf32>
    %c2_25 = arith.constant 2 : index
    %c0_26 = arith.constant 0 : index
    %c0_27 = arith.constant 0 : index
    %46 = vector.load %arg4[%c2_25, %c0_26, %c0_27] : memref<4x128x256xf32, #tpu.memory_space<vmem>>, vector<1x128x256xf32>
    %47 = vector.shape_cast %46 : vector<1x128x256xf32> to vector<128x256xf32>
    %cst_28 = arith.constant dense<0.000000e+00> : vector<40x256xf32>
    %48 = tpu.matmul %45, %47, %cst_28 {dimension_numbers = #tpu.dot_dimension_numbers<[1], [0], [0], [1], [0, 0, 1, 1], [], []>} : vector<40x128xf32>, vector<128x256xf32>, vector<40x256xf32> -> vector<40x256xf32>
    %49 = arith.addf %44, %48 : vector<40x256xf32>
    %50 = vector.extract_strided_slice %35 {offsets = [9, 0], sizes = [40, 128], strides = [1, 1]} : vector<56x128xf32> to vector<40x128xf32>
    %c3_29 = arith.constant 3 : index
    %c0_30 = arith.constant 0 : index
    %c0_31 = arith.constant 0 : index
    %51 = vector.load %arg4[%c3_29, %c0_30, %c0_31] : memref<4x128x256xf32, #tpu.memory_space<vmem>>, vector<1x128x256xf32>
    %52 = vector.shape_cast %51 : vector<1x128x256xf32> to vector<128x256xf32>
    %cst_32 = arith.constant dense<0.000000e+00> : vector<40x256xf32>
    %53 = tpu.matmul %50, %52, %cst_32 {dimension_numbers = #tpu.dot_dimension_numbers<[1], [0], [0], [1], [0, 0, 1, 1], [], []>} : vector<40x128xf32>, vector<128x256xf32>, vector<40x256xf32> -> vector<40x256xf32>
    %54 = arith.addf %49, %53 : vector<40x256xf32>
    %c0_33 = arith.constant 0 : index
    %c0_34 = arith.constant 0 : index
    %55 = vector.load %arg5[%c0_33, %c0_34] : memref<1x256xf32, #tpu.memory_space<vmem>>, vector<1x256xf32>
    %56 = vector.broadcast %55 : vector<1x256xf32> to vector<40x256xf32>
    %57 = arith.addf %54, %56 : vector<40x256xf32>
    %58 = arith.negf %57 : vector<40x256xf32>
    %59 = math.exp %58 : vector<40x256xf32>
    %cst_35 = arith.constant 1.000000e+00 : f32
    %60 = vector.broadcast %cst_35 : f32 to vector<40x256xf32>
    %61 = arith.addf %60, %59 : vector<40x256xf32>
    %62 = arith.divf %60, %61 : vector<40x256xf32>
    %63 = vector.extract_strided_slice %62 {offsets = [0, 0], sizes = [40, 64], strides = [1, 1]} : vector<40x256xf32> to vector<40x64xf32>
    %64 = vector.extract_strided_slice %62 {offsets = [0, 64], sizes = [40, 64], strides = [1, 1]} : vector<40x256xf32> to vector<40x64xf32>
    %65 = arith.maximumf %63, %64 : vector<40x64xf32>
    %66 = vector.extract_strided_slice %62 {offsets = [0, 128], sizes = [40, 64], strides = [1, 1]} : vector<40x256xf32> to vector<40x64xf32>
    %67 = vector.extract_strided_slice %62 {offsets = [0, 192], sizes = [40, 64], strides = [1, 1]} : vector<40x256xf32> to vector<40x64xf32>
    %68 = arith.maximumf %66, %67 : vector<40x64xf32>
    %69 = arith.maximumf %65, %68 : vector<40x64xf32>
    %c0_36 = arith.constant 0 : index
    %c0_37 = arith.constant 0 : index
    %c0_38 = arith.constant 0 : index
    %70 = vector.load %arg6[%c0_36, %c0_37, %c0_38] : memref<2x40x64xf32, #tpu.memory_space<vmem>>, vector<1x40x64xf32>
    %71 = vector.shape_cast %70 : vector<1x40x64xf32> to vector<40x64xf32>
    %72 = vector.shape_cast %69 : vector<40x64xf32> to vector<1x40x64xf32>
    tpu.vector_store %arg6[%c0_36, %c0_37, %c0_38], %72 {strides = array<i32>} : memref<2x40x64xf32, #tpu.memory_space<vmem>>, vector<1x40x64xf32>,
    %c1_39 = arith.constant 1 : index
    %c0_40 = arith.constant 0 : index
    %c0_41 = arith.constant 0 : index
    %73 = vector.load %arg1[%c1_39, %c0_40, %c0_41] : memref<2x72x16xf32, #tpu.memory_space<vmem>>, vector<1x72x16xf32>
    %74 = vector.shape_cast %73 : vector<1x72x16xf32> to vector<72x16xf32>
    %75 = vector.extract_strided_slice %74 {offsets = [0, 0], sizes = [56, 16], strides = [1, 1]} : vector<72x16xf32> to vector<56x16xf32>
    %c0_42 = arith.constant 0 : index
    %c0_43 = arith.constant 0 : index
    %c0_44 = arith.constant 0 : index
    %76 = vector.load %arg2[%c0_42, %c0_43, %c0_44] : memref<4x16x512xf32, #tpu.memory_space<vmem>>, vector<1x16x512xf32>
    %77 = vector.shape_cast %76 : vector<1x16x512xf32> to vector<16x512xf32>
    %cst_45 = arith.constant dense<0.000000e+00> : vector<56x512xf32>
    %78 = tpu.matmul %75, %77, %cst_45 {dimension_numbers = #tpu.dot_dimension_numbers<[1], [0], [0], [1], [0, 0, 1, 1], [], []>} : vector<56x16xf32>, vector<16x512xf32>, vector<56x512xf32> -> vector<56x512xf32>
    %79 = vector.extract_strided_slice %74 {offsets = [1, 0], sizes = [56, 16], strides = [1, 1]} : vector<72x16xf32> to vector<56x16xf32>
    %c1_46 = arith.constant 1 : index
    %c0_47 = arith.constant 0 : index
    %c0_48 = arith.constant 0 : index
    %80 = vector.load %arg2[%c1_46, %c0_47, %c0_48] : memref<4x16x512xf32, #tpu.memory_space<vmem>>, vector<1x16x512xf32>
    %81 = vector.shape_cast %80 : vector<1x16x512xf32> to vector<16x512xf32>
    %cst_49 = arith.constant dense<0.000000e+00> : vector<56x512xf32>
    %82 = tpu.matmul %79, %81, %cst_49 {dimension_numbers = #tpu.dot_dimension_numbers<[1], [0], [0], [1], [0, 0, 1, 1], [], []>} : vector<56x16xf32>, vector<16x512xf32>, vector<56x512xf32> -> vector<56x512xf32>
    %83 = arith.addf %78, %82 : vector<56x512xf32>
    %84 = vector.extract_strided_slice %74 {offsets = [8, 0], sizes = [56, 16], strides = [1, 1]} : vector<72x16xf32> to vector<56x16xf32>
    %c2_50 = arith.constant 2 : index
    %c0_51 = arith.constant 0 : index
    %c0_52 = arith.constant 0 : index
    %85 = vector.load %arg2[%c2_50, %c0_51, %c0_52] : memref<4x16x512xf32, #tpu.memory_space<vmem>>, vector<1x16x512xf32>
    %86 = vector.shape_cast %85 : vector<1x16x512xf32> to vector<16x512xf32>
    %cst_53 = arith.constant dense<0.000000e+00> : vector<56x512xf32>
    %87 = tpu.matmul %84, %86, %cst_53 {dimension_numbers = #tpu.dot_dimension_numbers<[1], [0], [0], [1], [0, 0, 1, 1], [], []>} : vector<56x16xf32>, vector<16x512xf32>, vector<56x512xf32> -> vector<56x512xf32>
    %88 = arith.addf %83, %87 : vector<56x512xf32>
    %89 = vector.extract_strided_slice %74 {offsets = [9, 0], sizes = [56, 16], strides = [1, 1]} : vector<72x16xf32> to vector<56x16xf32>
    %c3_54 = arith.constant 3 : index
    %c0_55 = arith.constant 0 : index
    %c0_56 = arith.constant 0 : index
    %90 = vector.load %arg2[%c3_54, %c0_55, %c0_56] : memref<4x16x512xf32, #tpu.memory_space<vmem>>, vector<1x16x512xf32>
    %91 = vector.shape_cast %90 : vector<1x16x512xf32> to vector<16x512xf32>
    %cst_57 = arith.constant dense<0.000000e+00> : vector<56x512xf32>
    %92 = tpu.matmul %89, %91, %cst_57 {dimension_numbers = #tpu.dot_dimension_numbers<[1], [0], [0], [1], [0, 0, 1, 1], [], []>} : vector<56x16xf32>, vector<16x512xf32>, vector<56x512xf32> -> vector<56x512xf32>
    %93 = arith.addf %88, %92 : vector<56x512xf32>
    %c0_58 = arith.constant 0 : index
    %c0_59 = arith.constant 0 : index
    %94 = vector.load %arg3[%c0_58, %c0_59] : memref<1x512xf32, #tpu.memory_space<vmem>>, vector<1x512xf32>
    %95 = vector.broadcast %94 : vector<1x512xf32> to vector<56x512xf32>
    %96 = arith.addf %93, %95 : vector<56x512xf32>
    %97 = arith.negf %96 : vector<56x512xf32>
    %98 = math.exp %97 : vector<56x512xf32>
    %cst_60 = arith.constant 1.000000e+00 : f32
    %99 = vector.broadcast %cst_60 : f32 to vector<56x512xf32>
    %100 = arith.addf %99, %98 : vector<56x512xf32>
    %101 = arith.divf %99, %100 : vector<56x512xf32>
    %102 = vector.extract_strided_slice %101 {offsets = [0, 0], sizes = [56, 128], strides = [1, 1]} : vector<56x512xf32> to vector<56x128xf32>
    %103 = vector.extract_strided_slice %101 {offsets = [0, 128], sizes = [56, 128], strides = [1, 1]} : vector<56x512xf32> to vector<56x128xf32>
    %104 = arith.maximumf %102, %103 : vector<56x128xf32>
    %105 = vector.extract_strided_slice %101 {offsets = [0, 256], sizes = [56, 128], strides = [1, 1]} : vector<56x512xf32> to vector<56x128xf32>
    %106 = vector.extract_strided_slice %101 {offsets = [0, 384], sizes = [56, 128], strides = [1, 1]} : vector<56x512xf32> to vector<56x128xf32>
    %107 = arith.maximumf %105, %106 : vector<56x128xf32>
    %108 = arith.maximumf %104, %107 : vector<56x128xf32>
    %109 = vector.extract_strided_slice %108 {offsets = [0, 0], sizes = [40, 128], strides = [1, 1]} : vector<56x128xf32> to vector<40x128xf32>
    %c0_61 = arith.constant 0 : index
    %c0_62 = arith.constant 0 : index
    %c0_63 = arith.constant 0 : index
    %110 = vector.load %arg4[%c0_61, %c0_62, %c0_63] : memref<4x128x256xf32, #tpu.memory_space<vmem>>, vector<1x128x256xf32>
    %111 = vector.shape_cast %110 : vector<1x128x256xf32> to vector<128x256xf32>
    %cst_64 = arith.constant dense<0.000000e+00> : vector<40x256xf32>
    %112 = tpu.matmul %109, %111, %cst_64 {dimension_numbers = #tpu.dot_dimension_numbers<[1], [0], [0], [1], [0, 0, 1, 1], [], []>} : vector<40x128xf32>, vector<128x256xf32>, vector<40x256xf32> -> vector<40x256xf32>
    %113 = vector.extract_strided_slice %108 {offsets = [1, 0], sizes = [40, 128], strides = [1, 1]} : vector<56x128xf32> to vector<40x128xf32>
    %c1_65 = arith.constant 1 : index
    %c0_66 = arith.constant 0 : index
    %c0_67 = arith.constant 0 : index
    %114 = vector.load %arg4[%c1_65, %c0_66, %c0_67] : memref<4x128x256xf32, #tpu.memory_space<vmem>>, vector<1x128x256xf32>
    %115 = vector.shape_cast %114 : vector<1x128x256xf32> to vector<128x256xf32>
    %cst_68 = arith.constant dense<0.000000e+00> : vector<40x256xf32>
    %116 = tpu.matmul %113, %115, %cst_68 {dimension_numbers = #tpu.dot_dimension_numbers<[1], [0], [0], [1], [0, 0, 1, 1], [], []>} : vector<40x128xf32>, vector<128x256xf32>, vector<40x256xf32> -> vector<40x256xf32>
    %117 = arith.addf %112, %116 : vector<40x256xf32>
    %118 = vector.extract_strided_slice %108 {offsets = [8, 0], sizes = [40, 128], strides = [1, 1]} : vector<56x128xf32> to vector<40x128xf32>
    %c2_69 = arith.constant 2 : index
    %c0_70 = arith.constant 0 : index
    %c0_71 = arith.constant 0 : index
    %119 = vector.load %arg4[%c2_69, %c0_70, %c0_71] : memref<4x128x256xf32, #tpu.memory_space<vmem>>, vector<1x128x256xf32>
    %120 = vector.shape_cast %119 : vector<1x128x256xf32> to vector<128x256xf32>
    %cst_72 = arith.constant dense<0.000000e+00> : vector<40x256xf32>
    %121 = tpu.matmul %118, %120, %cst_72 {dimension_numbers = #tpu.dot_dimension_numbers<[1], [0], [0], [1], [0, 0, 1, 1], [], []>} : vector<40x128xf32>, vector<128x256xf32>, vector<40x256xf32> -> vector<40x256xf32>
    %122 = arith.addf %117, %121 : vector<40x256xf32>
    %123 = vector.extract_strided_slice %108 {offsets = [9, 0], sizes = [40, 128], strides = [1, 1]} : vector<56x128xf32> to vector<40x128xf32>
    %c3_73 = arith.constant 3 : index
    %c0_74 = arith.constant 0 : index
    %c0_75 = arith.constant 0 : index
    %124 = vector.load %arg4[%c3_73, %c0_74, %c0_75] : memref<4x128x256xf32, #tpu.memory_space<vmem>>, vector<1x128x256xf32>
    %125 = vector.shape_cast %124 : vector<1x128x256xf32> to vector<128x256xf32>
    %cst_76 = arith.constant dense<0.000000e+00> : vector<40x256xf32>
    %126 = tpu.matmul %123, %125, %cst_76 {dimension_numbers = #tpu.dot_dimension_numbers<[1], [0], [0], [1], [0, 0, 1, 1], [], []>} : vector<40x128xf32>, vector<128x256xf32>, vector<40x256xf32> -> vector<40x256xf32>
    %127 = arith.addf %122, %126 : vector<40x256xf32>
    %c0_77 = arith.constant 0 : index
    %c0_78 = arith.constant 0 : index
    %128 = vector.load %arg5[%c0_77, %c0_78] : memref<1x256xf32, #tpu.memory_space<vmem>>, vector<1x256xf32>
    %129 = vector.broadcast %128 : vector<1x256xf32> to vector<40x256xf32>
    %130 = arith.addf %127, %129 : vector<40x256xf32>
    %131 = arith.negf %130 : vector<40x256xf32>
    %132 = math.exp %131 : vector<40x256xf32>
    %cst_79 = arith.constant 1.000000e+00 : f32
    %133 = vector.broadcast %cst_79 : f32 to vector<40x256xf32>
    %134 = arith.addf %133, %132 : vector<40x256xf32>
    %135 = arith.divf %133, %134 : vector<40x256xf32>
    %136 = vector.extract_strided_slice %135 {offsets = [0, 0], sizes = [40, 64], strides = [1, 1]} : vector<40x256xf32> to vector<40x64xf32>
    %137 = vector.extract_strided_slice %135 {offsets = [0, 64], sizes = [40, 64], strides = [1, 1]} : vector<40x256xf32> to vector<40x64xf32>
    %138 = arith.maximumf %136, %137 : vector<40x64xf32>
    %139 = vector.extract_strided_slice %135 {offsets = [0, 128], sizes = [40, 64], strides = [1, 1]} : vector<40x256xf32> to vector<40x64xf32>
    %140 = vector.extract_strided_slice %135 {offsets = [0, 192], sizes = [40, 64], strides = [1, 1]} : vector<40x256xf32> to vector<40x64xf32>
    %141 = arith.maximumf %139, %140 : vector<40x64xf32>
    %142 = arith.maximumf %138, %141 : vector<40x64xf32>
    %c1_80 = arith.constant 1 : index
    %c0_81 = arith.constant 0 : index
    %c0_82 = arith.constant 0 : index
    %143 = vector.load %arg6[%c1_80, %c0_81, %c0_82] : memref<2x40x64xf32, #tpu.memory_space<vmem>>, vector<1x40x64xf32>
    %144 = vector.shape_cast %143 : vector<1x40x64xf32> to vector<40x64xf32>
    %145 = vector.shape_cast %142 : vector<40x64xf32> to vector<1x40x64xf32>
    tpu.vector_store %arg6[%c1_80, %c0_81, %c0_82], %145 {strides = array<i32>} : memref<2x40x64xf32, #tpu.memory_space<vmem>>, vector<1x40x64xf32>,
    return
  }
  func.func @transform_0(%arg0: i32) -> (i32, i32, i32) {
    %c0_i32 = arith.constant 0 : i32
    %c0_i32_0 = arith.constant 0 : i32
    %c0_i32_1 = arith.constant 0 : i32
    return %arg0, %c0_i32, %c0_i32_0 : i32, i32, i32
  }
  func.func @transform_1(%arg0: i32) -> (i32, i32, i32) {
    %c0_i32 = arith.constant 0 : i32
    %c0_i32_0 = arith.constant 0 : i32
    %c0_i32_1 = arith.constant 0 : i32
    %c0_i32_2 = arith.constant 0 : i32
    return %c0_i32, %c0_i32_0, %c0_i32_1 : i32, i32, i32
  }
  func.func @transform_2(%arg0: i32) -> (i32, i32) {
    %c0_i32 = arith.constant 0 : i32
    %c0_i32_0 = arith.constant 0 : i32
    %c0_i32_1 = arith.constant 0 : i32
    return %c0_i32, %c0_i32_0 : i32, i32
  }
  func.func @transform_3(%arg0: i32) -> (i32, i32, i32) {
    %c0_i32 = arith.constant 0 : i32
    %c0_i32_0 = arith.constant 0 : i32
    %c0_i32_1 = arith.constant 0 : i32
    %c0_i32_2 = arith.constant 0 : i32
    return %c0_i32, %c0_i32_0, %c0_i32_1 : i32, i32, i32
  }
  func.func @transform_4(%arg0: i32) -> (i32, i32) {
    %c0_i32 = arith.constant 0 : i32
    %c0_i32_0 = arith.constant 0 : i32
    %c0_i32_1 = arith.constant 0 : i32
    return %c0_i32, %c0_i32_0 : i32, i32
  }
  func.func @transform_5(%arg0: i32) -> (i32, i32, i32) {
    %c0_i32 = arith.constant 0 : i32
    %c0_i32_0 = arith.constant 0 : i32
    %c0_i32_1 = arith.constant 0 : i32
    return %arg0, %c0_i32, %c0_i32_0 : i32, i32, i32
  }
}

module attributes {stable_mosaic.version = 11 : i64} {
  func.func @_fc_fused_kernel(%arg0: i32, %arg1: memref<2x2560xf32, #tpu.memory_space<vmem>>, %arg2: memref<2560x128xf32, #tpu.memory_space<vmem>>, %arg3: memref<1x128xf32, #tpu.memory_space<vmem>>, %arg4: memref<128x10xf32, #tpu.memory_space<vmem>>, %arg5: memref<1x10xf32, #tpu.memory_space<vmem>>, %arg6: memref<2x10xf32, #tpu.memory_space<vmem>>) attributes {dimension_semantics = [#tpu.dimension_semantics<parallel>], iteration_bounds = array<i64: 1>, scalar_prefetch = 0 : i64, scratch_operands = 0 : i64, tpu.core_type = #tpu.core_type<tc>, window_params = [{transform_indices = @transform_0, window_bounds = array<i64: 2, 2560>}, {pipeline_mode = #tpu.pipeline_mode<synchronous>, transform_indices = @transform_1, window_bounds = array<i64: 2560, 128>}, {pipeline_mode = #tpu.pipeline_mode<synchronous>, transform_indices = @transform_2, window_bounds = array<i64: 1, 128>}, {pipeline_mode = #tpu.pipeline_mode<synchronous>, transform_indices = @transform_3, window_bounds = array<i64: 128, 10>}, {pipeline_mode = #tpu.pipeline_mode<synchronous>, transform_indices = @transform_4, window_bounds = array<i64: 1, 10>}, {transform_indices = @transform_5, window_bounds = array<i64: 2, 10>}]} {
    %c0 = arith.constant 0 : index
    %c0_0 = arith.constant 0 : index
    %0 = vector.load %arg1[%c0, %c0_0] : memref<2x2560xf32, #tpu.memory_space<vmem>>, vector<2x2560xf32>
    %c0_1 = arith.constant 0 : index
    %c0_2 = arith.constant 0 : index
    %1 = vector.load %arg2[%c0_1, %c0_2] : memref<2560x128xf32, #tpu.memory_space<vmem>>, vector<2560x128xf32>
    %cst = arith.constant dense<0.000000e+00> : vector<2x128xf32>
    %2 = tpu.matmul %0, %1, %cst {dimension_numbers = #tpu.dot_dimension_numbers<[1], [0], [0], [1], [0, 0, 1, 1], [], []>} : vector<2x2560xf32>, vector<2560x128xf32>, vector<2x128xf32> -> vector<2x128xf32>
    %c0_3 = arith.constant 0 : index
    %c0_4 = arith.constant 0 : index
    %3 = vector.load %arg3[%c0_3, %c0_4] : memref<1x128xf32, #tpu.memory_space<vmem>>, vector<1x128xf32>
    %4 = vector.broadcast %3 : vector<1x128xf32> to vector<2x128xf32>
    %5 = arith.addf %2, %4 : vector<2x128xf32>
    %6 = arith.negf %5 : vector<2x128xf32>
    %7 = math.exp %6 : vector<2x128xf32>
    %cst_5 = arith.constant 1.000000e+00 : f32
    %8 = vector.broadcast %cst_5 : f32 to vector<2x128xf32>
    %9 = arith.addf %8, %7 : vector<2x128xf32>
    %10 = arith.divf %8, %9 : vector<2x128xf32>
    %c0_6 = arith.constant 0 : index
    %c0_7 = arith.constant 0 : index
    %11 = vector.load %arg4[%c0_6, %c0_7] : memref<128x10xf32, #tpu.memory_space<vmem>>, vector<128x10xf32>
    %cst_8 = arith.constant dense<0.000000e+00> : vector<2x10xf32>
    %12 = tpu.matmul %10, %11, %cst_8 {dimension_numbers = #tpu.dot_dimension_numbers<[1], [0], [0], [1], [0, 0, 1, 1], [], []>} : vector<2x128xf32>, vector<128x10xf32>, vector<2x10xf32> -> vector<2x10xf32>
    %c0_9 = arith.constant 0 : index
    %c0_10 = arith.constant 0 : index
    %13 = vector.load %arg5[%c0_9, %c0_10] : memref<1x10xf32, #tpu.memory_space<vmem>>, vector<1x10xf32>
    %14 = vector.broadcast %13 : vector<1x10xf32> to vector<2x10xf32>
    %15 = arith.addf %12, %14 : vector<2x10xf32>
    %c0_11 = arith.constant 0 : index
    %c0_12 = arith.constant 0 : index
    %16 = vector.load %arg6[%c0_11, %c0_12] : memref<2x10xf32, #tpu.memory_space<vmem>>, vector<2x10xf32>
    tpu.vector_store %arg6[%c0_11, %c0_12], %15 {strides = array<i32>} : memref<2x10xf32, #tpu.memory_space<vmem>>, vector<2x10xf32>,
    return
  }
  func.func @transform_0(%arg0: i32) -> (i32, i32) {
    %c0_i32 = arith.constant 0 : i32
    %c0_i32_0 = arith.constant 0 : i32
    return %arg0, %c0_i32 : i32, i32
  }
  func.func @transform_1(%arg0: i32) -> (i32, i32) {
    %c0_i32 = arith.constant 0 : i32
    %c0_i32_0 = arith.constant 0 : i32
    %c0_i32_1 = arith.constant 0 : i32
    return %c0_i32, %c0_i32_0 : i32, i32
  }
  func.func @transform_2(%arg0: i32) -> (i32, i32) {
    %c0_i32 = arith.constant 0 : i32
    %c0_i32_0 = arith.constant 0 : i32
    %c0_i32_1 = arith.constant 0 : i32
    return %c0_i32, %c0_i32_0 : i32, i32
  }
  func.func @transform_3(%arg0: i32) -> (i32, i32) {
    %c0_i32 = arith.constant 0 : i32
    %c0_i32_0 = arith.constant 0 : i32
    %c0_i32_1 = arith.constant 0 : i32
    return %c0_i32, %c0_i32_0 : i32, i32
  }
  func.func @transform_4(%arg0: i32) -> (i32, i32) {
    %c0_i32 = arith.constant 0 : i32
    %c0_i32_0 = arith.constant 0 : i32
    %c0_i32_1 = arith.constant 0 : i32
    return %c0_i32, %c0_i32_0 : i32, i32
  }
  func.func @transform_5(%arg0: i32) -> (i32, i32) {
    %c0_i32 = arith.constant 0 : i32
    %c0_i32_0 = arith.constant 0 : i32
    return %arg0, %c0_i32 : i32, i32
  }
}

</mosaic_0001>

<llo_original>
// kernel: net_sigmoid_forward.3
$region0: #{net_sigmoid_forward.3}
  #allocation0 [shape = 'u32[]', space=smem, size = 0x4, offset = 0x4, fixed_abs, tag = 'smem constant byte address 0x4 - core index']
  #allocation1 [shape = 'u32[144,128]{1,0:T(1,128)}', space=vmem, size = 0x12000, scoped, tag = 'internal scratch']
  %s0 = inlined_call_operand.vmem [shape: f32[2,2560], index: 0, kind: input, shape index: {}]
  %s1 = inlined_call_operand.vmem [shape: f32[2560,128], index: 1, kind: input, shape index: {}]
  %s2 = inlined_call_operand.vmem [shape: f32[1,128], index: 2, kind: input, shape index: {}]
  %s3 = inlined_call_operand.vmem [shape: f32[128,10], index: 3, kind: input, shape index: {}]
  %s4 = inlined_call_operand.vmem [shape: f32[1,10], index: 4, kind: input, shape index: {}]
  %s5 = inlined_call_operand.hbm [shape: f32[2,10], index: 5, kind: output, shape index: {}]
  %s6 = sld [smem:[#allocation0]]
  $region30: #{net_sigmoid_forward.3} parent=0
    _
  %s8 = ssub.s32 1, %s6
  %s9 = scalar_select 0, %s8, %s6
  $region1: #{net_sigmoid_forward.3} parent=0
    #allocation2 [shape = 'u8[1024]{0}', space=vmem, size = 0x400, scoped, tag = 'output window, operand 0, single buffered']
    #allocation3 [shape = 's32[1]{0}', space=sflag, size = 0x4, scoped, tag = 'scoped memory for net_sigmoid_forward.3']
    %10 = vsyncpa [#allocation3], 0
    // Predicated region
    $region2: #{net_sigmoid_forward.3} parent=1 // pred_check
      _
    $region3: #{net_sigmoid_forward.3} parent=1 // pred_check_branch
      %12 = sbr.rel (0) target = $region5
    $region4: #{net_sigmoid_forward.3} parent=1 // pred_region
      _
    $region5: #{net_sigmoid_forward.3} parent=1 // pred_fallthru
      _
    // Predicated region
    $region6: #{net_sigmoid_forward.3} parent=1 // pred_check
      _
    $region7: #{net_sigmoid_forward.3} parent=1 // pred_check_branch
      %14 = sbr.rel (0) target = $region9
    $region8: #{net_sigmoid_forward.3} parent=1 // pred_region
      _
    $region9: #{net_sigmoid_forward.3} parent=1 // pred_fallthru
      _
    // Predicated region
    $region10: #{net_sigmoid_forward.3} parent=1 // pred_check
      _
    $region11: #{net_sigmoid_forward.3} parent=1 // pred_check_branch
      %16 = sbr.rel (0) target = $region13
    $region12: #{net_sigmoid_forward.3} parent=1 // pred_region
      _
    $region13: #{net_sigmoid_forward.3} parent=1 // pred_fallthru
      _
    // Predicated region
    $region14: #{net_sigmoid_forward.3} parent=1 // pred_check
      _
    $region15: #{net_sigmoid_forward.3} parent=1 // pred_check_branch
      %18 = sbr.rel (0) target = $region17
    $region16: #{net_sigmoid_forward.3} parent=1 // pred_region
      _
    $region17: #{net_sigmoid_forward.3} parent=1 // pred_fallthru
      _
    // Predicated region
    $region18: #{net_sigmoid_forward.3} parent=1 // pred_check
      _
    $region19: #{net_sigmoid_forward.3} parent=1 // pred_check_branch
      %20 = sbr.rel (0) target = $region21
    $region20: #{net_sigmoid_forward.3} parent=1 // pred_region
      _
    $region21: #{net_sigmoid_forward.3} parent=1 // pred_fallthru
      _
    %v21 = vld [vmem:[%s0] sm:$0xff]
    %v22 = vld [vmem:[%s0 + $0x8] sm:$0xff]
    %v23 = vld [vmem:[%s0 + $0x10] sm:$0xff]
    %v24 = vld [vmem:[%s0 + $0x18] sm:$0xff]
    %v25 = vld [vmem:[%s0 + $0x20] sm:$0xff]
    %v26 = vld [vmem:[%s1] sm:$0xff]
    %v27 = vld [vmem:[%s1 + $0x8] sm:$0xff]
    %v28 = vld [vmem:[%s1 + $0x10] sm:$0xff]
    %v29 = vld [vmem:[%s1 + $0x18] sm:$0xff]
    %v30 = vld [vmem:[%s1 + $0x20] sm:$0xff]
    %v31 = vld [vmem:[%s1 + $0x28] sm:$0xff]
    %v32 = vld [vmem:[%s1 + $0x30] sm:$0xff]
    %v33 = vld [vmem:[%s1 + $0x38] sm:$0xff]
    %v34 = vld [vmem:[%s1 + $0x40] sm:$0xff]
    %v35 = vld [vmem:[%s1 + $0x48] sm:$0xff]
    %v36 = vld [vmem:[%s1 + $0x50] sm:$0xff]
    %v37 = vld [vmem:[%s1 + $0x58] sm:$0xff]
    %v38 = vld [vmem:[%s1 + $0x60] sm:$0xff]
    %v39 = vld [vmem:[%s1 + $0x68] sm:$0xff]
    %v40 = vld [vmem:[%s1 + $0x70] sm:$0xff]
    %v41 = vld [vmem:[%s1 + $0x78] sm:$0xff]
    %v42 = vld [vmem:[%s1 + $0x80] sm:$0xff]
    %v43 = vld [vmem:[%s1 + $0x88] sm:$0xff]
    %v44 = vld [vmem:[%s1 + $0x90] sm:$0xff]
    %v45 = vld [vmem:[%s1 + $0x98] sm:$0xff]
    %v46 = vld [vmem:[%s1 + $0xa0] sm:$0xff]
    %v47 = vld [vmem:[%s1 + $0xa8] sm:$0xff]
    %v48 = vld [vmem:[%s1 + $0xb0] sm:$0xff]
    %v49 = vld [vmem:[%s1 + $0xb8] sm:$0xff]
    %v50 = vld [vmem:[%s1 + $0xc0] sm:$0xff]
    %v51 = vld [vmem:[%s1 + $0xc8] sm:$0xff]
    %v52 = vld [vmem:[%s1 + $0xd0] sm:$0xff]
    %v53 = vld [vmem:[%s1 + $0xd8] sm:$0xff]
    %v54 = vld [vmem:[%s1 + $0xe0] sm:$0xff]
    %v55 = vld [vmem:[%s1 + $0xe8] sm:$0xff]
    %v56 = vld [vmem:[%s1 + $0xf0] sm:$0xff]
    %v57 = vld [vmem:[%s1 + $0xf8] sm:$0xff]
    %v58 = vld [vmem:[%s1 + $0x100] sm:$0xff]
    %v59 = vld [vmem:[%s1 + $0x108] sm:$0xff]
    %v60 = vld [vmem:[%s1 + $0x110] sm:$0xff]
    %v61 = vld [vmem:[%s1 + $0x118] sm:$0xff]
    %v62 = vld [vmem:[%s1 + $0x120] sm:$0xff]
    %v63 = vld [vmem:[%s1 + $0x128] sm:$0xff]
    %v64 = vld [vmem:[%s1 + $0x130] sm:$0xff]
    %v65 = vld [vmem:[%s1 + $0x138] sm:$0xff]
    %v66 = vld [vmem:[%s1 + $0x140] sm:$0xff]
    %v67 = vld [vmem:[%s1 + $0x148] sm:$0xff]
    %v68 = vld [vmem:[%s1 + $0x150] sm:$0xff]
    %v69 = vld [vmem:[%s1 + $0x158] sm:$0xff]
    %v70 = vld [vmem:[%s1 + $0x160] sm:$0xff]
    %v71 = vld [vmem:[%s1 + $0x168] sm:$0xff]
    %v72 = vld [vmem:[%s1 + $0x170] sm:$0xff]
    %v73 = vld [vmem:[%s1 + $0x178] sm:$0xff]
    %v74 = vld [vmem:[%s1 + $0x180] sm:$0xff]
    %v75 = vld [vmem:[%s1 + $0x188] sm:$0xff]
    %v76 = vld [vmem:[%s1 + $0x190] sm:$0xff]
    %v77 = vld [vmem:[%s1 + $0x198] sm:$0xff]
    %v78 = vld [vmem:[%s1 + $0x1a0] sm:$0xff]
    %v79 = vld [vmem:[%s1 + $0x1a8] sm:$0xff]
    %v80 = vld [vmem:[%s1 + $0x1b0] sm:$0xff]
    %v81 = vld [vmem:[%s1 + $0x1b8] sm:$0xff]
    %v82 = vld [vmem:[%s1 + $0x1c0] sm:$0xff]
    %v83 = vld [vmem:[%s1 + $0x1c8] sm:$0xff]
    %v84 = vld [vmem:[%s1 + $0x1d0] sm:$0xff]
    %v85 = vld [vmem:[%s1 + $0x1d8] sm:$0xff]
    %v86 = vld [vmem:[%s1 + $0x1e0] sm:$0xff]
    %v87 = vld [vmem:[%s1 + $0x1e8] sm:$0xff]
    %v88 = vld [vmem:[%s1 + $0x1f0] sm:$0xff]
    %v89 = vld [vmem:[%s1 + $0x1f8] sm:$0xff]
    %v90 = vld [vmem:[%s1 + $0x200] sm:$0xff]
    %v91 = vld [vmem:[%s1 + $0x208] sm:$0xff]
    %v92 = vld [vmem:[%s1 + $0x210] sm:$0xff]
    %v93 = vld [vmem:[%s1 + $0x218] sm:$0xff]
    %v94 = vld [vmem:[%s1 + $0x220] sm:$0xff]
    %v95 = vld [vmem:[%s1 + $0x228] sm:$0xff]
    %v96 = vld [vmem:[%s1 + $0x230] sm:$0xff]
    %v97 = vld [vmem:[%s1 + $0x238] sm:$0xff]
    %v98 = vld [vmem:[%s1 + $0x240] sm:$0xff]
    %v99 = vld [vmem:[%s1 + $0x248] sm:$0xff]
    %v100 = vld [vmem:[%s1 + $0x250] sm:$0xff]
    %v101 = vld [vmem:[%s1 + $0x258] sm:$0xff]
    %v102 = vld [vmem:[%s1 + $0x260] sm:$0xff]
    %v103 = vld [vmem:[%s1 + $0x268] sm:$0xff]
    %v104 = vld [vmem:[%s1 + $0x270] sm:$0xff]
    %v105 = vld [vmem:[%s1 + $0x278] sm:$0xff]
    %v106 = vld [vmem:[%s1 + $0x280] sm:$0xff]
    %v107 = vld [vmem:[%s1 + $0x288] sm:$0xff]
    %v108 = vld [vmem:[%s1 + $0x290] sm:$0xff]
    %v109 = vld [vmem:[%s1 + $0x298] sm:$0xff]
    %v110 = vld [vmem:[%s1 + $0x2a0] sm:$0xff]
    %v111 = vld [vmem:[%s1 + $0x2a8] sm:$0xff]
    %v112 = vld [vmem:[%s1 + $0x2b0] sm:$0xff]
    %v113 = vld [vmem:[%s1 + $0x2b8] sm:$0xff]
    %v114 = vld [vmem:[%s1 + $0x2c0] sm:$0xff]
    %v115 = vld [vmem:[%s1 + $0x2c8] sm:$0xff]
    %v116 = vld [vmem:[%s1 + $0x2d0] sm:$0xff]
    %v117 = vld [vmem:[%s1 + $0x2d8] sm:$0xff]
    %v118 = vld [vmem:[%s1 + $0x2e0] sm:$0xff]
    %v119 = vld [vmem:[%s1 + $0x2e8] sm:$0xff]
    %v120 = vld [vmem:[%s1 + $0x2f0] sm:$0xff]
    %v121 = vld [vmem:[%s1 + $0x2f8] sm:$0xff]
    %v122 = vld [vmem:[%s1 + $0x300] sm:$0xff]
    %v123 = vld [vmem:[%s1 + $0x308] sm:$0xff]
    %v124 = vld [vmem:[%s1 + $0x310] sm:$0xff]
    %v125 = vld [vmem:[%s1 + $0x318] sm:$0xff]
    %v126 = vld [vmem:[%s1 + $0x320] sm:$0xff]
    %v127 = vld [vmem:[%s1 + $0x328] sm:$0xff]
    %v128 = vld [vmem:[%s1 + $0x330] sm:$0xff]
    %v129 = vld [vmem:[%s1 + $0x338] sm:$0xff]
    %v130 = vld [vmem:[%s1 + $0x340] sm:$0xff]
    %v131 = vld [vmem:[%s1 + $0x348] sm:$0xff]
    %v132 = vld [vmem:[%s1 + $0x350] sm:$0xff]
    %v133 = vld [vmem:[%s1 + $0x358] sm:$0xff]
    %v134 = vld [vmem:[%s1 + $0x360] sm:$0xff]
    %v135 = vld [vmem:[%s1 + $0x368] sm:$0xff]
    %v136 = vld [vmem:[%s1 + $0x370] sm:$0xff]
    %v137 = vld [vmem:[%s1 + $0x378] sm:$0xff]
    %v138 = vld [vmem:[%s1 + $0x380] sm:$0xff]
    %v139 = vld [vmem:[%s1 + $0x388] sm:$0xff]
    %v140 = vld [vmem:[%s1 + $0x390] sm:$0xff]
    %v141 = vld [vmem:[%s1 + $0x398] sm:$0xff]
    %v142 = vld [vmem:[%s1 + $0x3a0] sm:$0xff]
    %v143 = vld [vmem:[%s1 + $0x3a8] sm:$0xff]
    %v144 = vld [vmem:[%s1 + $0x3b0] sm:$0xff]
    %v145 = vld [vmem:[%s1 + $0x3b8] sm:$0xff]
    %v146 = vld [vmem:[%s1 + $0x3c0] sm:$0xff]
    %v147 = vld [vmem:[%s1 + $0x3c8] sm:$0xff]
    %v148 = vld [vmem:[%s1 + $0x3d0] sm:$0xff]
    %v149 = vld [vmem:[%s1 + $0x3d8] sm:$0xff]
    %v150 = vld [vmem:[%s1 + $0x3e0] sm:$0xff]
    %v151 = vld [vmem:[%s1 + $0x3e8] sm:$0xff]
    %v152 = vld [vmem:[%s1 + $0x3f0] sm:$0xff]
    %v153 = vld [vmem:[%s1 + $0x3f8] sm:$0xff]
    %v154 = vld [vmem:[%s1 + $0x400] sm:$0xff]
    %v155 = vld [vmem:[%s1 + $0x408] sm:$0xff]
    %v156 = vld [vmem:[%s1 + $0x410] sm:$0xff]
    %v157 = vld [vmem:[%s1 + $0x418] sm:$0xff]
    %v158 = vld [vmem:[%s1 + $0x420] sm:$0xff]
    %v159 = vld [vmem:[%s1 + $0x428] sm:$0xff]
    %v160 = vld [vmem:[%s1 + $0x430] sm:$0xff]
    %v161 = vld [vmem:[%s1 + $0x438] sm:$0xff]
    %v162 = vld [vmem:[%s1 + $0x440] sm:$0xff]
    %v163 = vld [vmem:[%s1 + $0x448] sm:$0xff]
    %v164 = vld [vmem:[%s1 + $0x450] sm:$0xff]
    %v165 = vld [vmem:[%s1 + $0x458] sm:$0xff]
    %v166 = vld [vmem:[%s1 + $0x460] sm:$0xff]
    %v167 = vld [vmem:[%s1 + $0x468] sm:$0xff]
    %v168 = vld [vmem:[%s1 + $0x470] sm:$0xff]
    %v169 = vld [vmem:[%s1 + $0x478] sm:$0xff]
    %v170 = vld [vmem:[%s1 + $0x480] sm:$0xff]
    %v171 = vld [vmem:[%s1 + $0x488] sm:$0xff]
    %v172 = vld [vmem:[%s1 + $0x490] sm:$0xff]
    %v173 = vld [vmem:[%s1 + $0x498] sm:$0xff]
    %v174 = vld [vmem:[%s1 + $0x4a0] sm:$0xff]
    %v175 = vld [vmem:[%s1 + $0x4a8] sm:$0xff]
    %v176 = vld [vmem:[%s1 + $0x4b0] sm:$0xff]
    %v177 = vld [vmem:[%s1 + $0x4b8] sm:$0xff]
    %v178 = vld [vmem:[%s1 + $0x4c0] sm:$0xff]
    %v179 = vld [vmem:[%s1 + $0x4c8] sm:$0xff]
    %v180 = vld [vmem:[%s1 + $0x4d0] sm:$0xff]
    %v181 = vld [vmem:[%s1 + $0x4d8] sm:$0xff]
    %v182 = vld [vmem:[%s1 + $0x4e0] sm:$0xff]
    %v183 = vld [vmem:[%s1 + $0x4e8] sm:$0xff]
    %v184 = vld [vmem:[%s1 + $0x4f0] sm:$0xff]
    %v185 = vld [vmem:[%s1 + $0x4f8] sm:$0xff]
    %v186 = vld [vmem:[%s1 + $0x500] sm:$0xff]
    %v187 = vld [vmem:[%s1 + $0x508] sm:$0xff]
    %v188 = vld [vmem:[%s1 + $0x510] sm:$0xff]
    %v189 = vld [vmem:[%s1 + $0x518] sm:$0xff]
    %v190 = vld [vmem:[%s1 + $0x520] sm:$0xff]
    %v191 = vld [vmem:[%s1 + $0x528] sm:$0xff]
    %v192 = vld [vmem:[%s1 + $0x530] sm:$0xff]
    %v193 = vld [vmem:[%s1 + $0x538] sm:$0xff]
    %v194 = vld [vmem:[%s1 + $0x540] sm:$0xff]
    %v195 = vld [vmem:[%s1 + $0x548] sm:$0xff]
    %v196 = vld [vmem:[%s1 + $0x550] sm:$0xff]
    %v197 = vld [vmem:[%s1 + $0x558] sm:$0xff]
    %v198 = vld [vmem:[%s1 + $0x560] sm:$0xff]
    %v199 = vld [vmem:[%s1 + $0x568] sm:$0xff]
    %v200 = vld [vmem:[%s1 + $0x570] sm:$0xff]
    %v201 = vld [vmem:[%s1 + $0x578] sm:$0xff]
    %v202 = vld [vmem:[%s1 + $0x580] sm:$0xff]
    %v203 = vld [vmem:[%s1 + $0x588] sm:$0xff]
    %v204 = vld [vmem:[%s1 + $0x590] sm:$0xff]
    %v205 = vld [vmem:[%s1 + $0x598] sm:$0xff]
    %v206 = vld [vmem:[%s1 + $0x5a0] sm:$0xff]
    %v207 = vld [vmem:[%s1 + $0x5a8] sm:$0xff]
    %v208 = vld [vmem:[%s1 + $0x5b0] sm:$0xff]
    %v209 = vld [vmem:[%s1 + $0x5b8] sm:$0xff]
    %v210 = vld [vmem:[%s1 + $0x5c0] sm:$0xff]
    %v211 = vld [vmem:[%s1 + $0x5c8] sm:$0xff]
    %v212 = vld [vmem:[%s1 + $0x5d0] sm:$0xff]
    %v213 = vld [vmem:[%s1 + $0x5d8] sm:$0xff]
    %v214 = vld [vmem:[%s1 + $0x5e0] sm:$0xff]
    %v215 = vld [vmem:[%s1 + $0x5e8] sm:$0xff]
    %v216 = vld [vmem:[%s1 + $0x5f0] sm:$0xff]
    %v217 = vld [vmem:[%s1 + $0x5f8] sm:$0xff]
    %v218 = vld [vmem:[%s1 + $0x600] sm:$0xff]
    %v219 = vld [vmem:[%s1 + $0x608] sm:$0xff]
    %v220 = vld [vmem:[%s1 + $0x610] sm:$0xff]
    %v221 = vld [vmem:[%s1 + $0x618] sm:$0xff]
    %v222 = vld [vmem:[%s1 + $0x620] sm:$0xff]
    %v223 = vld [vmem:[%s1 + $0x628] sm:$0xff]
    %v224 = vld [vmem:[%s1 + $0x630] sm:$0xff]
    %v225 = vld [vmem:[%s1 + $0x638] sm:$0xff]
    %v226 = vld [vmem:[%s1 + $0x640] sm:$0xff]
    %v227 = vld [vmem:[%s1 + $0x648] sm:$0xff]
    %v228 = vld [vmem:[%s1 + $0x650] sm:$0xff]
    %v229 = vld [vmem:[%s1 + $0x658] sm:$0xff]
    %v230 = vld [vmem:[%s1 + $0x660] sm:$0xff]
    %v231 = vld [vmem:[%s1 + $0x668] sm:$0xff]
    %v232 = vld [vmem:[%s1 + $0x670] sm:$0xff]
    %v233 = vld [vmem:[%s1 + $0x678] sm:$0xff]
    %v234 = vld [vmem:[%s1 + $0x680] sm:$0xff]
    %v235 = vld [vmem:[%s1 + $0x688] sm:$0xff]
    %v236 = vld [vmem:[%s1 + $0x690] sm:$0xff]
    %v237 = vld [vmem:[%s1 + $0x698] sm:$0xff]
    %v238 = vld [vmem:[%s1 + $0x6a0] sm:$0xff]
    %v239 = vld [vmem:[%s1 + $0x6a8] sm:$0xff]
    %v240 = vld [vmem:[%s1 + $0x6b0] sm:$0xff]
    %v241 = vld [vmem:[%s1 + $0x6b8] sm:$0xff]
    %v242 = vld [vmem:[%s1 + $0x6c0] sm:$0xff]
    %v243 = vld [vmem:[%s1 + $0x6c8] sm:$0xff]
    %v244 = vld [vmem:[%s1 + $0x6d0] sm:$0xff]
    %v245 = vld [vmem:[%s1 + $0x6d8] sm:$0xff]
    %v246 = vld [vmem:[%s1 + $0x6e0] sm:$0xff]
    %v247 = vld [vmem:[%s1 + $0x6e8] sm:$0xff]
    %v248 = vld [vmem:[%s1 + $0x6f0] sm:$0xff]
    %v249 = vld [vmem:[%s1 + $0x6f8] sm:$0xff]
    %v250 = vld [vmem:[%s1 + $0x700] sm:$0xff]
    %v251 = vld [vmem:[%s1 + $0x708] sm:$0xff]
    %v252 = vld [vmem:[%s1 + $0x710] sm:$0xff]
    %v253 = vld [vmem:[%s1 + $0x718] sm:$0xff]
    %v254 = vld [vmem:[%s1 + $0x720] sm:$0xff]
    %v255 = vld [vmem:[%s1 + $0x728] sm:$0xff]
    %v256 = vld [vmem:[%s1 + $0x730] sm:$0xff]
    %v257 = vld [vmem:[%s1 + $0x738] sm:$0xff]
    %v258 = vld [vmem:[%s1 + $0x740] sm:$0xff]
    %v259 = vld [vmem:[%s1 + $0x748] sm:$0xff]
    %v260 = vld [vmem:[%s1 + $0x750] sm:$0xff]
    %v261 = vld [vmem:[%s1 + $0x758] sm:$0xff]
    %v262 = vld [vmem:[%s1 + $0x760] sm:$0xff]
    %v263 = vld [vmem:[%s1 + $0x768] sm:$0xff]
    %v264 = vld [vmem:[%s1 + $0x770] sm:$0xff]
    %v265 = vld [vmem:[%s1 + $0x778] sm:$0xff]
    %v266 = vld [vmem:[%s1 + $0x780] sm:$0xff]
    %v267 = vld [vmem:[%s1 + $0x788] sm:$0xff]
    %v268 = vld [vmem:[%s1 + $0x790] sm:$0xff]
    %v269 = vld [vmem:[%s1 + $0x798] sm:$0xff]
    %v270 = vld [vmem:[%s1 + $0x7a0] sm:$0xff]
    %v271 = vld [vmem:[%s1 + $0x7a8] sm:$0xff]
    %v272 = vld [vmem:[%s1 + $0x7b0] sm:$0xff]
    %v273 = vld [vmem:[%s1 + $0x7b8] sm:$0xff]
    %v274 = vld [vmem:[%s1 + $0x7c0] sm:$0xff]
    %v275 = vld [vmem:[%s1 + $0x7c8] sm:$0xff]
    %v276 = vld [vmem:[%s1 + $0x7d0] sm:$0xff]
    %v277 = vld [vmem:[%s1 + $0x7d8] sm:$0xff]
    %v278 = vld [vmem:[%s1 + $0x7e0] sm:$0xff]
    %v279 = vld [vmem:[%s1 + $0x7e8] sm:$0xff]
    %v280 = vld [vmem:[%s1 + $0x7f0] sm:$0xff]
    %v281 = vld [vmem:[%s1 + $0x7f8] sm:$0xff]
    %v282 = vld [vmem:[%s1 + $0x800] sm:$0xff]
    %v283 = vld [vmem:[%s1 + $0x808] sm:$0xff]
    %v284 = vld [vmem:[%s1 + $0x810] sm:$0xff]
    %v285 = vld [vmem:[%s1 + $0x818] sm:$0xff]
    %v286 = vld [vmem:[%s1 + $0x820] sm:$0xff]
    %v287 = vld [vmem:[%s1 + $0x828] sm:$0xff]
    %v288 = vld [vmem:[%s1 + $0x830] sm:$0xff]
    %v289 = vld [vmem:[%s1 + $0x838] sm:$0xff]
    %v290 = vld [vmem:[%s1 + $0x840] sm:$0xff]
    %v291 = vld [vmem:[%s1 + $0x848] sm:$0xff]
    %v292 = vld [vmem:[%s1 + $0x850] sm:$0xff]
    %v293 = vld [vmem:[%s1 + $0x858] sm:$0xff]
    %v294 = vld [vmem:[%s1 + $0x860] sm:$0xff]
    %v295 = vld [vmem:[%s1 + $0x868] sm:$0xff]
    %v296 = vld [vmem:[%s1 + $0x870] sm:$0xff]
    %v297 = vld [vmem:[%s1 + $0x878] sm:$0xff]
    %v298 = vld [vmem:[%s1 + $0x880] sm:$0xff]
    %v299 = vld [vmem:[%s1 + $0x888] sm:$0xff]
    %v300 = vld [vmem:[%s1 + $0x890] sm:$0xff]
    %v301 = vld [vmem:[%s1 + $0x898] sm:$0xff]
    %v302 = vld [vmem:[%s1 + $0x8a0] sm:$0xff]
    %v303 = vld [vmem:[%s1 + $0x8a8] sm:$0xff]
    %v304 = vld [vmem:[%s1 + $0x8b0] sm:$0xff]
    %v305 = vld [vmem:[%s1 + $0x8b8] sm:$0xff]
    %v306 = vld [vmem:[%s1 + $0x8c0] sm:$0xff]
    %v307 = vld [vmem:[%s1 + $0x8c8] sm:$0xff]
    %v308 = vld [vmem:[%s1 + $0x8d0] sm:$0xff]
    %v309 = vld [vmem:[%s1 + $0x8d8] sm:$0xff]
    %v310 = vld [vmem:[%s1 + $0x8e0] sm:$0xff]
    %v311 = vld [vmem:[%s1 + $0x8e8] sm:$0xff]
    %v312 = vld [vmem:[%s1 + $0x8f0] sm:$0xff]
    %v313 = vld [vmem:[%s1 + $0x8f8] sm:$0xff]
    %v314 = vld [vmem:[%s1 + $0x900] sm:$0xff]
    %v315 = vld [vmem:[%s1 + $0x908] sm:$0xff]
    %v316 = vld [vmem:[%s1 + $0x910] sm:$0xff]
    %v317 = vld [vmem:[%s1 + $0x918] sm:$0xff]
    %v318 = vld [vmem:[%s1 + $0x920] sm:$0xff]
    %v319 = vld [vmem:[%s1 + $0x928] sm:$0xff]
    %v320 = vld [vmem:[%s1 + $0x930] sm:$0xff]
    %v321 = vld [vmem:[%s1 + $0x938] sm:$0xff]
    %v322 = vld [vmem:[%s1 + $0x940] sm:$0xff]
    %v323 = vld [vmem:[%s1 + $0x948] sm:$0xff]
    %v324 = vld [vmem:[%s1 + $0x950] sm:$0xff]
    %v325 = vld [vmem:[%s1 + $0x958] sm:$0xff]
    %v326 = vld [vmem:[%s1 + $0x960] sm:$0xff]
    %v327 = vld [vmem:[%s1 + $0x968] sm:$0xff]
    %v328 = vld [vmem:[%s1 + $0x970] sm:$0xff]
    %v329 = vld [vmem:[%s1 + $0x978] sm:$0xff]
    %v330 = vld [vmem:[%s1 + $0x980] sm:$0xff]
    %v331 = vld [vmem:[%s1 + $0x988] sm:$0xff]
    %v332 = vld [vmem:[%s1 + $0x990] sm:$0xff]
    %v333 = vld [vmem:[%s1 + $0x998] sm:$0xff]
    %v334 = vld [vmem:[%s1 + $0x9a0] sm:$0xff]
    %v335 = vld [vmem:[%s1 + $0x9a8] sm:$0xff]
    %v336 = vld [vmem:[%s1 + $0x9b0] sm:$0xff]
    %v337 = vld [vmem:[%s1 + $0x9b8] sm:$0xff]
    %v338 = vld [vmem:[%s1 + $0x9c0] sm:$0xff]
    %v339 = vld [vmem:[%s1 + $0x9c8] sm:$0xff]
    %v340 = vld [vmem:[%s1 + $0x9d0] sm:$0xff]
    %v341 = vld [vmem:[%s1 + $0x9d8] sm:$0xff]
    %v342 = vld [vmem:[%s1 + $0x9e0] sm:$0xff]
    %v343 = vld [vmem:[%s1 + $0x9e8] sm:$0xff]
    %v344 = vld [vmem:[%s1 + $0x9f0] sm:$0xff]
    %v345 = vld [vmem:[%s1 + $0x9f8] sm:$0xff]
    %v346 = vld [vmem:[%s2] sm:$0x1]
    %v348 = vlaneseq
    %v349 = vshrl.u32 %v348, 7
    %v350 = vsub.s32 0, %v349
    %v351 = vrot.slane %v346, %v350
    %v358 = vcombine.high %v21, %v21
    %v360 = vunpack.c.l.s4 1983009808
    %v361 = vunpack.c.0.s8 %v360
    %v362 = vlaneseq
    %v363 = vshrl.u32 %v362, 7
    %v364 = vsub.s32 %v361, %v363
    %v365 = vrot.slane %v21, %v364
    %v367 = vunpack.c.l.s4 1983009808
    %v368 = vunpack.c.0.s8 %v367
    %v369 = vlaneseq
    %v370 = vshrl.u32 %v369, 7
    %v371 = vsub.s32 %v368, %v370
    %v372 = vrot.slane %v358, %v371
    %v373 = vcombine.high %v365, %v365
    %v374 = vcombine.high %v372, %v372
    %v375 = vcombine.high %v22, %v22
    %v377 = vunpack.c.l.s4 1983009808
    %v378 = vunpack.c.0.s8 %v377
    %v379 = vlaneseq
    %v380 = vshrl.u32 %v379, 7
    %v381 = vsub.s32 %v378, %v380
    %v382 = vrot.slane %v22, %v381
    %v384 = vunpack.c.l.s4 1983009808
    %v385 = vunpack.c.0.s8 %v384
    %v386 = vlaneseq
    %v387 = vshrl.u32 %v386, 7
    %v388 = vsub.s32 %v385, %v387
    %v389 = vrot.slane %v375, %v388
    %v390 = vcombine.high %v382, %v382
    %v391 = vcombine.high %v389, %v389
    %v392 = vcombine.high %v23, %v23
    %v394 = vunpack.c.l.s4 1983009808
    %v395 = vunpack.c.0.s8 %v394
    %v396 = vlaneseq
    %v397 = vshrl.u32 %v396, 7
    %v398 = vsub.s32 %v395, %v397
    %v399 = vrot.slane %v23, %v398
    %v401 = vunpack.c.l.s4 1983009808
    %v402 = vunpack.c.0.s8 %v401
    %v403 = vlaneseq
    %v404 = vshrl.u32 %v403, 7
    %v405 = vsub.s32 %v402, %v404
    %v406 = vrot.slane %v392, %v405
    %v407 = vcombine.high %v399, %v399
    %v408 = vcombine.high %v406, %v406
    %v409 = vcombine.high %v24, %v24
    %v411 = vunpack.c.l.s4 1983009808
    %v412 = vunpack.c.0.s8 %v411
    %v413 = vlaneseq
    %v414 = vshrl.u32 %v413, 7
    %v415 = vsub.s32 %v412, %v414
    %v416 = vrot.slane %v24, %v415
    %v418 = vunpack.c.l.s4 1983009808
    %v419 = vunpack.c.0.s8 %v418
    %v420 = vlaneseq
    %v421 = vshrl.u32 %v420, 7
    %v422 = vsub.s32 %v419, %v421
    %v423 = vrot.slane %v409, %v422
    %v424 = vcombine.high %v416, %v416
    %v425 = vcombine.high %v423, %v423
    %v426 = vcombine.high %v25, %v25
    %v428 = vunpack.c.l.s4 1983009808
    %v429 = vunpack.c.0.s8 %v428
    %v430 = vlaneseq
    %v431 = vshrl.u32 %v430, 7
    %v432 = vsub.s32 %v429, %v431
    %v433 = vrot.slane %v25, %v432
    %v435 = vunpack.c.l.s4 1983009808
    %v436 = vunpack.c.0.s8 %v435
    %v437 = vlaneseq
    %v438 = vshrl.u32 %v437, 7
    %v439 = vsub.s32 %v436, %v438
    %v440 = vrot.slane %v426, %v439
    %v441 = vcombine.high %v433, %v433
    %v442 = vcombine.high %v440, %v440
    %463 = vmatprep.subr.mxu0 0.0
    %464 = vmatpush1.msra.mxu0 %v41
    %465 = vmatprep.subr.mxu0 0.0
    %466 = vmatpush1.msra.mxu0 %v40
    %467 = vmatprep.subr.mxu0 0.0
    %468 = vmatpush1.msra.mxu0 %v39
    %469 = vmatprep.subr.mxu0 0.0
    %470 = vmatpush1.msra.mxu0 %v38
    %471 = vmatprep.subr.mxu0 0.0
    %472 = vmatpush1.msra.mxu0 %v37
    %473 = vmatprep.subr.mxu0 0.0
    %474 = vmatpush1.msra.mxu0 %v36
    %475 = vmatprep.subr.mxu0 0.0
    %476 = vmatpush1.msra.mxu0 %v35
    %477 = vmatprep.subr.mxu0 0.0
    %478 = vmatpush1.msra.mxu0 %v34
    %479 = vmatprep.subr.mxu0 0.0
    %480 = vmatpush1.msra.mxu0 %v33
    %481 = vmatprep.subr.mxu0 0.0
    %482 = vmatpush1.msra.mxu0 %v32
    %483 = vmatprep.subr.mxu0 0.0
    %484 = vmatpush1.msra.mxu0 %v31
    %485 = vmatprep.subr.mxu0 0.0
    %486 = vmatpush1.msra.mxu0 %v30
    %487 = vmatprep.subr.mxu0 0.0
    %488 = vmatpush1.msra.mxu0 %v29
    %489 = vmatprep.subr.mxu0 0.0
    %490 = vmatpush1.msra.mxu0 %v28
    %491 = vmatprep.subr.mxu0 0.0
    %492 = vmatpush1.msra.mxu0 %v27
    %493 = vmatprep.subr.mxu0 0.0
    %494 = vmatpush1.msra.mxu0 %v26
    %495 = vmatprep.subr.mxu0 0.0
    %496 = vmatpush2.msra.mxu0 %v57
    %497 = vmatprep.subr.mxu0 0.0
    %498 = vmatpush2.msra.mxu0 %v56
    %499 = vmatprep.subr.mxu0 0.0
    %500 = vmatpush2.msra.mxu0 %v55
    %501 = vmatprep.subr.mxu0 0.0
    %502 = vmatpush2.msra.mxu0 %v54
    %503 = vmatprep.subr.mxu0 0.0
    %504 = vmatpush2.msra.mxu0 %v53
    %505 = vmatprep.subr.mxu0 0.0
    %506 = vmatpush2.msra.mxu0 %v52
    %507 = vmatprep.subr.mxu0 0.0
    %508 = vmatpush2.msra.mxu0 %v51
    %509 = vmatprep.subr.mxu0 0.0
    %510 = vmatpush2.msra.mxu0 %v50
    %511 = vmatprep.subr.mxu0 0.0
    %512 = vmatpush2.msra.mxu0 %v49
    %513 = vmatprep.subr.mxu0 0.0
    %514 = vmatpush2.msra.mxu0 %v48
    %515 = vmatprep.subr.mxu0 0.0
    %516 = vmatpush2.msra.mxu0 %v47
    %517 = vmatprep.subr.mxu0 0.0
    %518 = vmatpush2.msra.mxu0 %v46
    %519 = vmatprep.subr.mxu0 0.0
    %520 = vmatpush2.msra.mxu0 %v45
    %521 = vmatprep.subr.mxu0 0.0
    %522 = vmatpush2.msra.mxu0 %v44
    %523 = vmatprep.subr.mxu0 0.0
    %524 = vmatpush2.msra.mxu0 %v43
    %525 = vmatprep.subr.mxu0 0.0
    %526 = vmatpush2.msra.mxu0 %v42
    %527 = vmatprep.mubr.f32.mxu0 %v373
    %528 = vmatmul.mubr.f32.gmra.mxu0 %v365
    %v529 = vpop.f32.mrf.mxu0
    %v530 = vadd.f32 %v351, %v529
    %v531 = vpop.f32.mrf.mxu0
    %532 = vdwg.mxu0
    %533 = vmatprep.subr.mxu0 0.0
    %534 = vmatpush1.msra.mxu0 %v73
    %535 = vmatprep.subr.mxu0 0.0
    %536 = vmatpush1.msra.mxu0 %v72
    %537 = vmatprep.subr.mxu0 0.0
    %538 = vmatpush1.msra.mxu0 %v71
    %539 = vmatprep.subr.mxu0 0.0
    %540 = vmatpush1.msra.mxu0 %v70
    %541 = vmatprep.subr.mxu0 0.0
    %542 = vmatpush1.msra.mxu0 %v69
    %543 = vmatprep.subr.mxu0 0.0
    %544 = vmatpush1.msra.mxu0 %v68
    %545 = vmatprep.subr.mxu0 0.0
    %546 = vmatpush1.msra.mxu0 %v67
    %547 = vmatprep.subr.mxu0 0.0
    %548 = vmatpush1.msra.mxu0 %v66
    %549 = vmatprep.subr.mxu0 0.0
    %550 = vmatpush1.msra.mxu0 %v65
    %551 = vmatprep.subr.mxu0 0.0
    %552 = vmatpush1.msra.mxu0 %v64
    %553 = vmatprep.subr.mxu0 0.0
    %554 = vmatpush1.msra.mxu0 %v63
    %555 = vmatprep.subr.mxu0 0.0
    %556 = vmatpush1.msra.mxu0 %v62
    %557 = vmatprep.subr.mxu0 0.0
    %558 = vmatpush1.msra.mxu0 %v61
    %559 = vmatprep.subr.mxu0 0.0
    %560 = vmatpush1.msra.mxu0 %v60
    %561 = vmatprep.subr.mxu0 0.0
    %562 = vmatpush1.msra.mxu0 %v59
    %563 = vmatprep.subr.mxu0 0.0
    %564 = vmatpush1.msra.mxu0 %v58
    %565 = vmatprep.subr.mxu0 0.0
    %566 = vmatpush2.msra.mxu0 %v89
    %567 = vmatprep.subr.mxu0 0.0
    %568 = vmatpush2.msra.mxu0 %v88
    %569 = vmatprep.subr.mxu0 0.0
    %570 = vmatpush2.msra.mxu0 %v87
    %571 = vmatprep.subr.mxu0 0.0
    %572 = vmatpush2.msra.mxu0 %v86
    %573 = vmatprep.subr.mxu0 0.0
    %574 = vmatpush2.msra.mxu0 %v85
    %575 = vmatprep.subr.mxu0 0.0
    %576 = vmatpush2.msra.mxu0 %v84
    %577 = vmatprep.subr.mxu0 0.0
    %578 = vmatpush2.msra.mxu0 %v83
    %579 = vmatprep.subr.mxu0 0.0
    %580 = vmatpush2.msra.mxu0 %v82
    %581 = vmatprep.subr.mxu0 0.0
    %582 = vmatpush2.msra.mxu0 %v81
    %583 = vmatprep.subr.mxu0 0.0
    %584 = vmatpush2.msra.mxu0 %v80
    %585 = vmatprep.subr.mxu0 0.0
    %586 = vmatpush2.msra.mxu0 %v79
    %587 = vmatprep.subr.mxu0 0.0
    %588 = vmatpush2.msra.mxu0 %v78
    %589 = vmatprep.subr.mxu0 0.0
    %590 = vmatpush2.msra.mxu0 %v77
    %591 = vmatprep.subr.mxu0 0.0
    %592 = vmatpush2.msra.mxu0 %v76
    %593 = vmatprep.subr.mxu0 0.0
    %594 = vmatpush2.msra.mxu0 %v75
    %595 = vmatprep.subr.mxu0 0.0
    %596 = vmatpush2.msra.mxu0 %v74
    %597 = vmatprep.mubr.f32.mxu0 %v374
    %598 = vmatmul.mubr.f32.gmra.mxu0 %v372
    %v599 = vpop.f32.mrf.mxu0
    %v600 = vadd.f32 %v530, %v599
    %v601 = vpop.f32.mrf.mxu0
    %602 = vdwg.mxu0
    %603 = vmatprep.subr.mxu0 0.0
    %604 = vmatpush1.msra.mxu0 %v105
    %605 = vmatprep.subr.mxu0 0.0
    %606 = vmatpush1.msra.mxu0 %v104
    %607 = vmatprep.subr.mxu0 0.0
    %608 = vmatpush1.msra.mxu0 %v103
    %609 = vmatprep.subr.mxu0 0.0
    %610 = vmatpush1.msra.mxu0 %v102
    %611 = vmatprep.subr.mxu0 0.0
    %612 = vmatpush1.msra.mxu0 %v101
    %613 = vmatprep.subr.mxu0 0.0
    %614 = vmatpush1.msra.mxu0 %v100
    %615 = vmatprep.subr.mxu0 0.0
    %616 = vmatpush1.msra.mxu0 %v99
    %617 = vmatprep.subr.mxu0 0.0
    %618 = vmatpush1.msra.mxu0 %v98
    %619 = vmatprep.subr.mxu0 0.0
    %620 = vmatpush1.msra.mxu0 %v97
    %621 = vmatprep.subr.mxu0 0.0
    %622 = vmatpush1.msra.mxu0 %v96
    %623 = vmatprep.subr.mxu0 0.0
    %624 = vmatpush1.msra.mxu0 %v95
    %625 = vmatprep.subr.mxu0 0.0
    %626 = vmatpush1.msra.mxu0 %v94
    %627 = vmatprep.subr.mxu0 0.0
    %628 = vmatpush1.msra.mxu0 %v93
    %629 = vmatprep.subr.mxu0 0.0
    %630 = vmatpush1.msra.mxu0 %v92
    %631 = vmatprep.subr.mxu0 0.0
    %632 = vmatpush1.msra.mxu0 %v91
    %633 = vmatprep.subr.mxu0 0.0
    %634 = vmatpush1.msra.mxu0 %v90
    %635 = vmatprep.subr.mxu0 0.0
    %636 = vmatpush2.msra.mxu0 %v121
    %637 = vmatprep.subr.mxu0 0.0
    %638 = vmatpush2.msra.mxu0 %v120
    %639 = vmatprep.subr.mxu0 0.0
    %640 = vmatpush2.msra.mxu0 %v119
    %641 = vmatprep.subr.mxu0 0.0
    %642 = vmatpush2.msra.mxu0 %v118
    %643 = vmatprep.subr.mxu0 0.0
    %644 = vmatpush2.msra.mxu0 %v117
    %645 = vmatprep.subr.mxu0 0.0
    %646 = vmatpush2.msra.mxu0 %v116
    %647 = vmatprep.subr.mxu0 0.0
    %648 = vmatpush2.msra.mxu0 %v115
    %649 = vmatprep.subr.mxu0 0.0
    %650 = vmatpush2.msra.mxu0 %v114
    %651 = vmatprep.subr.mxu0 0.0
    %652 = vmatpush2.msra.mxu0 %v113
    %653 = vmatprep.subr.mxu0 0.0
    %654 = vmatpush2.msra.mxu0 %v112
    %655 = vmatprep.subr.mxu0 0.0
    %656 = vmatpush2.msra.mxu0 %v111
    %657 = vmatprep.subr.mxu0 0.0
    %658 = vmatpush2.msra.mxu0 %v110
    %659 = vmatprep.subr.mxu0 0.0
    %660 = vmatpush2.msra.mxu0 %v109
    %661 = vmatprep.subr.mxu0 0.0
    %662 = vmatpush2.msra.mxu0 %v108
    %663 = vmatprep.subr.mxu0 0.0
    %664 = vmatpush2.msra.mxu0 %v107
    %665 = vmatprep.subr.mxu0 0.0
    %666 = vmatpush2.msra.mxu0 %v106
    %667 = vmatprep.mubr.f32.mxu0 %v390
    %668 = vmatmul.mubr.f32.gmra.mxu0 %v382
    %v669 = vpop.f32.mrf.mxu0
    %v670 = vadd.f32 %v600, %v669
    %v671 = vpop.f32.mrf.mxu0
    %672 = vdwg.mxu0
    %673 = vmatprep.subr.mxu0 0.0
    %674 = vmatpush1.msra.mxu0 %v137
    %675 = vmatprep.subr.mxu0 0.0
    %676 = vmatpush1.msra.mxu0 %v136
    %677 = vmatprep.subr.mxu0 0.0
    %678 = vmatpush1.msra.mxu0 %v135
    %679 = vmatprep.subr.mxu0 0.0
    %680 = vmatpush1.msra.mxu0 %v134
    %681 = vmatprep.subr.mxu0 0.0
    %682 = vmatpush1.msra.mxu0 %v133
    %683 = vmatprep.subr.mxu0 0.0
    %684 = vmatpush1.msra.mxu0 %v132
    %685 = vmatprep.subr.mxu0 0.0
    %686 = vmatpush1.msra.mxu0 %v131
    %687 = vmatprep.subr.mxu0 0.0
    %688 = vmatpush1.msra.mxu0 %v130
    %689 = vmatprep.subr.mxu0 0.0
    %690 = vmatpush1.msra.mxu0 %v129
    %691 = vmatprep.subr.mxu0 0.0
    %692 = vmatpush1.msra.mxu0 %v128
    %693 = vmatprep.subr.mxu0 0.0
    %694 = vmatpush1.msra.mxu0 %v127
    %695 = vmatprep.subr.mxu0 0.0
    %696 = vmatpush1.msra.mxu0 %v126
    %697 = vmatprep.subr.mxu0 0.0
    %698 = vmatpush1.msra.mxu0 %v125
    %699 = vmatprep.subr.mxu0 0.0
    %700 = vmatpush1.msra.mxu0 %v124
    %701 = vmatprep.subr.mxu0 0.0
    %702 = vmatpush1.msra.mxu0 %v123
    %703 = vmatprep.subr.mxu0 0.0
    %704 = vmatpush1.msra.mxu0 %v122
    %705 = vmatprep.subr.mxu0 0.0
    %706 = vmatpush2.msra.mxu0 %v153
    %707 = vmatprep.subr.mxu0 0.0
    %708 = vmatpush2.msra.mxu0 %v152
    %709 = vmatprep.subr.mxu0 0.0
    %710 = vmatpush2.msra.mxu0 %v151
    %711 = vmatprep.subr.mxu0 0.0
    %712 = vmatpush2.msra.mxu0 %v150
    %713 = vmatprep.subr.mxu0 0.0
    %714 = vmatpush2.msra.mxu0 %v149
    %715 = vmatprep.subr.mxu0 0.0
    %716 = vmatpush2.msra.mxu0 %v148
    %717 = vmatprep.subr.mxu0 0.0
    %718 = vmatpush2.msra.mxu0 %v147
    %719 = vmatprep.subr.mxu0 0.0
    %720 = vmatpush2.msra.mxu0 %v146
    %721 = vmatprep.subr.mxu0 0.0
    %722 = vmatpush2.msra.mxu0 %v145
    %723 = vmatprep.subr.mxu0 0.0
    %724 = vmatpush2.msra.mxu0 %v144
    %725 = vmatprep.subr.mxu0 0.0
    %726 = vmatpush2.msra.mxu0 %v143
    %727 = vmatprep.subr.mxu0 0.0
    %728 = vmatpush2.msra.mxu0 %v142
    %729 = vmatprep.subr.mxu0 0.0
    %730 = vmatpush2.msra.mxu0 %v141
    %731 = vmatprep.subr.mxu0 0.0
    %732 = vmatpush2.msra.mxu0 %v140
    %733 = vmatprep.subr.mxu0 0.0
    %734 = vmatpush2.msra.mxu0 %v139
    %735 = vmatprep.subr.mxu0 0.0
    %736 = vmatpush2.msra.mxu0 %v138
    %737 = vmatprep.mubr.f32.mxu0 %v391
    %738 = vmatmul.mubr.f32.gmra.mxu0 %v389
    %v739 = vpop.f32.mrf.mxu0
    %v740 = vadd.f32 %v670, %v739
    %v741 = vpop.f32.mrf.mxu0
    %742 = vdwg.mxu0
    %743 = vmatprep.subr.mxu0 0.0
    %744 = vmatpush1.msra.mxu0 %v169
    %745 = vmatprep.subr.mxu0 0.0
    %746 = vmatpush1.msra.mxu0 %v168
    %747 = vmatprep.subr.mxu0 0.0
    %748 = vmatpush1.msra.mxu0 %v167
    %749 = vmatprep.subr.mxu0 0.0
    %750 = vmatpush1.msra.mxu0 %v166
    %751 = vmatprep.subr.mxu0 0.0
    %752 = vmatpush1.msra.mxu0 %v165
    %753 = vmatprep.subr.mxu0 0.0
    %754 = vmatpush1.msra.mxu0 %v164
    %755 = vmatprep.subr.mxu0 0.0
    %756 = vmatpush1.msra.mxu0 %v163
    %757 = vmatprep.subr.mxu0 0.0
    %758 = vmatpush1.msra.mxu0 %v162
    %759 = vmatprep.subr.mxu0 0.0
    %760 = vmatpush1.msra.mxu0 %v161
    %761 = vmatprep.subr.mxu0 0.0
    %762 = vmatpush1.msra.mxu0 %v160
    %763 = vmatprep.subr.mxu0 0.0
    %764 = vmatpush1.msra.mxu0 %v159
    %765 = vmatprep.subr.mxu0 0.0
    %766 = vmatpush1.msra.mxu0 %v158
    %767 = vmatprep.subr.mxu0 0.0
    %768 = vmatpush1.msra.mxu0 %v157
    %769 = vmatprep.subr.mxu0 0.0
    %770 = vmatpush1.msra.mxu0 %v156
    %771 = vmatprep.subr.mxu0 0.0
    %772 = vmatpush1.msra.mxu0 %v155
    %773 = vmatprep.subr.mxu0 0.0
    %774 = vmatpush1.msra.mxu0 %v154
    %775 = vmatprep.subr.mxu0 0.0
    %776 = vmatpush2.msra.mxu0 %v185
    %777 = vmatprep.subr.mxu0 0.0
    %778 = vmatpush2.msra.mxu0 %v184
    %779 = vmatprep.subr.mxu0 0.0
    %780 = vmatpush2.msra.mxu0 %v183
    %781 = vmatprep.subr.mxu0 0.0
    %782 = vmatpush2.msra.mxu0 %v182
    %783 = vmatprep.subr.mxu0 0.0
    %784 = vmatpush2.msra.mxu0 %v181
    %785 = vmatprep.subr.mxu0 0.0
    %786 = vmatpush2.msra.mxu0 %v180
    %787 = vmatprep.subr.mxu0 0.0
    %788 = vmatpush2.msra.mxu0 %v179
    %789 = vmatprep.subr.mxu0 0.0
    %790 = vmatpush2.msra.mxu0 %v178
    %791 = vmatprep.subr.mxu0 0.0
    %792 = vmatpush2.msra.mxu0 %v177
    %793 = vmatprep.subr.mxu0 0.0
    %794 = vmatpush2.msra.mxu0 %v176
    %795 = vmatprep.subr.mxu0 0.0
    %796 = vmatpush2.msra.mxu0 %v175
    %797 = vmatprep.subr.mxu0 0.0
    %798 = vmatpush2.msra.mxu0 %v174
    %799 = vmatprep.subr.mxu0 0.0
    %800 = vmatpush2.msra.mxu0 %v173
    %801 = vmatprep.subr.mxu0 0.0
    %802 = vmatpush2.msra.mxu0 %v172
    %803 = vmatprep.subr.mxu0 0.0
    %804 = vmatpush2.msra.mxu0 %v171
    %805 = vmatprep.subr.mxu0 0.0
    %806 = vmatpush2.msra.mxu0 %v170
    %807 = vmatprep.mubr.f32.mxu0 %v407
    %808 = vmatmul.mubr.f32.gmra.mxu0 %v399
    %v809 = vpop.f32.mrf.mxu0
    %v810 = vadd.f32 %v740, %v809
    %v811 = vpop.f32.mrf.mxu0
    %812 = vdwg.mxu0
    %813 = vmatprep.subr.mxu0 0.0
    %814 = vmatpush1.msra.mxu0 %v201
    %815 = vmatprep.subr.mxu0 0.0
    %816 = vmatpush1.msra.mxu0 %v200
    %817 = vmatprep.subr.mxu0 0.0
    %818 = vmatpush1.msra.mxu0 %v199
    %819 = vmatprep.subr.mxu0 0.0
    %820 = vmatpush1.msra.mxu0 %v198
    %821 = vmatprep.subr.mxu0 0.0
    %822 = vmatpush1.msra.mxu0 %v197
    %823 = vmatprep.subr.mxu0 0.0
    %824 = vmatpush1.msra.mxu0 %v196
    %825 = vmatprep.subr.mxu0 0.0
    %826 = vmatpush1.msra.mxu0 %v195
    %827 = vmatprep.subr.mxu0 0.0
    %828 = vmatpush1.msra.mxu0 %v194
    %829 = vmatprep.subr.mxu0 0.0
    %830 = vmatpush1.msra.mxu0 %v193
    %831 = vmatprep.subr.mxu0 0.0
    %832 = vmatpush1.msra.mxu0 %v192
    %833 = vmatprep.subr.mxu0 0.0
    %834 = vmatpush1.msra.mxu0 %v191
    %835 = vmatprep.subr.mxu0 0.0
    %836 = vmatpush1.msra.mxu0 %v190
    %837 = vmatprep.subr.mxu0 0.0
    %838 = vmatpush1.msra.mxu0 %v189
    %839 = vmatprep.subr.mxu0 0.0
    %840 = vmatpush1.msra.mxu0 %v188
    %841 = vmatprep.subr.mxu0 0.0
    %842 = vmatpush1.msra.mxu0 %v187
    %843 = vmatprep.subr.mxu0 0.0
    %844 = vmatpush1.msra.mxu0 %v186
    %845 = vmatprep.subr.mxu0 0.0
    %846 = vmatpush2.msra.mxu0 %v217
    %847 = vmatprep.subr.mxu0 0.0
    %848 = vmatpush2.msra.mxu0 %v216
    %849 = vmatprep.subr.mxu0 0.0
    %850 = vmatpush2.msra.mxu0 %v215
    %851 = vmatprep.subr.mxu0 0.0
    %852 = vmatpush2.msra.mxu0 %v214
    %853 = vmatprep.subr.mxu0 0.0
    %854 = vmatpush2.msra.mxu0 %v213
    %855 = vmatprep.subr.mxu0 0.0
    %856 = vmatpush2.msra.mxu0 %v212
    %857 = vmatprep.subr.mxu0 0.0
    %858 = vmatpush2.msra.mxu0 %v211
    %859 = vmatprep.subr.mxu0 0.0
    %860 = vmatpush2.msra.mxu0 %v210
    %861 = vmatprep.subr.mxu0 0.0
    %862 = vmatpush2.msra.mxu0 %v209
    %863 = vmatprep.subr.mxu0 0.0
    %864 = vmatpush2.msra.mxu0 %v208
    %865 = vmatprep.subr.mxu0 0.0
    %866 = vmatpush2.msra.mxu0 %v207
    %867 = vmatprep.subr.mxu0 0.0
    %868 = vmatpush2.msra.mxu0 %v206
    %869 = vmatprep.subr.mxu0 0.0
    %870 = vmatpush2.msra.mxu0 %v205
    %871 = vmatprep.subr.mxu0 0.0
    %872 = vmatpush2.msra.mxu0 %v204
    %873 = vmatprep.subr.mxu0 0.0
    %874 = vmatpush2.msra.mxu0 %v203
    %875 = vmatprep.subr.mxu0 0.0
    %876 = vmatpush2.msra.mxu0 %v202
    %877 = vmatprep.mubr.f32.mxu0 %v408
    %878 = vmatmul.mubr.f32.gmra.mxu0 %v406
    %v879 = vpop.f32.mrf.mxu0
    %v880 = vadd.f32 %v810, %v879
    %v881 = vpop.f32.mrf.mxu0
    %882 = vdwg.mxu0
    %883 = vmatprep.subr.mxu0 0.0
    %884 = vmatpush1.msra.mxu0 %v233
    %885 = vmatprep.subr.mxu0 0.0
    %886 = vmatpush1.msra.mxu0 %v232
    %887 = vmatprep.subr.mxu0 0.0
    %888 = vmatpush1.msra.mxu0 %v231
    %889 = vmatprep.subr.mxu0 0.0
    %890 = vmatpush1.msra.mxu0 %v230
    %891 = vmatprep.subr.mxu0 0.0
    %892 = vmatpush1.msra.mxu0 %v229
    %893 = vmatprep.subr.mxu0 0.0
    %894 = vmatpush1.msra.mxu0 %v228
    %895 = vmatprep.subr.mxu0 0.0
    %896 = vmatpush1.msra.mxu0 %v227
    %897 = vmatprep.subr.mxu0 0.0
    %898 = vmatpush1.msra.mxu0 %v226
    %899 = vmatprep.subr.mxu0 0.0
    %900 = vmatpush1.msra.mxu0 %v225
    %901 = vmatprep.subr.mxu0 0.0
    %902 = vmatpush1.msra.mxu0 %v224
    %903 = vmatprep.subr.mxu0 0.0
    %904 = vmatpush1.msra.mxu0 %v223
    %905 = vmatprep.subr.mxu0 0.0
    %906 = vmatpush1.msra.mxu0 %v222
    %907 = vmatprep.subr.mxu0 0.0
    %908 = vmatpush1.msra.mxu0 %v221
    %909 = vmatprep.subr.mxu0 0.0
    %910 = vmatpush1.msra.mxu0 %v220
    %911 = vmatprep.subr.mxu0 0.0
    %912 = vmatpush1.msra.mxu0 %v219
    %913 = vmatprep.subr.mxu0 0.0
    %914 = vmatpush1.msra.mxu0 %v218
    %915 = vmatprep.subr.mxu0 0.0
    %916 = vmatpush2.msra.mxu0 %v249
    %917 = vmatprep.subr.mxu0 0.0
    %918 = vmatpush2.msra.mxu0 %v248
    %919 = vmatprep.subr.mxu0 0.0
    %920 = vmatpush2.msra.mxu0 %v247
    %921 = vmatprep.subr.mxu0 0.0
    %922 = vmatpush2.msra.mxu0 %v246
    %923 = vmatprep.subr.mxu0 0.0
    %924 = vmatpush2.msra.mxu0 %v245
    %925 = vmatprep.subr.mxu0 0.0
    %926 = vmatpush2.msra.mxu0 %v244
    %927 = vmatprep.subr.mxu0 0.0
    %928 = vmatpush2.msra.mxu0 %v243
    %929 = vmatprep.subr.mxu0 0.0
    %930 = vmatpush2.msra.mxu0 %v242
    %931 = vmatprep.subr.mxu0 0.0
    %932 = vmatpush2.msra.mxu0 %v241
    %933 = vmatprep.subr.mxu0 0.0
    %934 = vmatpush2.msra.mxu0 %v240
    %935 = vmatprep.subr.mxu0 0.0
    %936 = vmatpush2.msra.mxu0 %v239
    %937 = vmatprep.subr.mxu0 0.0
    %938 = vmatpush2.msra.mxu0 %v238
    %939 = vmatprep.subr.mxu0 0.0
    %940 = vmatpush2.msra.mxu0 %v237
    %941 = vmatprep.subr.mxu0 0.0
    %942 = vmatpush2.msra.mxu0 %v236
    %943 = vmatprep.subr.mxu0 0.0
    %944 = vmatpush2.msra.mxu0 %v235
    %945 = vmatprep.subr.mxu0 0.0
    %946 = vmatpush2.msra.mxu0 %v234
    %947 = vmatprep.mubr.f32.mxu0 %v424
    %948 = vmatmul.mubr.f32.gmra.mxu0 %v416
    %v949 = vpop.f32.mrf.mxu0
    %v950 = vadd.f32 %v880, %v949
    %v951 = vpop.f32.mrf.mxu0
    %952 = vdwg.mxu0
    %953 = vmatprep.subr.mxu0 0.0
    %954 = vmatpush1.msra.mxu0 %v265
    %955 = vmatprep.subr.mxu0 0.0
    %956 = vmatpush1.msra.mxu0 %v264
    %957 = vmatprep.subr.mxu0 0.0
    %958 = vmatpush1.msra.mxu0 %v263
    %959 = vmatprep.subr.mxu0 0.0
    %960 = vmatpush1.msra.mxu0 %v262
    %961 = vmatprep.subr.mxu0 0.0
    %962 = vmatpush1.msra.mxu0 %v261
    %963 = vmatprep.subr.mxu0 0.0
    %964 = vmatpush1.msra.mxu0 %v260
    %965 = vmatprep.subr.mxu0 0.0
    %966 = vmatpush1.msra.mxu0 %v259
    %967 = vmatprep.subr.mxu0 0.0
    %968 = vmatpush1.msra.mxu0 %v258
    %969 = vmatprep.subr.mxu0 0.0
    %970 = vmatpush1.msra.mxu0 %v257
    %971 = vmatprep.subr.mxu0 0.0
    %972 = vmatpush1.msra.mxu0 %v256
    %973 = vmatprep.subr.mxu0 0.0
    %974 = vmatpush1.msra.mxu0 %v255
    %975 = vmatprep.subr.mxu0 0.0
    %976 = vmatpush1.msra.mxu0 %v254
    %977 = vmatprep.subr.mxu0 0.0
    %978 = vmatpush1.msra.mxu0 %v253
    %979 = vmatprep.subr.mxu0 0.0
    %980 = vmatpush1.msra.mxu0 %v252
    %981 = vmatprep.subr.mxu0 0.0
    %982 = vmatpush1.msra.mxu0 %v251
    %983 = vmatprep.subr.mxu0 0.0
    %984 = vmatpush1.msra.mxu0 %v250
    %985 = vmatprep.subr.mxu0 0.0
    %986 = vmatpush2.msra.mxu0 %v281
    %987 = vmatprep.subr.mxu0 0.0
    %988 = vmatpush2.msra.mxu0 %v280
    %989 = vmatprep.subr.mxu0 0.0
    %990 = vmatpush2.msra.mxu0 %v279
    %991 = vmatprep.subr.mxu0 0.0
    %992 = vmatpush2.msra.mxu0 %v278
    %993 = vmatprep.subr.mxu0 0.0
    %994 = vmatpush2.msra.mxu0 %v277
    %995 = vmatprep.subr.mxu0 0.0
    %996 = vmatpush2.msra.mxu0 %v276
    %997 = vmatprep.subr.mxu0 0.0
    %998 = vmatpush2.msra.mxu0 %v275
    %999 = vmatprep.subr.mxu0 0.0
    %1000 = vmatpush2.msra.mxu0 %v274
    %1001 = vmatprep.subr.mxu0 0.0
    %1002 = vmatpush2.msra.mxu0 %v273
    %1003 = vmatprep.subr.mxu0 0.0
    %1004 = vmatpush2.msra.mxu0 %v272
    %1005 = vmatprep.subr.mxu0 0.0
    %1006 = vmatpush2.msra.mxu0 %v271
    %1007 = vmatprep.subr.mxu0 0.0
    %1008 = vmatpush2.msra.mxu0 %v270
    %1009 = vmatprep.subr.mxu0 0.0
    %1010 = vmatpush2.msra.mxu0 %v269
    %1011 = vmatprep.subr.mxu0 0.0
    %1012 = vmatpush2.msra.mxu0 %v268
    %1013 = vmatprep.subr.mxu0 0.0
    %1014 = vmatpush2.msra.mxu0 %v267
    %1015 = vmatprep.subr.mxu0 0.0
    %1016 = vmatpush2.msra.mxu0 %v266
    %1017 = vmatprep.mubr.f32.mxu0 %v425
    %1018 = vmatmul.mubr.f32.gmra.mxu0 %v423
    %v1019 = vpop.f32.mrf.mxu0
    %v1020 = vadd.f32 %v950, %v1019
    %v1021 = vpop.f32.mrf.mxu0
    %1022 = vdwg.mxu0
    %1023 = vmatprep.subr.mxu0 0.0
    %1024 = vmatpush1.msra.mxu0 %v297
    %1025 = vmatprep.subr.mxu0 0.0
    %1026 = vmatpush1.msra.mxu0 %v296
    %1027 = vmatprep.subr.mxu0 0.0
    %1028 = vmatpush1.msra.mxu0 %v295
    %1029 = vmatprep.subr.mxu0 0.0
    %1030 = vmatpush1.msra.mxu0 %v294
    %1031 = vmatprep.subr.mxu0 0.0
    %1032 = vmatpush1.msra.mxu0 %v293
    %1033 = vmatprep.subr.mxu0 0.0
    %1034 = vmatpush1.msra.mxu0 %v292
    %1035 = vmatprep.subr.mxu0 0.0
    %1036 = vmatpush1.msra.mxu0 %v291
    %1037 = vmatprep.subr.mxu0 0.0
    %1038 = vmatpush1.msra.mxu0 %v290
    %1039 = vmatprep.subr.mxu0 0.0
    %1040 = vmatpush1.msra.mxu0 %v289
    %1041 = vmatprep.subr.mxu0 0.0
    %1042 = vmatpush1.msra.mxu0 %v288
    %1043 = vmatprep.subr.mxu0 0.0
    %1044 = vmatpush1.msra.mxu0 %v287
    %1045 = vmatprep.subr.mxu0 0.0
    %1046 = vmatpush1.msra.mxu0 %v286
    %1047 = vmatprep.subr.mxu0 0.0
    %1048 = vmatpush1.msra.mxu0 %v285
    %1049 = vmatprep.subr.mxu0 0.0
    %1050 = vmatpush1.msra.mxu0 %v284
    %1051 = vmatprep.subr.mxu0 0.0
    %1052 = vmatpush1.msra.mxu0 %v283
    %1053 = vmatprep.subr.mxu0 0.0
    %1054 = vmatpush1.msra.mxu0 %v282
    %1055 = vmatprep.subr.mxu0 0.0
    %1056 = vmatpush2.msra.mxu0 %v313
    %1057 = vmatprep.subr.mxu0 0.0
    %1058 = vmatpush2.msra.mxu0 %v312
    %1059 = vmatprep.subr.mxu0 0.0
    %1060 = vmatpush2.msra.mxu0 %v311
    %1061 = vmatprep.subr.mxu0 0.0
    %1062 = vmatpush2.msra.mxu0 %v310
    %1063 = vmatprep.subr.mxu0 0.0
    %1064 = vmatpush2.msra.mxu0 %v309
    %1065 = vmatprep.subr.mxu0 0.0
    %1066 = vmatpush2.msra.mxu0 %v308
    %1067 = vmatprep.subr.mxu0 0.0
    %1068 = vmatpush2.msra.mxu0 %v307
    %1069 = vmatprep.subr.mxu0 0.0
    %1070 = vmatpush2.msra.mxu0 %v306
    %1071 = vmatprep.subr.mxu0 0.0
    %1072 = vmatpush2.msra.mxu0 %v305
    %1073 = vmatprep.subr.mxu0 0.0
    %1074 = vmatpush2.msra.mxu0 %v304
    %1075 = vmatprep.subr.mxu0 0.0
    %1076 = vmatpush2.msra.mxu0 %v303
    %1077 = vmatprep.subr.mxu0 0.0
    %1078 = vmatpush2.msra.mxu0 %v302
    %1079 = vmatprep.subr.mxu0 0.0
    %1080 = vmatpush2.msra.mxu0 %v301
    %1081 = vmatprep.subr.mxu0 0.0
    %1082 = vmatpush2.msra.mxu0 %v300
    %1083 = vmatprep.subr.mxu0 0.0
    %1084 = vmatpush2.msra.mxu0 %v299
    %1085 = vmatprep.subr.mxu0 0.0
    %1086 = vmatpush2.msra.mxu0 %v298
    %1087 = vmatprep.mubr.f32.mxu0 %v441
    %1088 = vmatmul.mubr.f32.gmra.mxu0 %v433
    %v1089 = vpop.f32.mrf.mxu0
    %v1090 = vadd.f32 %v1020, %v1089
    %v1091 = vpop.f32.mrf.mxu0
    %1092 = vdwg.mxu0
    %1093 = vmatprep.subr.mxu0 0.0
    %1094 = vmatpush1.msra.mxu0 %v329
    %1095 = vmatprep.subr.mxu0 0.0
    %1096 = vmatpush1.msra.mxu0 %v328
    %1097 = vmatprep.subr.mxu0 0.0
    %1098 = vmatpush1.msra.mxu0 %v327
    %1099 = vmatprep.subr.mxu0 0.0
    %1100 = vmatpush1.msra.mxu0 %v326
    %1101 = vmatprep.subr.mxu0 0.0
    %1102 = vmatpush1.msra.mxu0 %v325
    %1103 = vmatprep.subr.mxu0 0.0
    %1104 = vmatpush1.msra.mxu0 %v324
    %1105 = vmatprep.subr.mxu0 0.0
    %1106 = vmatpush1.msra.mxu0 %v323
    %1107 = vmatprep.subr.mxu0 0.0
    %1108 = vmatpush1.msra.mxu0 %v322
    %1109 = vmatprep.subr.mxu0 0.0
    %1110 = vmatpush1.msra.mxu0 %v321
    %1111 = vmatprep.subr.mxu0 0.0
    %1112 = vmatpush1.msra.mxu0 %v320
    %1113 = vmatprep.subr.mxu0 0.0
    %1114 = vmatpush1.msra.mxu0 %v319
    %1115 = vmatprep.subr.mxu0 0.0
    %1116 = vmatpush1.msra.mxu0 %v318
    %1117 = vmatprep.subr.mxu0 0.0
    %1118 = vmatpush1.msra.mxu0 %v317
    %1119 = vmatprep.subr.mxu0 0.0
    %1120 = vmatpush1.msra.mxu0 %v316
    %1121 = vmatprep.subr.mxu0 0.0
    %1122 = vmatpush1.msra.mxu0 %v315
    %1123 = vmatprep.subr.mxu0 0.0
    %1124 = vmatpush1.msra.mxu0 %v314
    %1125 = vmatprep.subr.mxu0 0.0
    %1126 = vmatpush2.msra.mxu0 %v345
    %1127 = vmatprep.subr.mxu0 0.0
    %1128 = vmatpush2.msra.mxu0 %v344
    %1129 = vmatprep.subr.mxu0 0.0
    %1130 = vmatpush2.msra.mxu0 %v343
    %1131 = vmatprep.subr.mxu0 0.0
    %1132 = vmatpush2.msra.mxu0 %v342
    %1133 = vmatprep.subr.mxu0 0.0
    %1134 = vmatpush2.msra.mxu0 %v341
    %1135 = vmatprep.subr.mxu0 0.0
    %1136 = vmatpush2.msra.mxu0 %v340
    %1137 = vmatprep.subr.mxu0 0.0
    %1138 = vmatpush2.msra.mxu0 %v339
    %1139 = vmatprep.subr.mxu0 0.0
    %1140 = vmatpush2.msra.mxu0 %v338
    %1141 = vmatprep.subr.mxu0 0.0
    %1142 = vmatpush2.msra.mxu0 %v337
    %1143 = vmatprep.subr.mxu0 0.0
    %1144 = vmatpush2.msra.mxu0 %v336
    %1145 = vmatprep.subr.mxu0 0.0
    %1146 = vmatpush2.msra.mxu0 %v335
    %1147 = vmatprep.subr.mxu0 0.0
    %1148 = vmatpush2.msra.mxu0 %v334
    %1149 = vmatprep.subr.mxu0 0.0
    %1150 = vmatpush2.msra.mxu0 %v333
    %1151 = vmatprep.subr.mxu0 0.0
    %1152 = vmatpush2.msra.mxu0 %v332
    %1153 = vmatprep.subr.mxu0 0.0
    %1154 = vmatpush2.msra.mxu0 %v331
    %1155 = vmatprep.subr.mxu0 0.0
    %1156 = vmatpush2.msra.mxu0 %v330
    %1157 = vmatprep.mubr.f32.mxu0 %v442
    %1158 = vmatmul.mubr.f32.gmra.mxu0 %v440
    %v1159 = vpop.f32.mrf.mxu0
    %v1160 = vadd.f32 %v1090, %v1159
    %v1161 = vpop.f32.mrf.mxu0
    %1162 = vdwg.mxu0
    %v1163 = vxor.u32 %v1160, 2147483648
    %v1164 = vmul.f32 %v1163, 1.442695
    %v1165 = vpow.pop %v1164
    %v1166 = vadd.f32 %v1165, 1.0
    %v1167 = vrcp.pop %v1166
    %v1168 = vmul.f32 1.0, %v1167
    %v1169 = vld [vmem:[%s3] sm:$0xff]
    %v1170 = vld [vmem:[%s3 + $0x8] sm:$0xff]
    %v1171 = vld [vmem:[%s3 + $0x10] sm:$0xff]
    %v1172 = vld [vmem:[%s3 + $0x18] sm:$0xff]
    %v1173 = vld [vmem:[%s3 + $0x20] sm:$0xff]
    %v1174 = vld [vmem:[%s3 + $0x28] sm:$0xff]
    %v1175 = vld [vmem:[%s3 + $0x30] sm:$0xff]
    %v1176 = vld [vmem:[%s3 + $0x38] sm:$0xff]
    %v1177 = vld [vmem:[%s3 + $0x40] sm:$0xff]
    %v1178 = vld [vmem:[%s3 + $0x48] sm:$0xff]
    %v1179 = vld [vmem:[%s3 + $0x50] sm:$0xff]
    %v1180 = vld [vmem:[%s3 + $0x58] sm:$0xff]
    %v1181 = vld [vmem:[%s3 + $0x60] sm:$0xff]
    %v1182 = vld [vmem:[%s3 + $0x68] sm:$0xff]
    %v1183 = vld [vmem:[%s3 + $0x70] sm:$0xff]
    %v1184 = vld [vmem:[%s3 + $0x78] sm:$0xff]
    %v1185 = vld [vmem:[%s4] sm:$0x1]
    %v1187 = vlaneseq
    %v1188 = vshrl.u32 %v1187, 7
    %v1189 = vsub.s32 0, %v1188
    %v1190 = vrot.slane %v1185, %v1189
    %1192 = vmatprep.subr.mxu0 0.0
    %1193 = vmatpush1.msra.mxu0 %v1184
    %1194 = vmatprep.subr.mxu0 0.0
    %1195 = vmatpush1.msra.mxu0 %v1183
    %1196 = vmatprep.subr.mxu0 0.0
    %1197 = vmatpush1.msra.mxu0 %v1182
    %1198 = vmatprep.subr.mxu0 0.0
    %1199 = vmatpush1.msra.mxu0 %v1181
    %1200 = vmatprep.subr.mxu0 0.0
    %1201 = vmatpush1.msra.mxu0 %v1180
    %1202 = vmatprep.subr.mxu0 0.0
    %1203 = vmatpush1.msra.mxu0 %v1179
    %1204 = vmatprep.subr.mxu0 0.0
    %1205 = vmatpush1.msra.mxu0 %v1178
    %1206 = vmatprep.subr.mxu0 0.0
    %1207 = vmatpush1.msra.mxu0 %v1177
    %1208 = vmatprep.subr.mxu0 0.0
    %1209 = vmatpush1.msra.mxu0 %v1176
    %1210 = vmatprep.subr.mxu0 0.0
    %1211 = vmatpush1.msra.mxu0 %v1175
    %1212 = vmatprep.subr.mxu0 0.0
    %1213 = vmatpush1.msra.mxu0 %v1174
    %1214 = vmatprep.subr.mxu0 0.0
    %1215 = vmatpush1.msra.mxu0 %v1173
    %1216 = vmatprep.subr.mxu0 0.0
    %1217 = vmatpush1.msra.mxu0 %v1172
    %1218 = vmatprep.subr.mxu0 0.0
    %1219 = vmatpush1.msra.mxu0 %v1171
    %1220 = vmatprep.subr.mxu0 0.0
    %1221 = vmatpush1.msra.mxu0 %v1170
    %1222 = vmatprep.subr.mxu0 0.0
    %1223 = vmatpush1.msra.mxu0 %v1169
    %1224 = vmatprep.subr.mxu0 0.0
    %1225 = vmatpush2.msra.mxu0 0.0
    %1226 = vmatprep.subr.mxu0 0.0
    %1227 = vmatpush2.msra.mxu0 0.0
    %1228 = vmatprep.subr.mxu0 0.0
    %1229 = vmatpush2.msra.mxu0 0.0
    %1230 = vmatprep.subr.mxu0 0.0
    %1231 = vmatpush2.msra.mxu0 0.0
    %1232 = vmatprep.subr.mxu0 0.0
    %1233 = vmatpush2.msra.mxu0 0.0
    %1234 = vmatprep.subr.mxu0 0.0
    %1235 = vmatpush2.msra.mxu0 0.0
    %1236 = vmatprep.subr.mxu0 0.0
    %1237 = vmatpush2.msra.mxu0 0.0
    %1238 = vmatprep.subr.mxu0 0.0
    %1239 = vmatpush2.msra.mxu0 0.0
    %1240 = vmatprep.subr.mxu0 0.0
    %1241 = vmatpush2.msra.mxu0 0.0
    %1242 = vmatprep.subr.mxu0 0.0
    %1243 = vmatpush2.msra.mxu0 0.0
    %1244 = vmatprep.subr.mxu0 0.0
    %1245 = vmatpush2.msra.mxu0 0.0
    %1246 = vmatprep.subr.mxu0 0.0
    %1247 = vmatpush2.msra.mxu0 0.0
    %1248 = vmatprep.subr.mxu0 0.0
    %1249 = vmatpush2.msra.mxu0 0.0
    %1250 = vmatprep.subr.mxu0 0.0
    %1251 = vmatpush2.msra.mxu0 0.0
    %1252 = vmatprep.subr.mxu0 0.0
    %1253 = vmatpush2.msra.mxu0 0.0
    %1254 = vmatprep.subr.mxu0 0.0
    %1255 = vmatpush2.msra.mxu0 0.0
    %1256 = vmatprep.mubr.f32.mxu0 0.0
    %1257 = vmatmul.mubr.f32.gmra.mxu0 %v1168
    %v1258 = vpop.f32.mrf.mxu0
    %v1259 = vadd.f32 %v1190, %v1258
    %v1260 = vpop.f32.mrf.mxu0
    %1261 = vdwg.mxu0
    %vm1262 = vcmask 74752
    %1263 = vst.msk [vmem:[#allocation2] sm:$0x3] %vm1262, %v1259
    // Predicated region
    $region22: #{net_sigmoid_forward.3} parent=1 // pred_check
      _
    $region23: #{net_sigmoid_forward.3} parent=1 // pred_check_branch
      %1265 = sbr.rel (0) target = $region25
    $region24: #{net_sigmoid_forward.3} parent=1 // pred_region
      %s1267 = ssub.s32 32, 32
      %1268 = vsyncadd [#allocation3], %s1267
      %s1270 = sshll.u32 [#allocation2], 4
      %s1271 = int_to_ptr.vmem [resolvable:$true] %s1270
      %1273 = dma.vmem_to_hbm [thread:$0]  %s1271, 32, %s5, [#allocation3]
    $region25: #{net_sigmoid_forward.3} parent=1 // pred_fallthru
      _
    // Predicated region
    $region26: #{net_sigmoid_forward.3} parent=1 // pred_check
      _
    $region27: #{net_sigmoid_forward.3} parent=1 // pred_check_branch
      %1275 = sbr.rel (0) target = $region29
    $region28: #{net_sigmoid_forward.3} parent=1 // pred_region
      %1276 = dma.done [#allocation3], 32
    $region29: #{net_sigmoid_forward.3} parent=1 // pred_fallthru
      _
    %1277 = vsyncpa [#allocation3], 1

// kernel: net_sigmoid_forward.2
$region0: #{net_sigmoid_forward.2}
  #allocation0 [shape = 'u32[]', space=smem, size = 0x4, offset = 0x4, fixed_abs, tag = 'smem constant byte address 0x4 - core index']
  #allocation1 [shape = 'u32[144,128]{1,0:T(1,128)}', space=vmem, size = 0x12000, scoped, tag = 'internal scratch']
  %s0 = inlined_call_operand.vmem [shape: f32[2,72,16], index: 0, kind: input, shape index: {}]
  %s1 = inlined_call_operand.vmem [shape: f32[4,16,512], index: 1, kind: input, shape index: {}]
  %s2 = inlined_call_operand.vmem [shape: f32[1,512], index: 2, kind: input, shape index: {}]
  %s3 = inlined_call_operand.vmem [shape: f32[4,128,256], index: 3, kind: input, shape index: {}]
  %s4 = inlined_call_operand.vmem [shape: f32[1,256], index: 4, kind: input, shape index: {}]
  %s5 = inlined_call_operand.vmem [shape: f32[2,40,64], index: 5, kind: output, shape index: {}]
  %s6 = sld [smem:[#allocation0]]
  $region30: #{net_sigmoid_forward.2} parent=0
    _
  %s8 = ssub.s32 1, %s6
  %s9 = scalar_select 0, %s8, %s6
  // Predicated region
  $region2: #{net_sigmoid_forward.2} parent=0 // pred_check
    _
  $region3: #{net_sigmoid_forward.2} parent=0 // pred_check_branch
    %11 = sbr.rel (0) target = $region5
  $region4: #{net_sigmoid_forward.2} parent=0 // pred_region
    _
  $region5: #{net_sigmoid_forward.2} parent=0 // pred_fallthru
    _
  // Predicated region
  $region6: #{net_sigmoid_forward.2} parent=0 // pred_check
    _
  $region7: #{net_sigmoid_forward.2} parent=0 // pred_check_branch
    %13 = sbr.rel (0) target = $region9
  $region8: #{net_sigmoid_forward.2} parent=0 // pred_region
    _
  $region9: #{net_sigmoid_forward.2} parent=0 // pred_fallthru
    _
  // Predicated region
  $region10: #{net_sigmoid_forward.2} parent=0 // pred_check
    _
  $region11: #{net_sigmoid_forward.2} parent=0 // pred_check_branch
    %15 = sbr.rel (0) target = $region13
  $region12: #{net_sigmoid_forward.2} parent=0 // pred_region
    _
  $region13: #{net_sigmoid_forward.2} parent=0 // pred_fallthru
    _
  // Predicated region
  $region14: #{net_sigmoid_forward.2} parent=0 // pred_check
    _
  $region15: #{net_sigmoid_forward.2} parent=0 // pred_check_branch
    %17 = sbr.rel (0) target = $region17
  $region16: #{net_sigmoid_forward.2} parent=0 // pred_region
    _
  $region17: #{net_sigmoid_forward.2} parent=0 // pred_fallthru
    _
  // Predicated region
  $region18: #{net_sigmoid_forward.2} parent=0 // pred_check
    _
  $region19: #{net_sigmoid_forward.2} parent=0 // pred_check_branch
    %19 = sbr.rel (0) target = $region21
  $region20: #{net_sigmoid_forward.2} parent=0 // pred_region
    _
  $region21: #{net_sigmoid_forward.2} parent=0 // pred_fallthru
    _
  %v20 = vld [vmem:[%s0] sm:$0xff]
  %v21 = vld [vmem:[%s0 + $0x8] sm:$0xff]
  %v22 = vld [vmem:[%s0 + $0x10] sm:$0xff]
  %v23 = vld [vmem:[%s0 + $0x18] sm:$0xff]
  %v24 = vld [vmem:[%s0 + $0x20] sm:$0xff]
  %v25 = vld [vmem:[%s0 + $0x28] sm:$0xff]
  %v26 = vld [vmem:[%s0 + $0x30] sm:$0xff]
  %v27 = vld [vmem:[%s0 + $0x38] sm:$0xff]
  %v28 = vld [vmem:[%s0 + $0x40] sm:$0xff]
  %v29 = vld [vmem:[%s1] sm:$0xff]
  %v30 = vld [vmem:[%s1 + $0x8] sm:$0xff]
  %v31 = vld [vmem:[%s1 + $0x10] sm:$0xff]
  %v32 = vld [vmem:[%s1 + $0x18] sm:$0xff]
  %v33 = vld [vmem:[%s1 + $0x20] sm:$0xff]
  %v34 = vld [vmem:[%s1 + $0x28] sm:$0xff]
  %v35 = vld [vmem:[%s1 + $0x30] sm:$0xff]
  %v36 = vld [vmem:[%s1 + $0x38] sm:$0xff]
  %s37 = scalar_lea.vmem %s1, 64
  %v38 = vld [vmem:[%s37] sm:$0xff]
  %v39 = vld [vmem:[%s37 + $0x8] sm:$0xff]
  %v40 = vld [vmem:[%s37 + $0x10] sm:$0xff]
  %v41 = vld [vmem:[%s37 + $0x18] sm:$0xff]
  %v42 = vld [vmem:[%s37 + $0x20] sm:$0xff]
  %v43 = vld [vmem:[%s37 + $0x28] sm:$0xff]
  %v44 = vld [vmem:[%s37 + $0x30] sm:$0xff]
  %v45 = vld [vmem:[%s37 + $0x38] sm:$0xff]
  %vm54 = vcmask 1046528
  %v55 = vrot.slane %v20, 1
  %v56 = vrot.slane %v21, 1
  %v57 = vsel %vm54, %v55, %v56
  %v58 = vrot.slane %v22, 1
  %v59 = vsel %vm54, %v56, %v58
  %v60 = vrot.slane %v23, 1
  %v61 = vsel %vm54, %v58, %v60
  %v62 = vrot.slane %v24, 1
  %v63 = vsel %vm54, %v60, %v62
  %v64 = vrot.slane %v25, 1
  %v65 = vsel %vm54, %v62, %v64
  %v66 = vrot.slane %v26, 1
  %v67 = vsel %vm54, %v64, %v66
  %v68 = vrot.slane %v27, 1
  %v69 = vsel %vm54, %v66, %v68
  %vm70 = vcmask 130048
  %v71 = vsel %vm70, %v57, 0
  %v73 = vsel %vm70, %v59, 0
  %v75 = vsel %vm70, %v61, 0
  %v77 = vsel %vm70, %v63, 0
  %v79 = vsel %vm70, %v65, 0
  %v81 = vsel %vm70, %v67, 0
  %v83 = vsel %vm70, %v69, 0
  %85 = vmatprep.subr.mxu0 0.0
  %86 = vmatpush1.msra.mxu0 0.0
  %87 = vmatprep.subr.mxu0 0.0
  %88 = vmatpush1.msra.mxu0 0.0
  %89 = vmatprep.subr.mxu0 0.0
  %90 = vmatpush1.msra.mxu0 0.0
  %91 = vmatprep.subr.mxu0 0.0
  %92 = vmatpush1.msra.mxu0 0.0
  %93 = vmatprep.subr.mxu0 0.0
  %94 = vmatpush1.msra.mxu0 0.0
  %95 = vmatprep.subr.mxu0 0.0
  %96 = vmatpush1.msra.mxu0 0.0
  %97 = vmatprep.subr.mxu0 0.0
  %98 = vmatpush1.msra.mxu0 0.0
  %99 = vmatprep.subr.mxu0 0.0
  %100 = vmatpush1.msra.mxu0 0.0
  %101 = vmatprep.subr.mxu0 0.0
  %102 = vmatpush1.msra.mxu0 0.0
  %103 = vmatprep.subr.mxu0 0.0
  %104 = vmatpush1.msra.mxu0 0.0
  %105 = vmatprep.subr.mxu0 0.0
  %106 = vmatpush1.msra.mxu0 0.0
  %107 = vmatprep.subr.mxu0 0.0
  %108 = vmatpush1.msra.mxu0 0.0
  %109 = vmatprep.subr.mxu0 0.0
  %110 = vmatpush1.msra.mxu0 0.0
  %111 = vmatprep.subr.mxu0 0.0
  %112 = vmatpush1.msra.mxu0 0.0
  %113 = vmatprep.subr.mxu0 %v43
  %114 = vmatpush1.msra.mxu0 %v42
  %115 = vmatprep.subr.mxu0 %v39
  %116 = vmatpush1.msra.mxu0 %v38
  %117 = vmatprep.subr.mxu0 0.0
  %118 = vmatpush2.msra.mxu0 0.0
  %119 = vmatprep.subr.mxu0 0.0
  %120 = vmatpush2.msra.mxu0 0.0
  %121 = vmatprep.subr.mxu0 0.0
  %122 = vmatpush2.msra.mxu0 0.0
  %123 = vmatprep.subr.mxu0 0.0
  %124 = vmatpush2.msra.mxu0 0.0
  %125 = vmatprep.subr.mxu0 0.0
  %126 = vmatpush2.msra.mxu0 0.0
  %127 = vmatprep.subr.mxu0 0.0
  %128 = vmatpush2.msra.mxu0 0.0
  %129 = vmatprep.subr.mxu0 0.0
  %130 = vmatpush2.msra.mxu0 0.0
  %131 = vmatprep.subr.mxu0 0.0
  %132 = vmatpush2.msra.mxu0 0.0
  %133 = vmatprep.subr.mxu0 0.0
  %134 = vmatpush2.msra.mxu0 0.0
  %135 = vmatprep.subr.mxu0 0.0
  %136 = vmatpush2.msra.mxu0 0.0
  %137 = vmatprep.subr.mxu0 0.0
  %138 = vmatpush2.msra.mxu0 0.0
  %139 = vmatprep.subr.mxu0 0.0
  %140 = vmatpush2.msra.mxu0 0.0
  %141 = vmatprep.subr.mxu0 0.0
  %142 = vmatpush2.msra.mxu0 0.0
  %143 = vmatprep.subr.mxu0 0.0
  %144 = vmatpush2.msra.mxu0 0.0
  %145 = vmatprep.subr.mxu0 0.0
  %146 = vmatpush2.msra.mxu0 0.0
  %147 = vmatprep.subr.mxu0 0.0
  %148 = vmatpush2.msra.mxu0 0.0
  %149 = vmatprep.mubr.f32.mxu0 0.0
  %150 = vmatmul.mubr.f32.gmra.mxu0 %v71
  %v151 = vpop.f32.mrf.mxu0
  %v152 = vadd.f32 0.0, %v151
  %v153 = vpop.f32.mrf.mxu0
  %v154 = vadd.f32 0.0, %v153
  %155 = vmatprep.mubr.f32.mxu0 0.0
  %156 = vmatmul.mubr.f32.gmra.mxu0 %v73
  %v157 = vpop.f32.mrf.mxu0
  %v158 = vadd.f32 0.0, %v157
  %v159 = vpop.f32.mrf.mxu0
  %v160 = vadd.f32 0.0, %v159
  %161 = vmatprep.mubr.f32.mxu0 0.0
  %162 = vmatmul.mubr.f32.gmra.mxu0 %v75
  %v163 = vpop.f32.mrf.mxu0
  %v164 = vadd.f32 0.0, %v163
  %v165 = vpop.f32.mrf.mxu0
  %v166 = vadd.f32 0.0, %v165
  %167 = vmatprep.mubr.f32.mxu0 0.0
  %168 = vmatmul.mubr.f32.gmra.mxu0 %v77
  %v169 = vpop.f32.mrf.mxu0
  %v170 = vadd.f32 0.0, %v169
  %v171 = vpop.f32.mrf.mxu0
  %v172 = vadd.f32 0.0, %v171
  %173 = vmatprep.mubr.f32.mxu0 0.0
  %174 = vmatmul.mubr.f32.gmra.mxu0 %v79
  %v175 = vpop.f32.mrf.mxu0
  %v176 = vadd.f32 0.0, %v175
  %v177 = vpop.f32.mrf.mxu0
  %v178 = vadd.f32 0.0, %v177
  %179 = vmatprep.mubr.f32.mxu0 0.0
  %180 = vmatmul.mubr.f32.gmra.mxu0 %v81
  %v181 = vpop.f32.mrf.mxu0
  %v182 = vadd.f32 0.0, %v181
  %v183 = vpop.f32.mrf.mxu0
  %v184 = vadd.f32 0.0, %v183
  %185 = vmatprep.mubr.f32.mxu0 0.0
  %186 = vmatmul.mubr.f32.gmra.mxu0 %v83
  %v187 = vpop.f32.mrf.mxu0
  %v188 = vadd.f32 0.0, %v187
  %v189 = vpop.f32.mrf.mxu0
  %v190 = vadd.f32 0.0, %v189
  %191 = vdwg.mxu0
  %192 = vmatprep.subr.mxu0 0.0
  %193 = vmatpush1.msra.mxu0 0.0
  %194 = vmatprep.subr.mxu0 0.0
  %195 = vmatpush1.msra.mxu0 0.0
  %196 = vmatprep.subr.mxu0 0.0
  %197 = vmatpush1.msra.mxu0 0.0
  %198 = vmatprep.subr.mxu0 0.0
  %199 = vmatpush1.msra.mxu0 0.0
  %200 = vmatprep.subr.mxu0 0.0
  %201 = vmatpush1.msra.mxu0 0.0
  %202 = vmatprep.subr.mxu0 0.0
  %203 = vmatpush1.msra.mxu0 0.0
  %204 = vmatprep.subr.mxu0 0.0
  %205 = vmatpush1.msra.mxu0 0.0
  %206 = vmatprep.subr.mxu0 0.0
  %207 = vmatpush1.msra.mxu0 0.0
  %208 = vmatprep.subr.mxu0 0.0
  %209 = vmatpush1.msra.mxu0 0.0
  %210 = vmatprep.subr.mxu0 0.0
  %211 = vmatpush1.msra.mxu0 0.0
  %212 = vmatprep.subr.mxu0 0.0
  %213 = vmatpush1.msra.mxu0 0.0
  %214 = vmatprep.subr.mxu0 0.0
  %215 = vmatpush1.msra.mxu0 0.0
  %216 = vmatprep.subr.mxu0 0.0
  %217 = vmatpush1.msra.mxu0 0.0
  %218 = vmatprep.subr.mxu0 0.0
  %219 = vmatpush1.msra.mxu0 0.0
  %220 = vmatprep.subr.mxu0 %v45
  %221 = vmatpush1.msra.mxu0 %v44
  %222 = vmatprep.subr.mxu0 %v41
  %223 = vmatpush1.msra.mxu0 %v40
  %224 = vmatprep.subr.mxu0 0.0
  %225 = vmatpush2.msra.mxu0 0.0
  %226 = vmatprep.subr.mxu0 0.0
  %227 = vmatpush2.msra.mxu0 0.0
  %228 = vmatprep.subr.mxu0 0.0
  %229 = vmatpush2.msra.mxu0 0.0
  %230 = vmatprep.subr.mxu0 0.0
  %231 = vmatpush2.msra.mxu0 0.0
  %232 = vmatprep.subr.mxu0 0.0
  %233 = vmatpush2.msra.mxu0 0.0
  %234 = vmatprep.subr.mxu0 0.0
  %235 = vmatpush2.msra.mxu0 0.0
  %236 = vmatprep.subr.mxu0 0.0
  %237 = vmatpush2.msra.mxu0 0.0
  %238 = vmatprep.subr.mxu0 0.0
  %239 = vmatpush2.msra.mxu0 0.0
  %240 = vmatprep.subr.mxu0 0.0
  %241 = vmatpush2.msra.mxu0 0.0
  %242 = vmatprep.subr.mxu0 0.0
  %243 = vmatpush2.msra.mxu0 0.0
  %244 = vmatprep.subr.mxu0 0.0
  %245 = vmatpush2.msra.mxu0 0.0
  %246 = vmatprep.subr.mxu0 0.0
  %247 = vmatpush2.msra.mxu0 0.0
  %248 = vmatprep.subr.mxu0 0.0
  %249 = vmatpush2.msra.mxu0 0.0
  %250 = vmatprep.subr.mxu0 0.0
  %251 = vmatpush2.msra.mxu0 0.0
  %252 = vmatprep.subr.mxu0 0.0
  %253 = vmatpush2.msra.mxu0 0.0
  %254 = vmatprep.subr.mxu0 0.0
  %255 = vmatpush2.msra.mxu0 0.0
  %256 = vmatprep.mubr.f32.mxu0 0.0
  %257 = vmatmul.mubr.f32.gmra.mxu0 %v71
  %v258 = vpop.f32.mrf.mxu0
  %v259 = vadd.f32 0.0, %v258
  %v260 = vpop.f32.mrf.mxu0
  %v261 = vadd.f32 0.0, %v260
  %262 = vmatprep.mubr.f32.mxu0 0.0
  %263 = vmatmul.mubr.f32.gmra.mxu0 %v73
  %v264 = vpop.f32.mrf.mxu0
  %v265 = vadd.f32 0.0, %v264
  %v266 = vpop.f32.mrf.mxu0
  %v267 = vadd.f32 0.0, %v266
  %268 = vmatprep.mubr.f32.mxu0 0.0
  %269 = vmatmul.mubr.f32.gmra.mxu0 %v75
  %v270 = vpop.f32.mrf.mxu0
  %v271 = vadd.f32 0.0, %v270
  %v272 = vpop.f32.mrf.mxu0
  %v273 = vadd.f32 0.0, %v272
  %274 = vmatprep.mubr.f32.mxu0 0.0
  %275 = vmatmul.mubr.f32.gmra.mxu0 %v77
  %v276 = vpop.f32.mrf.mxu0
  %v277 = vadd.f32 0.0, %v276
  %v278 = vpop.f32.mrf.mxu0
  %v279 = vadd.f32 0.0, %v278
  %280 = vmatprep.mubr.f32.mxu0 0.0
  %281 = vmatmul.mubr.f32.gmra.mxu0 %v79
  %v282 = vpop.f32.mrf.mxu0
  %v283 = vadd.f32 0.0, %v282
  %v284 = vpop.f32.mrf.mxu0
  %v285 = vadd.f32 0.0, %v284
  %286 = vmatprep.mubr.f32.mxu0 0.0
  %287 = vmatmul.mubr.f32.gmra.mxu0 %v81
  %v288 = vpop.f32.mrf.mxu0
  %v289 = vadd.f32 0.0, %v288
  %v290 = vpop.f32.mrf.mxu0
  %v291 = vadd.f32 0.0, %v290
  %292 = vmatprep.mubr.f32.mxu0 0.0
  %293 = vmatmul.mubr.f32.gmra.mxu0 %v83
  %v294 = vpop.f32.mrf.mxu0
  %v295 = vadd.f32 0.0, %v294
  %v296 = vpop.f32.mrf.mxu0
  %v297 = vadd.f32 0.0, %v296
  %298 = vdwg.mxu0
  %v299 = vsel %vm70, %v20, 0
  %v301 = vsel %vm70, %v21, 0
  %v303 = vsel %vm70, %v22, 0
  %v305 = vsel %vm70, %v23, 0
  %v307 = vsel %vm70, %v24, 0
  %v309 = vsel %vm70, %v25, 0
  %v311 = vsel %vm70, %v26, 0
  %313 = vmatprep.subr.mxu0 0.0
  %314 = vmatpush1.msra.mxu0 0.0
  %315 = vmatprep.subr.mxu0 0.0
  %316 = vmatpush1.msra.mxu0 0.0
  %317 = vmatprep.subr.mxu0 0.0
  %318 = vmatpush1.msra.mxu0 0.0
  %319 = vmatprep.subr.mxu0 0.0
  %320 = vmatpush1.msra.mxu0 0.0
  %321 = vmatprep.subr.mxu0 0.0
  %322 = vmatpush1.msra.mxu0 0.0
  %323 = vmatprep.subr.mxu0 0.0
  %324 = vmatpush1.msra.mxu0 0.0
  %325 = vmatprep.subr.mxu0 0.0
  %326 = vmatpush1.msra.mxu0 0.0
  %327 = vmatprep.subr.mxu0 0.0
  %328 = vmatpush1.msra.mxu0 0.0
  %329 = vmatprep.subr.mxu0 0.0
  %330 = vmatpush1.msra.mxu0 0.0
  %331 = vmatprep.subr.mxu0 0.0
  %332 = vmatpush1.msra.mxu0 0.0
  %333 = vmatprep.subr.mxu0 0.0
  %334 = vmatpush1.msra.mxu0 0.0
  %335 = vmatprep.subr.mxu0 0.0
  %336 = vmatpush1.msra.mxu0 0.0
  %337 = vmatprep.subr.mxu0 0.0
  %338 = vmatpush1.msra.mxu0 0.0
  %339 = vmatprep.subr.mxu0 0.0
  %340 = vmatpush1.msra.mxu0 0.0
  %341 = vmatprep.subr.mxu0 %v34
  %342 = vmatpush1.msra.mxu0 %v33
  %343 = vmatprep.subr.mxu0 %v30
  %344 = vmatpush1.msra.mxu0 %v29
  %345 = vmatprep.subr.mxu0 0.0
  %346 = vmatpush2.msra.mxu0 0.0
  %347 = vmatprep.subr.mxu0 0.0
  %348 = vmatpush2.msra.mxu0 0.0
  %349 = vmatprep.subr.mxu0 0.0
  %350 = vmatpush2.msra.mxu0 0.0
  %351 = vmatprep.subr.mxu0 0.0
  %352 = vmatpush2.msra.mxu0 0.0
  %353 = vmatprep.subr.mxu0 0.0
  %354 = vmatpush2.msra.mxu0 0.0
  %355 = vmatprep.subr.mxu0 0.0
  %356 = vmatpush2.msra.mxu0 0.0
  %357 = vmatprep.subr.mxu0 0.0
  %358 = vmatpush2.msra.mxu0 0.0
  %359 = vmatprep.subr.mxu0 0.0
  %360 = vmatpush2.msra.mxu0 0.0
  %361 = vmatprep.subr.mxu0 0.0
  %362 = vmatpush2.msra.mxu0 0.0
  %363 = vmatprep.subr.mxu0 0.0
  %364 = vmatpush2.msra.mxu0 0.0
  %365 = vmatprep.subr.mxu0 0.0
  %366 = vmatpush2.msra.mxu0 0.0
  %367 = vmatprep.subr.mxu0 0.0
  %368 = vmatpush2.msra.mxu0 0.0
  %369 = vmatprep.subr.mxu0 0.0
  %370 = vmatpush2.msra.mxu0 0.0
  %371 = vmatprep.subr.mxu0 0.0
  %372 = vmatpush2.msra.mxu0 0.0
  %373 = vmatprep.subr.mxu0 0.0
  %374 = vmatpush2.msra.mxu0 0.0
  %375 = vmatprep.subr.mxu0 0.0
  %376 = vmatpush2.msra.mxu0 0.0
  %377 = vmatprep.mubr.f32.mxu0 0.0
  %378 = vmatmul.mubr.f32.gmra.mxu0 %v299
  %v379 = vpop.f32.mrf.mxu0
  %v380 = vadd.f32 %v152, %v379
  %v381 = vpop.f32.mrf.mxu0
  %v382 = vadd.f32 %v154, %v381
  %383 = vmatprep.mubr.f32.mxu0 0.0
  %384 = vmatmul.mubr.f32.gmra.mxu0 %v301
  %v385 = vpop.f32.mrf.mxu0
  %v386 = vadd.f32 %v158, %v385
  %v387 = vpop.f32.mrf.mxu0
  %v388 = vadd.f32 %v160, %v387
  %389 = vmatprep.mubr.f32.mxu0 0.0
  %390 = vmatmul.mubr.f32.gmra.mxu0 %v303
  %v391 = vpop.f32.mrf.mxu0
  %v392 = vadd.f32 %v164, %v391
  %v393 = vpop.f32.mrf.mxu0
  %v394 = vadd.f32 %v166, %v393
  %395 = vmatprep.mubr.f32.mxu0 0.0
  %396 = vmatmul.mubr.f32.gmra.mxu0 %v305
  %v397 = vpop.f32.mrf.mxu0
  %v398 = vadd.f32 %v170, %v397
  %v399 = vpop.f32.mrf.mxu0
  %v400 = vadd.f32 %v172, %v399
  %401 = vmatprep.mubr.f32.mxu0 0.0
  %402 = vmatmul.mubr.f32.gmra.mxu0 %v307
  %v403 = vpop.f32.mrf.mxu0
  %v404 = vadd.f32 %v176, %v403
  %v405 = vpop.f32.mrf.mxu0
  %v406 = vadd.f32 %v178, %v405
  %407 = vmatprep.mubr.f32.mxu0 0.0
  %408 = vmatmul.mubr.f32.gmra.mxu0 %v309
  %v409 = vpop.f32.mrf.mxu0
  %v410 = vadd.f32 %v182, %v409
  %v411 = vpop.f32.mrf.mxu0
  %v412 = vadd.f32 %v184, %v411
  %413 = vmatprep.mubr.f32.mxu0 0.0
  %414 = vmatmul.mubr.f32.gmra.mxu0 %v311
  %v415 = vpop.f32.mrf.mxu0
  %v416 = vadd.f32 %v188, %v415
  %v417 = vpop.f32.mrf.mxu0
  %v418 = vadd.f32 %v190, %v417
  %419 = vdwg.mxu0
  %420 = vmatprep.subr.mxu0 0.0
  %421 = vmatpush1.msra.mxu0 0.0
  %422 = vmatprep.subr.mxu0 0.0
  %423 = vmatpush1.msra.mxu0 0.0
  %424 = vmatprep.subr.mxu0 0.0
  %425 = vmatpush1.msra.mxu0 0.0
  %426 = vmatprep.subr.mxu0 0.0
  %427 = vmatpush1.msra.mxu0 0.0
  %428 = vmatprep.subr.mxu0 0.0
  %429 = vmatpush1.msra.mxu0 0.0
  %430 = vmatprep.subr.mxu0 0.0
  %431 = vmatpush1.msra.mxu0 0.0
  %432 = vmatprep.subr.mxu0 0.0
  %433 = vmatpush1.msra.mxu0 0.0
  %434 = vmatprep.subr.mxu0 0.0
  %435 = vmatpush1.msra.mxu0 0.0
  %436 = vmatprep.subr.mxu0 0.0
  %437 = vmatpush1.msra.mxu0 0.0
  %438 = vmatprep.subr.mxu0 0.0
  %439 = vmatpush1.msra.mxu0 0.0
  %440 = vmatprep.subr.mxu0 0.0
  %441 = vmatpush1.msra.mxu0 0.0
  %442 = vmatprep.subr.mxu0 0.0
  %443 = vmatpush1.msra.mxu0 0.0
  %444 = vmatprep.subr.mxu0 0.0
  %445 = vmatpush1.msra.mxu0 0.0
  %446 = vmatprep.subr.mxu0 0.0
  %447 = vmatpush1.msra.mxu0 0.0
  %448 = vmatprep.subr.mxu0 %v36
  %449 = vmatpush1.msra.mxu0 %v35
  %450 = vmatprep.subr.mxu0 %v32
  %451 = vmatpush1.msra.mxu0 %v31
  %452 = vmatprep.subr.mxu0 0.0
  %453 = vmatpush2.msra.mxu0 0.0
  %454 = vmatprep.subr.mxu0 0.0
  %455 = vmatpush2.msra.mxu0 0.0
  %456 = vmatprep.subr.mxu0 0.0
  %457 = vmatpush2.msra.mxu0 0.0
  %458 = vmatprep.subr.mxu0 0.0
  %459 = vmatpush2.msra.mxu0 0.0
  %460 = vmatprep.subr.mxu0 0.0
  %461 = vmatpush2.msra.mxu0 0.0
  %462 = vmatprep.subr.mxu0 0.0
  %463 = vmatpush2.msra.mxu0 0.0
  %464 = vmatprep.subr.mxu0 0.0
  %465 = vmatpush2.msra.mxu0 0.0
  %466 = vmatprep.subr.mxu0 0.0
  %467 = vmatpush2.msra.mxu0 0.0
  %468 = vmatprep.subr.mxu0 0.0
  %469 = vmatpush2.msra.mxu0 0.0
  %470 = vmatprep.subr.mxu0 0.0
  %471 = vmatpush2.msra.mxu0 0.0
  %472 = vmatprep.subr.mxu0 0.0
  %473 = vmatpush2.msra.mxu0 0.0
  %474 = vmatprep.subr.mxu0 0.0
  %475 = vmatpush2.msra.mxu0 0.0
  %476 = vmatprep.subr.mxu0 0.0
  %477 = vmatpush2.msra.mxu0 0.0
  %478 = vmatprep.subr.mxu0 0.0
  %479 = vmatpush2.msra.mxu0 0.0
  %480 = vmatprep.subr.mxu0 0.0
  %481 = vmatpush2.msra.mxu0 0.0
  %482 = vmatprep.subr.mxu0 0.0
  %483 = vmatpush2.msra.mxu0 0.0
  %484 = vmatprep.mubr.f32.mxu0 0.0
  %485 = vmatmul.mubr.f32.gmra.mxu0 %v299
  %v486 = vpop.f32.mrf.mxu0
  %v487 = vadd.f32 %v259, %v486
  %v488 = vpop.f32.mrf.mxu0
  %v489 = vadd.f32 %v261, %v488
  %490 = vmatprep.mubr.f32.mxu0 0.0
  %491 = vmatmul.mubr.f32.gmra.mxu0 %v301
  %v492 = vpop.f32.mrf.mxu0
  %v493 = vadd.f32 %v265, %v492
  %v494 = vpop.f32.mrf.mxu0
  %v495 = vadd.f32 %v267, %v494
  %496 = vmatprep.mubr.f32.mxu0 0.0
  %497 = vmatmul.mubr.f32.gmra.mxu0 %v303
  %v498 = vpop.f32.mrf.mxu0
  %v499 = vadd.f32 %v271, %v498
  %v500 = vpop.f32.mrf.mxu0
  %v501 = vadd.f32 %v273, %v500
  %502 = vmatprep.mubr.f32.mxu0 0.0
  %503 = vmatmul.mubr.f32.gmra.mxu0 %v305
  %v504 = vpop.f32.mrf.mxu0
  %v505 = vadd.f32 %v277, %v504
  %v506 = vpop.f32.mrf.mxu0
  %v507 = vadd.f32 %v279, %v506
  %508 = vmatprep.mubr.f32.mxu0 0.0
  %509 = vmatmul.mubr.f32.gmra.mxu0 %v307
  %v510 = vpop.f32.mrf.mxu0
  %v511 = vadd.f32 %v283, %v510
  %v512 = vpop.f32.mrf.mxu0
  %v513 = vadd.f32 %v285, %v512
  %514 = vmatprep.mubr.f32.mxu0 0.0
  %515 = vmatmul.mubr.f32.gmra.mxu0 %v309
  %v516 = vpop.f32.mrf.mxu0
  %v517 = vadd.f32 %v289, %v516
  %v518 = vpop.f32.mrf.mxu0
  %v519 = vadd.f32 %v291, %v518
  %520 = vmatprep.mubr.f32.mxu0 0.0
  %521 = vmatmul.mubr.f32.gmra.mxu0 %v311
  %v522 = vpop.f32.mrf.mxu0
  %v523 = vadd.f32 %v295, %v522
  %v524 = vpop.f32.mrf.mxu0
  %v525 = vadd.f32 %v297, %v524
  %526 = vdwg.mxu0
  %s527 = scalar_lea.vmem %s1, 128
  %v528 = vld [vmem:[%s527] sm:$0xff]
  %v529 = vld [vmem:[%s527 + $0x8] sm:$0xff]
  %v530 = vld [vmem:[%s527 + $0x10] sm:$0xff]
  %v531 = vld [vmem:[%s527 + $0x18] sm:$0xff]
  %v532 = vld [vmem:[%s527 + $0x20] sm:$0xff]
  %v533 = vld [vmem:[%s527 + $0x28] sm:$0xff]
  %v534 = vld [vmem:[%s527 + $0x30] sm:$0xff]
  %v535 = vld [vmem:[%s527 + $0x38] sm:$0xff]
  %v536 = vsel %vm70, %v27, 0
  %538 = vmatprep.subr.mxu0 0.0
  %539 = vmatpush1.msra.mxu0 0.0
  %540 = vmatprep.subr.mxu0 0.0
  %541 = vmatpush1.msra.mxu0 0.0
  %542 = vmatprep.subr.mxu0 0.0
  %543 = vmatpush1.msra.mxu0 0.0
  %544 = vmatprep.subr.mxu0 0.0
  %545 = vmatpush1.msra.mxu0 0.0
  %546 = vmatprep.subr.mxu0 0.0
  %547 = vmatpush1.msra.mxu0 0.0
  %548 = vmatprep.subr.mxu0 0.0
  %549 = vmatpush1.msra.mxu0 0.0
  %550 = vmatprep.subr.mxu0 0.0
  %551 = vmatpush1.msra.mxu0 0.0
  %552 = vmatprep.subr.mxu0 0.0
  %553 = vmatpush1.msra.mxu0 0.0
  %554 = vmatprep.subr.mxu0 0.0
  %555 = vmatpush1.msra.mxu0 0.0
  %556 = vmatprep.subr.mxu0 0.0
  %557 = vmatpush1.msra.mxu0 0.0
  %558 = vmatprep.subr.mxu0 0.0
  %559 = vmatpush1.msra.mxu0 0.0
  %560 = vmatprep.subr.mxu0 0.0
  %561 = vmatpush1.msra.mxu0 0.0
  %562 = vmatprep.subr.mxu0 0.0
  %563 = vmatpush1.msra.mxu0 0.0
  %564 = vmatprep.subr.mxu0 0.0
  %565 = vmatpush1.msra.mxu0 0.0
  %566 = vmatprep.subr.mxu0 %v533
  %567 = vmatpush1.msra.mxu0 %v532
  %568 = vmatprep.subr.mxu0 %v529
  %569 = vmatpush1.msra.mxu0 %v528
  %570 = vmatprep.subr.mxu0 0.0
  %571 = vmatpush2.msra.mxu0 0.0
  %572 = vmatprep.subr.mxu0 0.0
  %573 = vmatpush2.msra.mxu0 0.0
  %574 = vmatprep.subr.mxu0 0.0
  %575 = vmatpush2.msra.mxu0 0.0
  %576 = vmatprep.subr.mxu0 0.0
  %577 = vmatpush2.msra.mxu0 0.0
  %578 = vmatprep.subr.mxu0 0.0
  %579 = vmatpush2.msra.mxu0 0.0
  %580 = vmatprep.subr.mxu0 0.0
  %581 = vmatpush2.msra.mxu0 0.0
  %582 = vmatprep.subr.mxu0 0.0
  %583 = vmatpush2.msra.mxu0 0.0
  %584 = vmatprep.subr.mxu0 0.0
  %585 = vmatpush2.msra.mxu0 0.0
  %586 = vmatprep.subr.mxu0 0.0
  %587 = vmatpush2.msra.mxu0 0.0
  %588 = vmatprep.subr.mxu0 0.0
  %589 = vmatpush2.msra.mxu0 0.0
  %590 = vmatprep.subr.mxu0 0.0
  %591 = vmatpush2.msra.mxu0 0.0
  %592 = vmatprep.subr.mxu0 0.0
  %593 = vmatpush2.msra.mxu0 0.0
  %594 = vmatprep.subr.mxu0 0.0
  %595 = vmatpush2.msra.mxu0 0.0
  %596 = vmatprep.subr.mxu0 0.0
  %597 = vmatpush2.msra.mxu0 0.0
  %598 = vmatprep.subr.mxu0 0.0
  %599 = vmatpush2.msra.mxu0 0.0
  %600 = vmatprep.subr.mxu0 0.0
  %601 = vmatpush2.msra.mxu0 0.0
  %602 = vmatprep.mubr.f32.mxu0 0.0
  %603 = vmatmul.mubr.f32.gmra.mxu0 %v301
  %v604 = vpop.f32.mrf.mxu0
  %v605 = vadd.f32 0.0, %v604
  %v606 = vpop.f32.mrf.mxu0
  %v607 = vadd.f32 0.0, %v606
  %608 = vmatprep.mubr.f32.mxu0 0.0
  %609 = vmatmul.mubr.f32.gmra.mxu0 %v303
  %v610 = vpop.f32.mrf.mxu0
  %v611 = vadd.f32 0.0, %v610
  %v612 = vpop.f32.mrf.mxu0
  %v613 = vadd.f32 0.0, %v612
  %614 = vmatprep.mubr.f32.mxu0 0.0
  %615 = vmatmul.mubr.f32.gmra.mxu0 %v305
  %v616 = vpop.f32.mrf.mxu0
  %v617 = vadd.f32 0.0, %v616
  %v618 = vpop.f32.mrf.mxu0
  %v619 = vadd.f32 0.0, %v618
  %620 = vmatprep.mubr.f32.mxu0 0.0
  %621 = vmatmul.mubr.f32.gmra.mxu0 %v307
  %v622 = vpop.f32.mrf.mxu0
  %v623 = vadd.f32 0.0, %v622
  %v624 = vpop.f32.mrf.mxu0
  %v625 = vadd.f32 0.0, %v624
  %626 = vmatprep.mubr.f32.mxu0 0.0
  %627 = vmatmul.mubr.f32.gmra.mxu0 %v309
  %v628 = vpop.f32.mrf.mxu0
  %v629 = vadd.f32 0.0, %v628
  %v630 = vpop.f32.mrf.mxu0
  %v631 = vadd.f32 0.0, %v630
  %632 = vmatprep.mubr.f32.mxu0 0.0
  %633 = vmatmul.mubr.f32.gmra.mxu0 %v311
  %v634 = vpop.f32.mrf.mxu0
  %v635 = vadd.f32 0.0, %v634
  %v636 = vpop.f32.mrf.mxu0
  %v637 = vadd.f32 0.0, %v636
  %638 = vmatprep.mubr.f32.mxu0 0.0
  %639 = vmatmul.mubr.f32.gmra.mxu0 %v536
  %v640 = vpop.f32.mrf.mxu0
  %v641 = vadd.f32 0.0, %v640
  %v642 = vpop.f32.mrf.mxu0
  %v643 = vadd.f32 0.0, %v642
  %644 = vdwg.mxu0
  %645 = vmatprep.subr.mxu0 0.0
  %646 = vmatpush1.msra.mxu0 0.0
  %647 = vmatprep.subr.mxu0 0.0
  %648 = vmatpush1.msra.mxu0 0.0
  %649 = vmatprep.subr.mxu0 0.0
  %650 = vmatpush1.msra.mxu0 0.0
  %651 = vmatprep.subr.mxu0 0.0
  %652 = vmatpush1.msra.mxu0 0.0
  %653 = vmatprep.subr.mxu0 0.0
  %654 = vmatpush1.msra.mxu0 0.0
  %655 = vmatprep.subr.mxu0 0.0
  %656 = vmatpush1.msra.mxu0 0.0
  %657 = vmatprep.subr.mxu0 0.0
  %658 = vmatpush1.msra.mxu0 0.0
  %659 = vmatprep.subr.mxu0 0.0
  %660 = vmatpush1.msra.mxu0 0.0
  %661 = vmatprep.subr.mxu0 0.0
  %662 = vmatpush1.msra.mxu0 0.0
  %663 = vmatprep.subr.mxu0 0.0
  %664 = vmatpush1.msra.mxu0 0.0
  %665 = vmatprep.subr.mxu0 0.0
  %666 = vmatpush1.msra.mxu0 0.0
  %667 = vmatprep.subr.mxu0 0.0
  %668 = vmatpush1.msra.mxu0 0.0
  %669 = vmatprep.subr.mxu0 0.0
  %670 = vmatpush1.msra.mxu0 0.0
  %671 = vmatprep.subr.mxu0 0.0
  %672 = vmatpush1.msra.mxu0 0.0
  %673 = vmatprep.subr.mxu0 %v535
  %674 = vmatpush1.msra.mxu0 %v534
  %675 = vmatprep.subr.mxu0 %v531
  %676 = vmatpush1.msra.mxu0 %v530
  %677 = vmatprep.subr.mxu0 0.0
  %678 = vmatpush2.msra.mxu0 0.0
  %679 = vmatprep.subr.mxu0 0.0
  %680 = vmatpush2.msra.mxu0 0.0
  %681 = vmatprep.subr.mxu0 0.0
  %682 = vmatpush2.msra.mxu0 0.0
  %683 = vmatprep.subr.mxu0 0.0
  %684 = vmatpush2.msra.mxu0 0.0
  %685 = vmatprep.subr.mxu0 0.0
  %686 = vmatpush2.msra.mxu0 0.0
  %687 = vmatprep.subr.mxu0 0.0
  %688 = vmatpush2.msra.mxu0 0.0
  %689 = vmatprep.subr.mxu0 0.0
  %690 = vmatpush2.msra.mxu0 0.0
  %691 = vmatprep.subr.mxu0 0.0
  %692 = vmatpush2.msra.mxu0 0.0
  %693 = vmatprep.subr.mxu0 0.0
  %694 = vmatpush2.msra.mxu0 0.0
  %695 = vmatprep.subr.mxu0 0.0
  %696 = vmatpush2.msra.mxu0 0.0
  %697 = vmatprep.subr.mxu0 0.0
  %698 = vmatpush2.msra.mxu0 0.0
  %699 = vmatprep.subr.mxu0 0.0
  %700 = vmatpush2.msra.mxu0 0.0
  %701 = vmatprep.subr.mxu0 0.0
  %702 = vmatpush2.msra.mxu0 0.0
  %703 = vmatprep.subr.mxu0 0.0
  %704 = vmatpush2.msra.mxu0 0.0
  %705 = vmatprep.subr.mxu0 0.0
  %706 = vmatpush2.msra.mxu0 0.0
  %707 = vmatprep.subr.mxu0 0.0
  %708 = vmatpush2.msra.mxu0 0.0
  %709 = vmatprep.mubr.f32.mxu0 0.0
  %710 = vmatmul.mubr.f32.gmra.mxu0 %v301
  %v711 = vpop.f32.mrf.mxu0
  %v712 = vadd.f32 0.0, %v711
  %v713 = vpop.f32.mrf.mxu0
  %v714 = vadd.f32 0.0, %v713
  %715 = vmatprep.mubr.f32.mxu0 0.0
  %716 = vmatmul.mubr.f32.gmra.mxu0 %v303
  %v717 = vpop.f32.mrf.mxu0
  %v718 = vadd.f32 0.0, %v717
  %v719 = vpop.f32.mrf.mxu0
  %v720 = vadd.f32 0.0, %v719
  %721 = vmatprep.mubr.f32.mxu0 0.0
  %722 = vmatmul.mubr.f32.gmra.mxu0 %v305
  %v723 = vpop.f32.mrf.mxu0
  %v724 = vadd.f32 0.0, %v723
  %v725 = vpop.f32.mrf.mxu0
  %v726 = vadd.f32 0.0, %v725
  %727 = vmatprep.mubr.f32.mxu0 0.0
  %728 = vmatmul.mubr.f32.gmra.mxu0 %v307
  %v729 = vpop.f32.mrf.mxu0
  %v730 = vadd.f32 0.0, %v729
  %v731 = vpop.f32.mrf.mxu0
  %v732 = vadd.f32 0.0, %v731
  %733 = vmatprep.mubr.f32.mxu0 0.0
  %734 = vmatmul.mubr.f32.gmra.mxu0 %v309
  %v735 = vpop.f32.mrf.mxu0
  %v736 = vadd.f32 0.0, %v735
  %v737 = vpop.f32.mrf.mxu0
  %v738 = vadd.f32 0.0, %v737
  %739 = vmatprep.mubr.f32.mxu0 0.0
  %740 = vmatmul.mubr.f32.gmra.mxu0 %v311
  %v741 = vpop.f32.mrf.mxu0
  %v742 = vadd.f32 0.0, %v741
  %v743 = vpop.f32.mrf.mxu0
  %v744 = vadd.f32 0.0, %v743
  %745 = vmatprep.mubr.f32.mxu0 0.0
  %746 = vmatmul.mubr.f32.gmra.mxu0 %v536
  %v747 = vpop.f32.mrf.mxu0
  %v748 = vadd.f32 0.0, %v747
  %v749 = vpop.f32.mrf.mxu0
  %v750 = vadd.f32 0.0, %v749
  %751 = vdwg.mxu0
  %v752 = vadd.f32 %v380, %v605
  %v753 = vadd.f32 %v382, %v607
  %v754 = vadd.f32 %v487, %v712
  %v755 = vadd.f32 %v489, %v714
  %v756 = vadd.f32 %v386, %v611
  %v757 = vadd.f32 %v388, %v613
  %v758 = vadd.f32 %v493, %v718
  %v759 = vadd.f32 %v495, %v720
  %v760 = vadd.f32 %v392, %v617
  %v761 = vadd.f32 %v394, %v619
  %v762 = vadd.f32 %v499, %v724
  %v763 = vadd.f32 %v501, %v726
  %v764 = vadd.f32 %v398, %v623
  %v765 = vadd.f32 %v400, %v625
  %v766 = vadd.f32 %v505, %v730
  %v767 = vadd.f32 %v507, %v732
  %v768 = vadd.f32 %v404, %v629
  %v769 = vadd.f32 %v406, %v631
  %v770 = vadd.f32 %v511, %v736
  %v771 = vadd.f32 %v513, %v738
  %v772 = vadd.f32 %v410, %v635
  %v773 = vadd.f32 %v412, %v637
  %v774 = vadd.f32 %v517, %v742
  %v775 = vadd.f32 %v519, %v744
  %v776 = vadd.f32 %v416, %v641
  %v777 = vadd.f32 %v418, %v643
  %v778 = vadd.f32 %v523, %v748
  %v779 = vadd.f32 %v525, %v750
  %s780 = scalar_lea.vmem %s1, 192
  %v781 = vld [vmem:[%s780] sm:$0xff]
  %v782 = vld [vmem:[%s780 + $0x8] sm:$0xff]
  %v783 = vld [vmem:[%s780 + $0x10] sm:$0xff]
  %v784 = vld [vmem:[%s780 + $0x18] sm:$0xff]
  %v785 = vld [vmem:[%s780 + $0x20] sm:$0xff]
  %v786 = vld [vmem:[%s780 + $0x28] sm:$0xff]
  %v787 = vld [vmem:[%s780 + $0x30] sm:$0xff]
  %v788 = vld [vmem:[%s780 + $0x38] sm:$0xff]
  %v790 = vrot.slane %v28, 1
  %v791 = vsel %vm54, %v68, %v790
  %v792 = vsel %vm70, %v791, 0
  %794 = vmatprep.subr.mxu0 0.0
  %795 = vmatpush1.msra.mxu0 0.0
  %796 = vmatprep.subr.mxu0 0.0
  %797 = vmatpush1.msra.mxu0 0.0
  %798 = vmatprep.subr.mxu0 0.0
  %799 = vmatpush1.msra.mxu0 0.0
  %800 = vmatprep.subr.mxu0 0.0
  %801 = vmatpush1.msra.mxu0 0.0
  %802 = vmatprep.subr.mxu0 0.0
  %803 = vmatpush1.msra.mxu0 0.0
  %804 = vmatprep.subr.mxu0 0.0
  %805 = vmatpush1.msra.mxu0 0.0
  %806 = vmatprep.subr.mxu0 0.0
  %807 = vmatpush1.msra.mxu0 0.0
  %808 = vmatprep.subr.mxu0 0.0
  %809 = vmatpush1.msra.mxu0 0.0
  %810 = vmatprep.subr.mxu0 0.0
  %811 = vmatpush1.msra.mxu0 0.0
  %812 = vmatprep.subr.mxu0 0.0
  %813 = vmatpush1.msra.mxu0 0.0
  %814 = vmatprep.subr.mxu0 0.0
  %815 = vmatpush1.msra.mxu0 0.0
  %816 = vmatprep.subr.mxu0 0.0
  %817 = vmatpush1.msra.mxu0 0.0
  %818 = vmatprep.subr.mxu0 0.0
  %819 = vmatpush1.msra.mxu0 0.0
  %820 = vmatprep.subr.mxu0 0.0
  %821 = vmatpush1.msra.mxu0 0.0
  %822 = vmatprep.subr.mxu0 %v786
  %823 = vmatpush1.msra.mxu0 %v785
  %824 = vmatprep.subr.mxu0 %v782
  %825 = vmatpush1.msra.mxu0 %v781
  %826 = vmatprep.subr.mxu0 0.0
  %827 = vmatpush2.msra.mxu0 0.0
  %828 = vmatprep.subr.mxu0 0.0
  %829 = vmatpush2.msra.mxu0 0.0
  %830 = vmatprep.subr.mxu0 0.0
  %831 = vmatpush2.msra.mxu0 0.0
  %832 = vmatprep.subr.mxu0 0.0
  %833 = vmatpush2.msra.mxu0 0.0
  %834 = vmatprep.subr.mxu0 0.0
  %835 = vmatpush2.msra.mxu0 0.0
  %836 = vmatprep.subr.mxu0 0.0
  %837 = vmatpush2.msra.mxu0 0.0
  %838 = vmatprep.subr.mxu0 0.0
  %839 = vmatpush2.msra.mxu0 0.0
  %840 = vmatprep.subr.mxu0 0.0
  %841 = vmatpush2.msra.mxu0 0.0
  %842 = vmatprep.subr.mxu0 0.0
  %843 = vmatpush2.msra.mxu0 0.0
  %844 = vmatprep.subr.mxu0 0.0
  %845 = vmatpush2.msra.mxu0 0.0
  %846 = vmatprep.subr.mxu0 0.0
  %847 = vmatpush2.msra.mxu0 0.0
  %848 = vmatprep.subr.mxu0 0.0
  %849 = vmatpush2.msra.mxu0 0.0
  %850 = vmatprep.subr.mxu0 0.0
  %851 = vmatpush2.msra.mxu0 0.0
  %852 = vmatprep.subr.mxu0 0.0
  %853 = vmatpush2.msra.mxu0 0.0
  %854 = vmatprep.subr.mxu0 0.0
  %855 = vmatpush2.msra.mxu0 0.0
  %856 = vmatprep.subr.mxu0 0.0
  %857 = vmatpush2.msra.mxu0 0.0
  %858 = vmatprep.mubr.f32.mxu0 0.0
  %859 = vmatmul.mubr.f32.gmra.mxu0 %v73
  %v860 = vpop.f32.mrf.mxu0
  %v861 = vadd.f32 0.0, %v860
  %v862 = vpop.f32.mrf.mxu0
  %v863 = vadd.f32 0.0, %v862
  %864 = vmatprep.mubr.f32.mxu0 0.0
  %865 = vmatmul.mubr.f32.gmra.mxu0 %v75
  %v866 = vpop.f32.mrf.mxu0
  %v867 = vadd.f32 0.0, %v866
  %v868 = vpop.f32.mrf.mxu0
  %v869 = vadd.f32 0.0, %v868
  %870 = vmatprep.mubr.f32.mxu0 0.0
  %871 = vmatmul.mubr.f32.gmra.mxu0 %v77
  %v872 = vpop.f32.mrf.mxu0
  %v873 = vadd.f32 0.0, %v872
  %v874 = vpop.f32.mrf.mxu0
  %v875 = vadd.f32 0.0, %v874
  %876 = vmatprep.mubr.f32.mxu0 0.0
  %877 = vmatmul.mubr.f32.gmra.mxu0 %v79
  %v878 = vpop.f32.mrf.mxu0
  %v879 = vadd.f32 0.0, %v878
  %v880 = vpop.f32.mrf.mxu0
  %v881 = vadd.f32 0.0, %v880
  %882 = vmatprep.mubr.f32.mxu0 0.0
  %883 = vmatmul.mubr.f32.gmra.mxu0 %v81
  %v884 = vpop.f32.mrf.mxu0
  %v885 = vadd.f32 0.0, %v884
  %v886 = vpop.f32.mrf.mxu0
  %v887 = vadd.f32 0.0, %v886
  %888 = vmatprep.mubr.f32.mxu0 0.0
  %889 = vmatmul.mubr.f32.gmra.mxu0 %v83
  %v890 = vpop.f32.mrf.mxu0
  %v891 = vadd.f32 0.0, %v890
  %v892 = vpop.f32.mrf.mxu0
  %v893 = vadd.f32 0.0, %v892
  %894 = vmatprep.mubr.f32.mxu0 0.0
  %895 = vmatmul.mubr.f32.gmra.mxu0 %v792
  %v896 = vpop.f32.mrf.mxu0
  %v897 = vadd.f32 0.0, %v896
  %v898 = vpop.f32.mrf.mxu0
  %v899 = vadd.f32 0.0, %v898
  %900 = vdwg.mxu0
  %901 = vmatprep.subr.mxu0 0.0
  %902 = vmatpush1.msra.mxu0 0.0
  %903 = vmatprep.subr.mxu0 0.0
  %904 = vmatpush1.msra.mxu0 0.0
  %905 = vmatprep.subr.mxu0 0.0
  %906 = vmatpush1.msra.mxu0 0.0
  %907 = vmatprep.subr.mxu0 0.0
  %908 = vmatpush1.msra.mxu0 0.0
  %909 = vmatprep.subr.mxu0 0.0
  %910 = vmatpush1.msra.mxu0 0.0
  %911 = vmatprep.subr.mxu0 0.0
  %912 = vmatpush1.msra.mxu0 0.0
  %913 = vmatprep.subr.mxu0 0.0
  %914 = vmatpush1.msra.mxu0 0.0
  %915 = vmatprep.subr.mxu0 0.0
  %916 = vmatpush1.msra.mxu0 0.0
  %917 = vmatprep.subr.mxu0 0.0
  %918 = vmatpush1.msra.mxu0 0.0
  %919 = vmatprep.subr.mxu0 0.0
  %920 = vmatpush1.msra.mxu0 0.0
  %921 = vmatprep.subr.mxu0 0.0
  %922 = vmatpush1.msra.mxu0 0.0
  %923 = vmatprep.subr.mxu0 0.0
  %924 = vmatpush1.msra.mxu0 0.0
  %925 = vmatprep.subr.mxu0 0.0
  %926 = vmatpush1.msra.mxu0 0.0
  %927 = vmatprep.subr.mxu0 0.0
  %928 = vmatpush1.msra.mxu0 0.0
  %929 = vmatprep.subr.mxu0 %v788
  %930 = vmatpush1.msra.mxu0 %v787
  %931 = vmatprep.subr.mxu0 %v784
  %932 = vmatpush1.msra.mxu0 %v783
  %933 = vmatprep.subr.mxu0 0.0
  %934 = vmatpush2.msra.mxu0 0.0
  %935 = vmatprep.subr.mxu0 0.0
  %936 = vmatpush2.msra.mxu0 0.0
  %937 = vmatprep.subr.mxu0 0.0
  %938 = vmatpush2.msra.mxu0 0.0
  %939 = vmatprep.subr.mxu0 0.0
  %940 = vmatpush2.msra.mxu0 0.0
  %941 = vmatprep.subr.mxu0 0.0
  %942 = vmatpush2.msra.mxu0 0.0
  %943 = vmatprep.subr.mxu0 0.0
  %944 = vmatpush2.msra.mxu0 0.0
  %945 = vmatprep.subr.mxu0 0.0
  %946 = vmatpush2.msra.mxu0 0.0
  %947 = vmatprep.subr.mxu0 0.0
  %948 = vmatpush2.msra.mxu0 0.0
  %949 = vmatprep.subr.mxu0 0.0
  %950 = vmatpush2.msra.mxu0 0.0
  %951 = vmatprep.subr.mxu0 0.0
  %952 = vmatpush2.msra.mxu0 0.0
  %953 = vmatprep.subr.mxu0 0.0
  %954 = vmatpush2.msra.mxu0 0.0
  %955 = vmatprep.subr.mxu0 0.0
  %956 = vmatpush2.msra.mxu0 0.0
  %957 = vmatprep.subr.mxu0 0.0
  %958 = vmatpush2.msra.mxu0 0.0
  %959 = vmatprep.subr.mxu0 0.0
  %960 = vmatpush2.msra.mxu0 0.0
  %961 = vmatprep.subr.mxu0 0.0
  %962 = vmatpush2.msra.mxu0 0.0
  %963 = vmatprep.subr.mxu0 0.0
  %964 = vmatpush2.msra.mxu0 0.0
  %965 = vmatprep.mubr.f32.mxu0 0.0
  %966 = vmatmul.mubr.f32.gmra.mxu0 %v73
  %v967 = vpop.f32.mrf.mxu0
  %v968 = vadd.f32 0.0, %v967
  %v969 = vpop.f32.mrf.mxu0
  %v970 = vadd.f32 0.0, %v969
  %971 = vmatprep.mubr.f32.mxu0 0.0
  %972 = vmatmul.mubr.f32.gmra.mxu0 %v75
  %v973 = vpop.f32.mrf.mxu0
  %v974 = vadd.f32 0.0, %v973
  %v975 = vpop.f32.mrf.mxu0
  %v976 = vadd.f32 0.0, %v975
  %977 = vmatprep.mubr.f32.mxu0 0.0
  %978 = vmatmul.mubr.f32.gmra.mxu0 %v77
  %v979 = vpop.f32.mrf.mxu0
  %v980 = vadd.f32 0.0, %v979
  %v981 = vpop.f32.mrf.mxu0
  %v982 = vadd.f32 0.0, %v981
  %983 = vmatprep.mubr.f32.mxu0 0.0
  %984 = vmatmul.mubr.f32.gmra.mxu0 %v79
  %v985 = vpop.f32.mrf.mxu0
  %v986 = vadd.f32 0.0, %v985
  %v987 = vpop.f32.mrf.mxu0
  %v988 = vadd.f32 0.0, %v987
  %989 = vmatprep.mubr.f32.mxu0 0.0
  %990 = vmatmul.mubr.f32.gmra.mxu0 %v81
  %v991 = vpop.f32.mrf.mxu0
  %v992 = vadd.f32 0.0, %v991
  %v993 = vpop.f32.mrf.mxu0
  %v994 = vadd.f32 0.0, %v993
  %995 = vmatprep.mubr.f32.mxu0 0.0
  %996 = vmatmul.mubr.f32.gmra.mxu0 %v83
  %v997 = vpop.f32.mrf.mxu0
  %v998 = vadd.f32 0.0, %v997
  %v999 = vpop.f32.mrf.mxu0
  %v1000 = vadd.f32 0.0, %v999
  %1001 = vmatprep.mubr.f32.mxu0 0.0
  %1002 = vmatmul.mubr.f32.gmra.mxu0 %v792
  %v1003 = vpop.f32.mrf.mxu0
  %v1004 = vadd.f32 0.0, %v1003
  %v1005 = vpop.f32.mrf.mxu0
  %v1006 = vadd.f32 0.0, %v1005
  %1007 = vdwg.mxu0
  %v1008 = vadd.f32 %v752, %v861
  %v1009 = vadd.f32 %v753, %v863
  %v1010 = vadd.f32 %v754, %v968
  %v1011 = vadd.f32 %v755, %v970
  %v1012 = vadd.f32 %v756, %v867
  %v1013 = vadd.f32 %v757, %v869
  %v1014 = vadd.f32 %v758, %v974
  %v1015 = vadd.f32 %v759, %v976
  %v1016 = vadd.f32 %v760, %v873
  %v1017 = vadd.f32 %v761, %v875
  %v1018 = vadd.f32 %v762, %v980
  %v1019 = vadd.f32 %v763, %v982
  %v1020 = vadd.f32 %v764, %v879
  %v1021 = vadd.f32 %v765, %v881
  %v1022 = vadd.f32 %v766, %v986
  %v1023 = vadd.f32 %v767, %v988
  %v1024 = vadd.f32 %v768, %v885
  %v1025 = vadd.f32 %v769, %v887
  %v1026 = vadd.f32 %v770, %v992
  %v1027 = vadd.f32 %v771, %v994
  %v1028 = vadd.f32 %v772, %v891
  %v1029 = vadd.f32 %v773, %v893
  %v1030 = vadd.f32 %v774, %v998
  %v1031 = vadd.f32 %v775, %v1000
  %v1032 = vadd.f32 %v776, %v897
  %v1033 = vadd.f32 %v777, %v899
  %v1034 = vadd.f32 %v778, %v1004
  %v1035 = vadd.f32 %v779, %v1006
  %v1036 = vld [vmem:[%s2] sm:$0xf]
  %v1038 = vlaneseq
  %v1039 = vshrl.u32 %v1038, 7
  %v1040 = vsub.s32 0, %v1039
  %v1041 = vrot.slane %v1036, %v1040
  %v1042 = vlaneseq
  %v1043 = vshrl.u32 %v1042, 7
  %v1044 = vsub.s32 1, %v1043
  %v1045 = vrot.slane %v1036, %v1044
  %v1046 = vlaneseq
  %v1047 = vshrl.u32 %v1046, 7
  %v1048 = vsub.s32 2, %v1047
  %v1049 = vrot.slane %v1036, %v1048
  %v1050 = vlaneseq
  %v1051 = vshrl.u32 %v1050, 7
  %v1052 = vsub.s32 3, %v1051
  %v1053 = vrot.slane %v1036, %v1052
  %v1058 = vadd.f32 %v1008, %v1041
  %v1059 = vadd.f32 %v1009, %v1045
  %v1060 = vadd.f32 %v1010, %v1049
  %v1061 = vadd.f32 %v1011, %v1053
  %v1062 = vadd.f32 %v1012, %v1041
  %v1063 = vadd.f32 %v1013, %v1045
  %v1064 = vadd.f32 %v1014, %v1049
  %v1065 = vadd.f32 %v1015, %v1053
  %v1066 = vadd.f32 %v1016, %v1041
  %v1067 = vadd.f32 %v1017, %v1045
  %v1068 = vadd.f32 %v1018, %v1049
  %v1069 = vadd.f32 %v1019, %v1053
  %v1070 = vadd.f32 %v1020, %v1041
  %v1071 = vadd.f32 %v1021, %v1045
  %v1072 = vadd.f32 %v1022, %v1049
  %v1073 = vadd.f32 %v1023, %v1053
  %v1074 = vadd.f32 %v1024, %v1041
  %v1075 = vadd.f32 %v1025, %v1045
  %v1076 = vadd.f32 %v1026, %v1049
  %v1077 = vadd.f32 %v1027, %v1053
  %v1078 = vadd.f32 %v1028, %v1041
  %v1079 = vadd.f32 %v1029, %v1045
  %v1080 = vadd.f32 %v1030, %v1049
  %v1081 = vadd.f32 %v1031, %v1053
  %v1082 = vadd.f32 %v1032, %v1041
  %v1083 = vadd.f32 %v1033, %v1045
  %v1084 = vadd.f32 %v1034, %v1049
  %v1085 = vadd.f32 %v1035, %v1053
  %v1086 = vxor.u32 %v1058, 2147483648
  %v1087 = vxor.u32 %v1059, 2147483648
  %v1088 = vxor.u32 %v1060, 2147483648
  %v1089 = vxor.u32 %v1061, 2147483648
  %v1090 = vxor.u32 %v1062, 2147483648
  %v1091 = vxor.u32 %v1063, 2147483648
  %v1092 = vxor.u32 %v1064, 2147483648
  %v1093 = vxor.u32 %v1065, 2147483648
  %v1094 = vxor.u32 %v1066, 2147483648
  %v1095 = vxor.u32 %v1067, 2147483648
  %v1096 = vxor.u32 %v1068, 2147483648
  %v1097 = vxor.u32 %v1069, 2147483648
  %v1098 = vxor.u32 %v1070, 2147483648
  %v1099 = vxor.u32 %v1071, 2147483648
  %v1100 = vxor.u32 %v1072, 2147483648
  %v1101 = vxor.u32 %v1073, 2147483648
  %v1102 = vxor.u32 %v1074, 2147483648
  %v1103 = vxor.u32 %v1075, 2147483648
  %v1104 = vxor.u32 %v1076, 2147483648
  %v1105 = vxor.u32 %v1077, 2147483648
  %v1106 = vxor.u32 %v1078, 2147483648
  %v1107 = vxor.u32 %v1079, 2147483648
  %v1108 = vxor.u32 %v1080, 2147483648
  %v1109 = vxor.u32 %v1081, 2147483648
  %v1110 = vxor.u32 %v1082, 2147483648
  %v1111 = vxor.u32 %v1083, 2147483648
  %v1112 = vxor.u32 %v1084, 2147483648
  %v1113 = vxor.u32 %v1085, 2147483648
  %v1114 = vmul.f32 %v1086, 1.442695
  %v1115 = vpow.pop %v1114
  %v1116 = vmul.f32 %v1087, 1.442695
  %v1117 = vpow.pop %v1116
  %v1118 = vmul.f32 %v1088, 1.442695
  %v1119 = vpow.pop %v1118
  %v1120 = vmul.f32 %v1089, 1.442695
  %v1121 = vpow.pop %v1120
  %v1122 = vmul.f32 %v1090, 1.442695
  %v1123 = vpow.pop %v1122
  %v1124 = vmul.f32 %v1091, 1.442695
  %v1125 = vpow.pop %v1124
  %v1126 = vmul.f32 %v1092, 1.442695
  %v1127 = vpow.pop %v1126
  %v1128 = vmul.f32 %v1093, 1.442695
  %v1129 = vpow.pop %v1128
  %v1130 = vmul.f32 %v1094, 1.442695
  %v1131 = vpow.pop %v1130
  %v1132 = vmul.f32 %v1095, 1.442695
  %v1133 = vpow.pop %v1132
  %v1134 = vmul.f32 %v1096, 1.442695
  %v1135 = vpow.pop %v1134
  %v1136 = vmul.f32 %v1097, 1.442695
  %v1137 = vpow.pop %v1136
  %v1138 = vmul.f32 %v1098, 1.442695
  %v1139 = vpow.pop %v1138
  %v1140 = vmul.f32 %v1099, 1.442695
  %v1141 = vpow.pop %v1140
  %v1142 = vmul.f32 %v1100, 1.442695
  %v1143 = vpow.pop %v1142
  %v1144 = vmul.f32 %v1101, 1.442695
  %v1145 = vpow.pop %v1144
  %v1146 = vmul.f32 %v1102, 1.442695
  %v1147 = vpow.pop %v1146
  %v1148 = vmul.f32 %v1103, 1.442695
  %v1149 = vpow.pop %v1148
  %v1150 = vmul.f32 %v1104, 1.442695
  %v1151 = vpow.pop %v1150
  %v1152 = vmul.f32 %v1105, 1.442695
  %v1153 = vpow.pop %v1152
  %v1154 = vmul.f32 %v1106, 1.442695
  %v1155 = vpow.pop %v1154
  %v1156 = vmul.f32 %v1107, 1.442695
  %v1157 = vpow.pop %v1156
  %v1158 = vmul.f32 %v1108, 1.442695
  %v1159 = vpow.pop %v1158
  %v1160 = vmul.f32 %v1109, 1.442695
  %v1161 = vpow.pop %v1160
  %v1162 = vmul.f32 %v1110, 1.442695
  %v1163 = vpow.pop %v1162
  %v1164 = vmul.f32 %v1111, 1.442695
  %v1165 = vpow.pop %v1164
  %v1166 = vmul.f32 %v1112, 1.442695
  %v1167 = vpow.pop %v1166
  %v1168 = vmul.f32 %v1113, 1.442695
  %v1169 = vpow.pop %v1168
  %v1170 = vadd.f32 %v1115, 1.0
  %v1171 = vadd.f32 %v1117, 1.0
  %v1172 = vadd.f32 %v1119, 1.0
  %v1173 = vadd.f32 %v1121, 1.0
  %v1174 = vadd.f32 %v1123, 1.0
  %v1175 = vadd.f32 %v1125, 1.0
  %v1176 = vadd.f32 %v1127, 1.0
  %v1177 = vadd.f32 %v1129, 1.0
  %v1178 = vadd.f32 %v1131, 1.0
  %v1179 = vadd.f32 %v1133, 1.0
  %v1180 = vadd.f32 %v1135, 1.0
  %v1181 = vadd.f32 %v1137, 1.0
  %v1182 = vadd.f32 %v1139, 1.0
  %v1183 = vadd.f32 %v1141, 1.0
  %v1184 = vadd.f32 %v1143, 1.0
  %v1185 = vadd.f32 %v1145, 1.0
  %v1186 = vadd.f32 %v1147, 1.0
  %v1187 = vadd.f32 %v1149, 1.0
  %v1188 = vadd.f32 %v1151, 1.0
  %v1189 = vadd.f32 %v1153, 1.0
  %v1190 = vadd.f32 %v1155, 1.0
  %v1191 = vadd.f32 %v1157, 1.0
  %v1192 = vadd.f32 %v1159, 1.0
  %v1193 = vadd.f32 %v1161, 1.0
  %v1194 = vadd.f32 %v1163, 1.0
  %v1195 = vadd.f32 %v1165, 1.0
  %v1196 = vadd.f32 %v1167, 1.0
  %v1197 = vadd.f32 %v1169, 1.0
  %v1198 = vrcp.pop %v1170
  %v1199 = vmul.f32 1.0, %v1198
  %v1200 = vrcp.pop %v1171
  %v1201 = vmul.f32 1.0, %v1200
  %v1202 = vrcp.pop %v1172
  %v1203 = vmul.f32 1.0, %v1202
  %v1204 = vrcp.pop %v1173
  %v1205 = vmul.f32 1.0, %v1204
  %v1206 = vrcp.pop %v1174
  %v1207 = vmul.f32 1.0, %v1206
  %v1208 = vrcp.pop %v1175
  %v1209 = vmul.f32 1.0, %v1208
  %v1210 = vrcp.pop %v1176
  %v1211 = vmul.f32 1.0, %v1210
  %v1212 = vrcp.pop %v1177
  %v1213 = vmul.f32 1.0, %v1212
  %v1214 = vrcp.pop %v1178
  %v1215 = vmul.f32 1.0, %v1214
  %v1216 = vrcp.pop %v1179
  %v1217 = vmul.f32 1.0, %v1216
  %v1218 = vrcp.pop %v1180
  %v1219 = vmul.f32 1.0, %v1218
  %v1220 = vrcp.pop %v1181
  %v1221 = vmul.f32 1.0, %v1220
  %v1222 = vrcp.pop %v1182
  %v1223 = vmul.f32 1.0, %v1222
  %v1224 = vrcp.pop %v1183
  %v1225 = vmul.f32 1.0, %v1224
  %v1226 = vrcp.pop %v1184
  %v1227 = vmul.f32 1.0, %v1226
  %v1228 = vrcp.pop %v1185
  %v1229 = vmul.f32 1.0, %v1228
  %v1230 = vrcp.pop %v1186
  %v1231 = vmul.f32 1.0, %v1230
  %v1232 = vrcp.pop %v1187
  %v1233 = vmul.f32 1.0, %v1232
  %v1234 = vrcp.pop %v1188
  %v1235 = vmul.f32 1.0, %v1234
  %v1236 = vrcp.pop %v1189
  %v1237 = vmul.f32 1.0, %v1236
  %v1238 = vrcp.pop %v1190
  %v1239 = vmul.f32 1.0, %v1238
  %v1240 = vrcp.pop %v1191
  %v1241 = vmul.f32 1.0, %v1240
  %v1242 = vrcp.pop %v1192
  %v1243 = vmul.f32 1.0, %v1242
  %v1244 = vrcp.pop %v1193
  %v1245 = vmul.f32 1.0, %v1244
  %v1246 = vrcp.pop %v1194
  %v1247 = vmul.f32 1.0, %v1246
  %v1248 = vrcp.pop %v1195
  %v1249 = vmul.f32 1.0, %v1248
  %v1250 = vrcp.pop %v1196
  %v1251 = vmul.f32 1.0, %v1250
  %v1252 = vrcp.pop %v1197
  %v1253 = vmul.f32 1.0, %v1252
  %v1254 = vmax.f32 %v1199, %v1201
  %v1255 = vmax.f32 %v1207, %v1209
  %v1256 = vmax.f32 %v1215, %v1217
  %v1257 = vmax.f32 %v1223, %v1225
  %v1258 = vmax.f32 %v1231, %v1233
  %v1259 = vmax.f32 %v1239, %v1241
  %v1260 = vmax.f32 %v1247, %v1249
  %v1261 = vmax.f32 %v1203, %v1205
  %v1262 = vmax.f32 %v1211, %v1213
  %v1263 = vmax.f32 %v1219, %v1221
  %v1264 = vmax.f32 %v1227, %v1229
  %v1265 = vmax.f32 %v1235, %v1237
  %v1266 = vmax.f32 %v1243, %v1245
  %v1267 = vmax.f32 %v1251, %v1253
  %v1268 = vmax.f32 %v1254, %v1261
  %v1269 = vmax.f32 %v1255, %v1262
  %v1270 = vmax.f32 %v1256, %v1263
  %v1271 = vmax.f32 %v1257, %v1264
  %v1272 = vmax.f32 %v1258, %v1265
  %v1273 = vmax.f32 %v1259, %v1266
  %v1274 = vmax.f32 %v1260, %v1267
  %v1275 = vld [vmem:[%s3] sm:$0xff]
  %v1276 = vld [vmem:[%s3 + $0x8] sm:$0xff]
  %v1277 = vld [vmem:[%s3 + $0x10] sm:$0xff]
  %v1278 = vld [vmem:[%s3 + $0x18] sm:$0xff]
  %v1279 = vld [vmem:[%s3 + $0x20] sm:$0xff]
  %v1280 = vld [vmem:[%s3 + $0x28] sm:$0xff]
  %v1281 = vld [vmem:[%s3 + $0x30] sm:$0xff]
  %v1282 = vld [vmem:[%s3 + $0x38] sm:$0xff]
  %v1283 = vld [vmem:[%s3 + $0x40] sm:$0xff]
  %v1284 = vld [vmem:[%s3 + $0x48] sm:$0xff]
  %v1285 = vld [vmem:[%s3 + $0x50] sm:$0xff]
  %v1286 = vld [vmem:[%s3 + $0x58] sm:$0xff]
  %v1287 = vld [vmem:[%s3 + $0x60] sm:$0xff]
  %v1288 = vld [vmem:[%s3 + $0x68] sm:$0xff]
  %v1289 = vld [vmem:[%s3 + $0x70] sm:$0xff]
  %v1290 = vld [vmem:[%s3 + $0x78] sm:$0xff]
  %v1291 = vld [vmem:[%s3 + $0x80] sm:$0xff]
  %v1292 = vld [vmem:[%s3 + $0x88] sm:$0xff]
  %v1293 = vld [vmem:[%s3 + $0x90] sm:$0xff]
  %v1294 = vld [vmem:[%s3 + $0x98] sm:$0xff]
  %v1295 = vld [vmem:[%s3 + $0xa0] sm:$0xff]
  %v1296 = vld [vmem:[%s3 + $0xa8] sm:$0xff]
  %v1297 = vld [vmem:[%s3 + $0xb0] sm:$0xff]
  %v1298 = vld [vmem:[%s3 + $0xb8] sm:$0xff]
  %v1299 = vld [vmem:[%s3 + $0xc0] sm:$0xff]
  %v1300 = vld [vmem:[%s3 + $0xc8] sm:$0xff]
  %v1301 = vld [vmem:[%s3 + $0xd0] sm:$0xff]
  %v1302 = vld [vmem:[%s3 + $0xd8] sm:$0xff]
  %v1303 = vld [vmem:[%s3 + $0xe0] sm:$0xff]
  %v1304 = vld [vmem:[%s3 + $0xe8] sm:$0xff]
  %v1305 = vld [vmem:[%s3 + $0xf0] sm:$0xff]
  %v1306 = vld [vmem:[%s3 + $0xf8] sm:$0xff]
  %s1307 = scalar_lea.vmem %s3, 256
  %v1308 = vld [vmem:[%s1307] sm:$0xff]
  %v1309 = vld [vmem:[%s1307 + $0x8] sm:$0xff]
  %v1310 = vld [vmem:[%s1307 + $0x10] sm:$0xff]
  %v1311 = vld [vmem:[%s1307 + $0x18] sm:$0xff]
  %v1312 = vld [vmem:[%s1307 + $0x20] sm:$0xff]
  %v1313 = vld [vmem:[%s1307 + $0x28] sm:$0xff]
  %v1314 = vld [vmem:[%s1307 + $0x30] sm:$0xff]
  %v1315 = vld [vmem:[%s1307 + $0x38] sm:$0xff]
  %v1316 = vld [vmem:[%s1307 + $0x40] sm:$0xff]
  %v1317 = vld [vmem:[%s1307 + $0x48] sm:$0xff]
  %v1318 = vld [vmem:[%s1307 + $0x50] sm:$0xff]
  %v1319 = vld [vmem:[%s1307 + $0x58] sm:$0xff]
  %v1320 = vld [vmem:[%s1307 + $0x60] sm:$0xff]
  %v1321 = vld [vmem:[%s1307 + $0x68] sm:$0xff]
  %v1322 = vld [vmem:[%s1307 + $0x70] sm:$0xff]
  %v1323 = vld [vmem:[%s1307 + $0x78] sm:$0xff]
  %v1324 = vld [vmem:[%s1307 + $0x80] sm:$0xff]
  %v1325 = vld [vmem:[%s1307 + $0x88] sm:$0xff]
  %v1326 = vld [vmem:[%s1307 + $0x90] sm:$0xff]
  %v1327 = vld [vmem:[%s1307 + $0x98] sm:$0xff]
  %v1328 = vld [vmem:[%s1307 + $0xa0] sm:$0xff]
  %v1329 = vld [vmem:[%s1307 + $0xa8] sm:$0xff]
  %v1330 = vld [vmem:[%s1307 + $0xb0] sm:$0xff]
  %v1331 = vld [vmem:[%s1307 + $0xb8] sm:$0xff]
  %v1332 = vld [vmem:[%s1307 + $0xc0] sm:$0xff]
  %v1333 = vld [vmem:[%s1307 + $0xc8] sm:$0xff]
  %v1334 = vld [vmem:[%s1307 + $0xd0] sm:$0xff]
  %v1335 = vld [vmem:[%s1307 + $0xd8] sm:$0xff]
  %v1336 = vld [vmem:[%s1307 + $0xe0] sm:$0xff]
  %v1337 = vld [vmem:[%s1307 + $0xe8] sm:$0xff]
  %v1338 = vld [vmem:[%s1307 + $0xf0] sm:$0xff]
  %v1339 = vld [vmem:[%s1307 + $0xf8] sm:$0xff]
  %v1346 = vrot.slane %v1268, 1
  %v1347 = vrot.slane %v1269, 1
  %v1348 = vsel %vm54, %v1346, %v1347
  %v1349 = vrot.slane %v1270, 1
  %v1350 = vsel %vm54, %v1347, %v1349
  %v1351 = vrot.slane %v1271, 1
  %v1352 = vsel %vm54, %v1349, %v1351
  %v1353 = vrot.slane %v1272, 1
  %v1354 = vsel %vm54, %v1351, %v1353
  %v1355 = vrot.slane %v1273, 1
  %v1356 = vsel %vm54, %v1353, %v1355
  %1362 = vmatprep.subr.mxu0 %v1339
  %1363 = vmatpush1.msra.mxu0 %v1338
  %1364 = vmatprep.subr.mxu0 %v1337
  %1365 = vmatpush1.msra.mxu0 %v1336
  %1366 = vmatprep.subr.mxu0 %v1335
  %1367 = vmatpush1.msra.mxu0 %v1334
  %1368 = vmatprep.subr.mxu0 %v1333
  %1369 = vmatpush1.msra.mxu0 %v1332
  %1370 = vmatprep.subr.mxu0 %v1331
  %1371 = vmatpush1.msra.mxu0 %v1330
  %1372 = vmatprep.subr.mxu0 %v1329
  %1373 = vmatpush1.msra.mxu0 %v1328
  %1374 = vmatprep.subr.mxu0 %v1327
  %1375 = vmatpush1.msra.mxu0 %v1326
  %1376 = vmatprep.subr.mxu0 %v1325
  %1377 = vmatpush1.msra.mxu0 %v1324
  %1378 = vmatprep.subr.mxu0 %v1323
  %1379 = vmatpush1.msra.mxu0 %v1322
  %1380 = vmatprep.subr.mxu0 %v1321
  %1381 = vmatpush1.msra.mxu0 %v1320
  %1382 = vmatprep.subr.mxu0 %v1319
  %1383 = vmatpush1.msra.mxu0 %v1318
  %1384 = vmatprep.subr.mxu0 %v1317
  %1385 = vmatpush1.msra.mxu0 %v1316
  %1386 = vmatprep.subr.mxu0 %v1315
  %1387 = vmatpush1.msra.mxu0 %v1314
  %1388 = vmatprep.subr.mxu0 %v1313
  %1389 = vmatpush1.msra.mxu0 %v1312
  %1390 = vmatprep.subr.mxu0 %v1311
  %1391 = vmatpush1.msra.mxu0 %v1310
  %1392 = vmatprep.subr.mxu0 %v1309
  %1393 = vmatpush1.msra.mxu0 %v1308
  %1394 = vmatprep.subr.mxu0 0.0
  %1395 = vmatpush2.msra.mxu0 0.0
  %1396 = vmatprep.subr.mxu0 0.0
  %1397 = vmatpush2.msra.mxu0 0.0
  %1398 = vmatprep.subr.mxu0 0.0
  %1399 = vmatpush2.msra.mxu0 0.0
  %1400 = vmatprep.subr.mxu0 0.0
  %1401 = vmatpush2.msra.mxu0 0.0
  %1402 = vmatprep.subr.mxu0 0.0
  %1403 = vmatpush2.msra.mxu0 0.0
  %1404 = vmatprep.subr.mxu0 0.0
  %1405 = vmatpush2.msra.mxu0 0.0
  %1406 = vmatprep.subr.mxu0 0.0
  %1407 = vmatpush2.msra.mxu0 0.0
  %1408 = vmatprep.subr.mxu0 0.0
  %1409 = vmatpush2.msra.mxu0 0.0
  %1410 = vmatprep.subr.mxu0 0.0
  %1411 = vmatpush2.msra.mxu0 0.0
  %1412 = vmatprep.subr.mxu0 0.0
  %1413 = vmatpush2.msra.mxu0 0.0
  %1414 = vmatprep.subr.mxu0 0.0
  %1415 = vmatpush2.msra.mxu0 0.0
  %1416 = vmatprep.subr.mxu0 0.0
  %1417 = vmatpush2.msra.mxu0 0.0
  %1418 = vmatprep.subr.mxu0 0.0
  %1419 = vmatpush2.msra.mxu0 0.0
  %1420 = vmatprep.subr.mxu0 0.0
  %1421 = vmatpush2.msra.mxu0 0.0
  %1422 = vmatprep.subr.mxu0 0.0
  %1423 = vmatpush2.msra.mxu0 0.0
  %1424 = vmatprep.subr.mxu0 0.0
  %1425 = vmatpush2.msra.mxu0 0.0
  %1426 = vmatprep.mubr.f32.mxu0 0.0
  %1427 = vmatmul.mubr.f32.gmra.mxu0 %v1348
  %v1428 = vpop.f32.mrf.mxu0
  %v1429 = vadd.f32 0.0, %v1428
  %v1430 = vpop.f32.mrf.mxu0
  %v1431 = vadd.f32 0.0, %v1430
  %1432 = vmatprep.mubr.f32.mxu0 0.0
  %1433 = vmatmul.mubr.f32.gmra.mxu0 %v1350
  %v1434 = vpop.f32.mrf.mxu0
  %v1435 = vadd.f32 0.0, %v1434
  %v1436 = vpop.f32.mrf.mxu0
  %v1437 = vadd.f32 0.0, %v1436
  %1438 = vmatprep.mubr.f32.mxu0 0.0
  %1439 = vmatmul.mubr.f32.gmra.mxu0 %v1352
  %v1440 = vpop.f32.mrf.mxu0
  %v1441 = vadd.f32 0.0, %v1440
  %v1442 = vpop.f32.mrf.mxu0
  %v1443 = vadd.f32 0.0, %v1442
  %1444 = vmatprep.mubr.f32.mxu0 0.0
  %1445 = vmatmul.mubr.f32.gmra.mxu0 %v1354
  %v1446 = vpop.f32.mrf.mxu0
  %v1447 = vadd.f32 0.0, %v1446
  %v1448 = vpop.f32.mrf.mxu0
  %v1449 = vadd.f32 0.0, %v1448
  %1450 = vmatprep.mubr.f32.mxu0 0.0
  %1451 = vmatmul.mubr.f32.gmra.mxu0 %v1356
  %v1452 = vpop.f32.mrf.mxu0
  %v1453 = vadd.f32 0.0, %v1452
  %v1454 = vpop.f32.mrf.mxu0
  %v1455 = vadd.f32 0.0, %v1454
  %1456 = vdwg.mxu0
  %1457 = vmatprep.subr.mxu0 %v1306
  %1458 = vmatpush1.msra.mxu0 %v1305
  %1459 = vmatprep.subr.mxu0 %v1304
  %1460 = vmatpush1.msra.mxu0 %v1303
  %1461 = vmatprep.subr.mxu0 %v1302
  %1462 = vmatpush1.msra.mxu0 %v1301
  %1463 = vmatprep.subr.mxu0 %v1300
  %1464 = vmatpush1.msra.mxu0 %v1299
  %1465 = vmatprep.subr.mxu0 %v1298
  %1466 = vmatpush1.msra.mxu0 %v1297
  %1467 = vmatprep.subr.mxu0 %v1296
  %1468 = vmatpush1.msra.mxu0 %v1295
  %1469 = vmatprep.subr.mxu0 %v1294
  %1470 = vmatpush1.msra.mxu0 %v1293
  %1471 = vmatprep.subr.mxu0 %v1292
  %1472 = vmatpush1.msra.mxu0 %v1291
  %1473 = vmatprep.subr.mxu0 %v1290
  %1474 = vmatpush1.msra.mxu0 %v1289
  %1475 = vmatprep.subr.mxu0 %v1288
  %1476 = vmatpush1.msra.mxu0 %v1287
  %1477 = vmatprep.subr.mxu0 %v1286
  %1478 = vmatpush1.msra.mxu0 %v1285
  %1479 = vmatprep.subr.mxu0 %v1284
  %1480 = vmatpush1.msra.mxu0 %v1283
  %1481 = vmatprep.subr.mxu0 %v1282
  %1482 = vmatpush1.msra.mxu0 %v1281
  %1483 = vmatprep.subr.mxu0 %v1280
  %1484 = vmatpush1.msra.mxu0 %v1279
  %1485 = vmatprep.subr.mxu0 %v1278
  %1486 = vmatpush1.msra.mxu0 %v1277
  %1487 = vmatprep.subr.mxu0 %v1276
  %1488 = vmatpush1.msra.mxu0 %v1275
  %1489 = vmatprep.subr.mxu0 0.0
  %1490 = vmatpush2.msra.mxu0 0.0
  %1491 = vmatprep.subr.mxu0 0.0
  %1492 = vmatpush2.msra.mxu0 0.0
  %1493 = vmatprep.subr.mxu0 0.0
  %1494 = vmatpush2.msra.mxu0 0.0
  %1495 = vmatprep.subr.mxu0 0.0
  %1496 = vmatpush2.msra.mxu0 0.0
  %1497 = vmatprep.subr.mxu0 0.0
  %1498 = vmatpush2.msra.mxu0 0.0
  %1499 = vmatprep.subr.mxu0 0.0
  %1500 = vmatpush2.msra.mxu0 0.0
  %1501 = vmatprep.subr.mxu0 0.0
  %1502 = vmatpush2.msra.mxu0 0.0
  %1503 = vmatprep.subr.mxu0 0.0
  %1504 = vmatpush2.msra.mxu0 0.0
  %1505 = vmatprep.subr.mxu0 0.0
  %1506 = vmatpush2.msra.mxu0 0.0
  %1507 = vmatprep.subr.mxu0 0.0
  %1508 = vmatpush2.msra.mxu0 0.0
  %1509 = vmatprep.subr.mxu0 0.0
  %1510 = vmatpush2.msra.mxu0 0.0
  %1511 = vmatprep.subr.mxu0 0.0
  %1512 = vmatpush2.msra.mxu0 0.0
  %1513 = vmatprep.subr.mxu0 0.0
  %1514 = vmatpush2.msra.mxu0 0.0
  %1515 = vmatprep.subr.mxu0 0.0
  %1516 = vmatpush2.msra.mxu0 0.0
  %1517 = vmatprep.subr.mxu0 0.0
  %1518 = vmatpush2.msra.mxu0 0.0
  %1519 = vmatprep.subr.mxu0 0.0
  %1520 = vmatpush2.msra.mxu0 0.0
  %1521 = vmatprep.mubr.f32.mxu0 0.0
  %1522 = vmatmul.mubr.f32.gmra.mxu0 %v1268
  %v1523 = vpop.f32.mrf.mxu0
  %v1524 = vadd.f32 %v1429, %v1523
  %v1525 = vpop.f32.mrf.mxu0
  %v1526 = vadd.f32 %v1431, %v1525
  %1527 = vmatprep.mubr.f32.mxu0 0.0
  %1528 = vmatmul.mubr.f32.gmra.mxu0 %v1269
  %v1529 = vpop.f32.mrf.mxu0
  %v1530 = vadd.f32 %v1435, %v1529
  %v1531 = vpop.f32.mrf.mxu0
  %v1532 = vadd.f32 %v1437, %v1531
  %1533 = vmatprep.mubr.f32.mxu0 0.0
  %1534 = vmatmul.mubr.f32.gmra.mxu0 %v1270
  %v1535 = vpop.f32.mrf.mxu0
  %v1536 = vadd.f32 %v1441, %v1535
  %v1537 = vpop.f32.mrf.mxu0
  %v1538 = vadd.f32 %v1443, %v1537
  %1539 = vmatprep.mubr.f32.mxu0 0.0
  %1540 = vmatmul.mubr.f32.gmra.mxu0 %v1271
  %v1541 = vpop.f32.mrf.mxu0
  %v1542 = vadd.f32 %v1447, %v1541
  %v1543 = vpop.f32.mrf.mxu0
  %v1544 = vadd.f32 %v1449, %v1543
  %1545 = vmatprep.mubr.f32.mxu0 0.0
  %1546 = vmatmul.mubr.f32.gmra.mxu0 %v1272
  %v1547 = vpop.f32.mrf.mxu0
  %v1548 = vadd.f32 %v1453, %v1547
  %v1549 = vpop.f32.mrf.mxu0
  %v1550 = vadd.f32 %v1455, %v1549
  %1551 = vdwg.mxu0
  %s1552 = scalar_lea.vmem %s3, 512
  %v1553 = vld [vmem:[%s1552] sm:$0xff]
  %v1554 = vld [vmem:[%s1552 + $0x8] sm:$0xff]
  %v1555 = vld [vmem:[%s1552 + $0x10] sm:$0xff]
  %v1556 = vld [vmem:[%s1552 + $0x18] sm:$0xff]
  %v1557 = vld [vmem:[%s1552 + $0x20] sm:$0xff]
  %v1558 = vld [vmem:[%s1552 + $0x28] sm:$0xff]
  %v1559 = vld [vmem:[%s1552 + $0x30] sm:$0xff]
  %v1560 = vld [vmem:[%s1552 + $0x38] sm:$0xff]
  %v1561 = vld [vmem:[%s1552 + $0x40] sm:$0xff]
  %v1562 = vld [vmem:[%s1552 + $0x48] sm:$0xff]
  %v1563 = vld [vmem:[%s1552 + $0x50] sm:$0xff]
  %v1564 = vld [vmem:[%s1552 + $0x58] sm:$0xff]
  %v1565 = vld [vmem:[%s1552 + $0x60] sm:$0xff]
  %v1566 = vld [vmem:[%s1552 + $0x68] sm:$0xff]
  %v1567 = vld [vmem:[%s1552 + $0x70] sm:$0xff]
  %v1568 = vld [vmem:[%s1552 + $0x78] sm:$0xff]
  %v1569 = vld [vmem:[%s1552 + $0x80] sm:$0xff]
  %v1570 = vld [vmem:[%s1552 + $0x88] sm:$0xff]
  %v1571 = vld [vmem:[%s1552 + $0x90] sm:$0xff]
  %v1572 = vld [vmem:[%s1552 + $0x98] sm:$0xff]
  %v1573 = vld [vmem:[%s1552 + $0xa0] sm:$0xff]
  %v1574 = vld [vmem:[%s1552 + $0xa8] sm:$0xff]
  %v1575 = vld [vmem:[%s1552 + $0xb0] sm:$0xff]
  %v1576 = vld [vmem:[%s1552 + $0xb8] sm:$0xff]
  %v1577 = vld [vmem:[%s1552 + $0xc0] sm:$0xff]
  %v1578 = vld [vmem:[%s1552 + $0xc8] sm:$0xff]
  %v1579 = vld [vmem:[%s1552 + $0xd0] sm:$0xff]
  %v1580 = vld [vmem:[%s1552 + $0xd8] sm:$0xff]
  %v1581 = vld [vmem:[%s1552 + $0xe0] sm:$0xff]
  %v1582 = vld [vmem:[%s1552 + $0xe8] sm:$0xff]
  %v1583 = vld [vmem:[%s1552 + $0xf0] sm:$0xff]
  %v1584 = vld [vmem:[%s1552 + $0xf8] sm:$0xff]
  %1585 = vmatprep.subr.mxu0 %v1584
  %1586 = vmatpush1.msra.mxu0 %v1583
  %1587 = vmatprep.subr.mxu0 %v1582
  %1588 = vmatpush1.msra.mxu0 %v1581
  %1589 = vmatprep.subr.mxu0 %v1580
  %1590 = vmatpush1.msra.mxu0 %v1579
  %1591 = vmatprep.subr.mxu0 %v1578
  %1592 = vmatpush1.msra.mxu0 %v1577
  %1593 = vmatprep.subr.mxu0 %v1576
  %1594 = vmatpush1.msra.mxu0 %v1575
  %1595 = vmatprep.subr.mxu0 %v1574
  %1596 = vmatpush1.msra.mxu0 %v1573
  %1597 = vmatprep.subr.mxu0 %v1572
  %1598 = vmatpush1.msra.mxu0 %v1571
  %1599 = vmatprep.subr.mxu0 %v1570
  %1600 = vmatpush1.msra.mxu0 %v1569
  %1601 = vmatprep.subr.mxu0 %v1568
  %1602 = vmatpush1.msra.mxu0 %v1567
  %1603 = vmatprep.subr.mxu0 %v1566
  %1604 = vmatpush1.msra.mxu0 %v1565
  %1605 = vmatprep.subr.mxu0 %v1564
  %1606 = vmatpush1.msra.mxu0 %v1563
  %1607 = vmatprep.subr.mxu0 %v1562
  %1608 = vmatpush1.msra.mxu0 %v1561
  %1609 = vmatprep.subr.mxu0 %v1560
  %1610 = vmatpush1.msra.mxu0 %v1559
  %1611 = vmatprep.subr.mxu0 %v1558
  %1612 = vmatpush1.msra.mxu0 %v1557
  %1613 = vmatprep.subr.mxu0 %v1556
  %1614 = vmatpush1.msra.mxu0 %v1555
  %1615 = vmatprep.subr.mxu0 %v1554
  %1616 = vmatpush1.msra.mxu0 %v1553
  %1617 = vmatprep.subr.mxu0 0.0
  %1618 = vmatpush2.msra.mxu0 0.0
  %1619 = vmatprep.subr.mxu0 0.0
  %1620 = vmatpush2.msra.mxu0 0.0
  %1621 = vmatprep.subr.mxu0 0.0
  %1622 = vmatpush2.msra.mxu0 0.0
  %1623 = vmatprep.subr.mxu0 0.0
  %1624 = vmatpush2.msra.mxu0 0.0
  %1625 = vmatprep.subr.mxu0 0.0
  %1626 = vmatpush2.msra.mxu0 0.0
  %1627 = vmatprep.subr.mxu0 0.0
  %1628 = vmatpush2.msra.mxu0 0.0
  %1629 = vmatprep.subr.mxu0 0.0
  %1630 = vmatpush2.msra.mxu0 0.0
  %1631 = vmatprep.subr.mxu0 0.0
  %1632 = vmatpush2.msra.mxu0 0.0
  %1633 = vmatprep.subr.mxu0 0.0
  %1634 = vmatpush2.msra.mxu0 0.0
  %1635 = vmatprep.subr.mxu0 0.0
  %1636 = vmatpush2.msra.mxu0 0.0
  %1637 = vmatprep.subr.mxu0 0.0
  %1638 = vmatpush2.msra.mxu0 0.0
  %1639 = vmatprep.subr.mxu0 0.0
  %1640 = vmatpush2.msra.mxu0 0.0
  %1641 = vmatprep.subr.mxu0 0.0
  %1642 = vmatpush2.msra.mxu0 0.0
  %1643 = vmatprep.subr.mxu0 0.0
  %1644 = vmatpush2.msra.mxu0 0.0
  %1645 = vmatprep.subr.mxu0 0.0
  %1646 = vmatpush2.msra.mxu0 0.0
  %1647 = vmatprep.subr.mxu0 0.0
  %1648 = vmatpush2.msra.mxu0 0.0
  %1649 = vmatprep.mubr.f32.mxu0 0.0
  %1650 = vmatmul.mubr.f32.gmra.mxu0 %v1269
  %v1651 = vpop.f32.mrf.mxu0
  %v1652 = vadd.f32 0.0, %v1651
  %v1653 = vpop.f32.mrf.mxu0
  %v1654 = vadd.f32 0.0, %v1653
  %1655 = vmatprep.mubr.f32.mxu0 0.0
  %1656 = vmatmul.mubr.f32.gmra.mxu0 %v1270
  %v1657 = vpop.f32.mrf.mxu0
  %v1658 = vadd.f32 0.0, %v1657
  %v1659 = vpop.f32.mrf.mxu0
  %v1660 = vadd.f32 0.0, %v1659
  %1661 = vmatprep.mubr.f32.mxu0 0.0
  %1662 = vmatmul.mubr.f32.gmra.mxu0 %v1271
  %v1663 = vpop.f32.mrf.mxu0
  %v1664 = vadd.f32 0.0, %v1663
  %v1665 = vpop.f32.mrf.mxu0
  %v1666 = vadd.f32 0.0, %v1665
  %1667 = vmatprep.mubr.f32.mxu0 0.0
  %1668 = vmatmul.mubr.f32.gmra.mxu0 %v1272
  %v1669 = vpop.f32.mrf.mxu0
  %v1670 = vadd.f32 0.0, %v1669
  %v1671 = vpop.f32.mrf.mxu0
  %v1672 = vadd.f32 0.0, %v1671
  %1673 = vmatprep.mubr.f32.mxu0 0.0
  %1674 = vmatmul.mubr.f32.gmra.mxu0 %v1273
  %v1675 = vpop.f32.mrf.mxu0
  %v1676 = vadd.f32 0.0, %v1675
  %v1677 = vpop.f32.mrf.mxu0
  %v1678 = vadd.f32 0.0, %v1677
  %1679 = vdwg.mxu0
  %v1680 = vadd.f32 %v1524, %v1652
  %v1681 = vadd.f32 %v1526, %v1654
  %v1682 = vadd.f32 %v1530, %v1658
  %v1683 = vadd.f32 %v1532, %v1660
  %v1684 = vadd.f32 %v1536, %v1664
  %v1685 = vadd.f32 %v1538, %v1666
  %v1686 = vadd.f32 %v1542, %v1670
  %v1687 = vadd.f32 %v1544, %v1672
  %v1688 = vadd.f32 %v1548, %v1676
  %v1689 = vadd.f32 %v1550, %v1678
  %s1690 = scalar_lea.vmem %s3, 768
  %v1691 = vld [vmem:[%s1690] sm:$0xff]
  %v1692 = vld [vmem:[%s1690 + $0x8] sm:$0xff]
  %v1693 = vld [vmem:[%s1690 + $0x10] sm:$0xff]
  %v1694 = vld [vmem:[%s1690 + $0x18] sm:$0xff]
  %v1695 = vld [vmem:[%s1690 + $0x20] sm:$0xff]
  %v1696 = vld [vmem:[%s1690 + $0x28] sm:$0xff]
  %v1697 = vld [vmem:[%s1690 + $0x30] sm:$0xff]
  %v1698 = vld [vmem:[%s1690 + $0x38] sm:$0xff]
  %v1699 = vld [vmem:[%s1690 + $0x40] sm:$0xff]
  %v1700 = vld [vmem:[%s1690 + $0x48] sm:$0xff]
  %v1701 = vld [vmem:[%s1690 + $0x50] sm:$0xff]
  %v1702 = vld [vmem:[%s1690 + $0x58] sm:$0xff]
  %v1703 = vld [vmem:[%s1690 + $0x60] sm:$0xff]
  %v1704 = vld [vmem:[%s1690 + $0x68] sm:$0xff]
  %v1705 = vld [vmem:[%s1690 + $0x70] sm:$0xff]
  %v1706 = vld [vmem:[%s1690 + $0x78] sm:$0xff]
  %v1707 = vld [vmem:[%s1690 + $0x80] sm:$0xff]
  %v1708 = vld [vmem:[%s1690 + $0x88] sm:$0xff]
  %v1709 = vld [vmem:[%s1690 + $0x90] sm:$0xff]
  %v1710 = vld [vmem:[%s1690 + $0x98] sm:$0xff]
  %v1711 = vld [vmem:[%s1690 + $0xa0] sm:$0xff]
  %v1712 = vld [vmem:[%s1690 + $0xa8] sm:$0xff]
  %v1713 = vld [vmem:[%s1690 + $0xb0] sm:$0xff]
  %v1714 = vld [vmem:[%s1690 + $0xb8] sm:$0xff]
  %v1715 = vld [vmem:[%s1690 + $0xc0] sm:$0xff]
  %v1716 = vld [vmem:[%s1690 + $0xc8] sm:$0xff]
  %v1717 = vld [vmem:[%s1690 + $0xd0] sm:$0xff]
  %v1718 = vld [vmem:[%s1690 + $0xd8] sm:$0xff]
  %v1719 = vld [vmem:[%s1690 + $0xe0] sm:$0xff]
  %v1720 = vld [vmem:[%s1690 + $0xe8] sm:$0xff]
  %v1721 = vld [vmem:[%s1690 + $0xf0] sm:$0xff]
  %v1722 = vld [vmem:[%s1690 + $0xf8] sm:$0xff]
  %v1724 = vrot.slane %v1274, 1
  %v1725 = vsel %vm54, %v1355, %v1724
  %1727 = vmatprep.subr.mxu0 %v1722
  %1728 = vmatpush1.msra.mxu0 %v1721
  %1729 = vmatprep.subr.mxu0 %v1720
  %1730 = vmatpush1.msra.mxu0 %v1719
  %1731 = vmatprep.subr.mxu0 %v1718
  %1732 = vmatpush1.msra.mxu0 %v1717
  %1733 = vmatprep.subr.mxu0 %v1716
  %1734 = vmatpush1.msra.mxu0 %v1715
  %1735 = vmatprep.subr.mxu0 %v1714
  %1736 = vmatpush1.msra.mxu0 %v1713
  %1737 = vmatprep.subr.mxu0 %v1712
  %1738 = vmatpush1.msra.mxu0 %v1711
  %1739 = vmatprep.subr.mxu0 %v1710
  %1740 = vmatpush1.msra.mxu0 %v1709
  %1741 = vmatprep.subr.mxu0 %v1708
  %1742 = vmatpush1.msra.mxu0 %v1707
  %1743 = vmatprep.subr.mxu0 %v1706
  %1744 = vmatpush1.msra.mxu0 %v1705
  %1745 = vmatprep.subr.mxu0 %v1704
  %1746 = vmatpush1.msra.mxu0 %v1703
  %1747 = vmatprep.subr.mxu0 %v1702
  %1748 = vmatpush1.msra.mxu0 %v1701
  %1749 = vmatprep.subr.mxu0 %v1700
  %1750 = vmatpush1.msra.mxu0 %v1699
  %1751 = vmatprep.subr.mxu0 %v1698
  %1752 = vmatpush1.msra.mxu0 %v1697
  %1753 = vmatprep.subr.mxu0 %v1696
  %1754 = vmatpush1.msra.mxu0 %v1695
  %1755 = vmatprep.subr.mxu0 %v1694
  %1756 = vmatpush1.msra.mxu0 %v1693
  %1757 = vmatprep.subr.mxu0 %v1692
  %1758 = vmatpush1.msra.mxu0 %v1691
  %1759 = vmatprep.subr.mxu0 0.0
  %1760 = vmatpush2.msra.mxu0 0.0
  %1761 = vmatprep.subr.mxu0 0.0
  %1762 = vmatpush2.msra.mxu0 0.0
  %1763 = vmatprep.subr.mxu0 0.0
  %1764 = vmatpush2.msra.mxu0 0.0
  %1765 = vmatprep.subr.mxu0 0.0
  %1766 = vmatpush2.msra.mxu0 0.0
  %1767 = vmatprep.subr.mxu0 0.0
  %1768 = vmatpush2.msra.mxu0 0.0
  %1769 = vmatprep.subr.mxu0 0.0
  %1770 = vmatpush2.msra.mxu0 0.0
  %1771 = vmatprep.subr.mxu0 0.0
  %1772 = vmatpush2.msra.mxu0 0.0
  %1773 = vmatprep.subr.mxu0 0.0
  %1774 = vmatpush2.msra.mxu0 0.0
  %1775 = vmatprep.subr.mxu0 0.0
  %1776 = vmatpush2.msra.mxu0 0.0
  %1777 = vmatprep.subr.mxu0 0.0
  %1778 = vmatpush2.msra.mxu0 0.0
  %1779 = vmatprep.subr.mxu0 0.0
  %1780 = vmatpush2.msra.mxu0 0.0
  %1781 = vmatprep.subr.mxu0 0.0
  %1782 = vmatpush2.msra.mxu0 0.0
  %1783 = vmatprep.subr.mxu0 0.0
  %1784 = vmatpush2.msra.mxu0 0.0
  %1785 = vmatprep.subr.mxu0 0.0
  %1786 = vmatpush2.msra.mxu0 0.0
  %1787 = vmatprep.subr.mxu0 0.0
  %1788 = vmatpush2.msra.mxu0 0.0
  %1789 = vmatprep.subr.mxu0 0.0
  %1790 = vmatpush2.msra.mxu0 0.0
  %1791 = vmatprep.mubr.f32.mxu0 0.0
  %1792 = vmatmul.mubr.f32.gmra.mxu0 %v1350
  %v1793 = vpop.f32.mrf.mxu0
  %v1794 = vadd.f32 0.0, %v1793
  %v1795 = vpop.f32.mrf.mxu0
  %v1796 = vadd.f32 0.0, %v1795
  %1797 = vmatprep.mubr.f32.mxu0 0.0
  %1798 = vmatmul.mubr.f32.gmra.mxu0 %v1352
  %v1799 = vpop.f32.mrf.mxu0
  %v1800 = vadd.f32 0.0, %v1799
  %v1801 = vpop.f32.mrf.mxu0
  %v1802 = vadd.f32 0.0, %v1801
  %1803 = vmatprep.mubr.f32.mxu0 0.0
  %1804 = vmatmul.mubr.f32.gmra.mxu0 %v1354
  %v1805 = vpop.f32.mrf.mxu0
  %v1806 = vadd.f32 0.0, %v1805
  %v1807 = vpop.f32.mrf.mxu0
  %v1808 = vadd.f32 0.0, %v1807
  %1809 = vmatprep.mubr.f32.mxu0 0.0
  %1810 = vmatmul.mubr.f32.gmra.mxu0 %v1356
  %v1811 = vpop.f32.mrf.mxu0
  %v1812 = vadd.f32 0.0, %v1811
  %v1813 = vpop.f32.mrf.mxu0
  %v1814 = vadd.f32 0.0, %v1813
  %1815 = vmatprep.mubr.f32.mxu0 0.0
  %1816 = vmatmul.mubr.f32.gmra.mxu0 %v1725
  %v1817 = vpop.f32.mrf.mxu0
  %v1818 = vadd.f32 0.0, %v1817
  %v1819 = vpop.f32.mrf.mxu0
  %v1820 = vadd.f32 0.0, %v1819
  %1821 = vdwg.mxu0
  %v1822 = vadd.f32 %v1680, %v1794
  %v1823 = vadd.f32 %v1681, %v1796
  %v1824 = vadd.f32 %v1682, %v1800
  %v1825 = vadd.f32 %v1683, %v1802
  %v1826 = vadd.f32 %v1684, %v1806
  %v1827 = vadd.f32 %v1685, %v1808
  %v1828 = vadd.f32 %v1686, %v1812
  %v1829 = vadd.f32 %v1687, %v1814
  %v1830 = vadd.f32 %v1688, %v1818
  %v1831 = vadd.f32 %v1689, %v1820
  %v1832 = vld [vmem:[%s4] sm:$0x3]
  %v1834 = vlaneseq
  %v1835 = vshrl.u32 %v1834, 7
  %v1836 = vsub.s32 0, %v1835
  %v1837 = vrot.slane %v1832, %v1836
  %v1838 = vlaneseq
  %v1839 = vshrl.u32 %v1838, 7
  %v1840 = vsub.s32 1, %v1839
  %v1841 = vrot.slane %v1832, %v1840
  %v1844 = vadd.f32 %v1822, %v1837
  %v1845 = vadd.f32 %v1823, %v1841
  %v1846 = vadd.f32 %v1824, %v1837
  %v1847 = vadd.f32 %v1825, %v1841
  %v1848 = vadd.f32 %v1826, %v1837
  %v1849 = vadd.f32 %v1827, %v1841
  %v1850 = vadd.f32 %v1828, %v1837
  %v1851 = vadd.f32 %v1829, %v1841
  %v1852 = vadd.f32 %v1830, %v1837
  %v1853 = vadd.f32 %v1831, %v1841
  %v1854 = vxor.u32 %v1844, 2147483648
  %v1855 = vxor.u32 %v1845, 2147483648
  %v1856 = vxor.u32 %v1846, 2147483648
  %v1857 = vxor.u32 %v1847, 2147483648
  %v1858 = vxor.u32 %v1848, 2147483648
  %v1859 = vxor.u32 %v1849, 2147483648
  %v1860 = vxor.u32 %v1850, 2147483648
  %v1861 = vxor.u32 %v1851, 2147483648
  %v1862 = vxor.u32 %v1852, 2147483648
  %v1863 = vxor.u32 %v1853, 2147483648
  %v1864 = vmul.f32 %v1854, 1.442695
  %v1865 = vpow.pop %v1864
  %v1866 = vmul.f32 %v1855, 1.442695
  %v1867 = vpow.pop %v1866
  %v1868 = vmul.f32 %v1856, 1.442695
  %v1869 = vpow.pop %v1868
  %v1870 = vmul.f32 %v1857, 1.442695
  %v1871 = vpow.pop %v1870
  %v1872 = vmul.f32 %v1858, 1.442695
  %v1873 = vpow.pop %v1872
  %v1874 = vmul.f32 %v1859, 1.442695
  %v1875 = vpow.pop %v1874
  %v1876 = vmul.f32 %v1860, 1.442695
  %v1877 = vpow.pop %v1876
  %v1878 = vmul.f32 %v1861, 1.442695
  %v1879 = vpow.pop %v1878
  %v1880 = vmul.f32 %v1862, 1.442695
  %v1881 = vpow.pop %v1880
  %v1882 = vmul.f32 %v1863, 1.442695
  %v1883 = vpow.pop %v1882
  %v1884 = vadd.f32 %v1865, 1.0
  %v1885 = vadd.f32 %v1867, 1.0
  %v1886 = vadd.f32 %v1869, 1.0
  %v1887 = vadd.f32 %v1871, 1.0
  %v1888 = vadd.f32 %v1873, 1.0
  %v1889 = vadd.f32 %v1875, 1.0
  %v1890 = vadd.f32 %v1877, 1.0
  %v1891 = vadd.f32 %v1879, 1.0
  %v1892 = vadd.f32 %v1881, 1.0
  %v1893 = vadd.f32 %v1883, 1.0
  %v1894 = vrcp.pop %v1884
  %v1895 = vmul.f32 1.0, %v1894
  %v1896 = vrcp.pop %v1885
  %v1897 = vmul.f32 1.0, %v1896
  %v1898 = vrcp.pop %v1886
  %v1899 = vmul.f32 1.0, %v1898
  %v1900 = vrcp.pop %v1887
  %v1901 = vmul.f32 1.0, %v1900
  %v1902 = vrcp.pop %v1888
  %v1903 = vmul.f32 1.0, %v1902
  %v1904 = vrcp.pop %v1889
  %v1905 = vmul.f32 1.0, %v1904
  %v1906 = vrcp.pop %v1890
  %v1907 = vmul.f32 1.0, %v1906
  %v1908 = vrcp.pop %v1891
  %v1909 = vmul.f32 1.0, %v1908
  %v1910 = vrcp.pop %v1892
  %v1911 = vmul.f32 1.0, %v1910
  %v1912 = vrcp.pop %v1893
  %v1913 = vmul.f32 1.0, %v1912
  %1919 = vrot.lane.b32.xlu0 %v1895, 64
  %v1920 = vpop.permute.xlu0 %1919
  %1921 = vrot.lane.b32.xlu0 %v1899, 64
  %v1922 = vpop.permute.xlu0 %1921
  %1923 = vrot.lane.b32.xlu0 %v1903, 64
  %v1924 = vpop.permute.xlu0 %1923
  %1925 = vrot.lane.b32.xlu0 %v1907, 64
  %v1926 = vpop.permute.xlu0 %1925
  %1927 = vrot.lane.b32.xlu0 %v1911, 64
  %v1928 = vpop.permute.xlu0 %1927
  %v1934 = vmax.f32 %v1895, %v1920
  %v1935 = vmax.f32 %v1899, %v1922
  %v1936 = vmax.f32 %v1903, %v1924
  %v1937 = vmax.f32 %v1907, %v1926
  %v1938 = vmax.f32 %v1911, %v1928
  %1944 = vrot.lane.b32.xlu0 %v1897, 64
  %v1945 = vpop.permute.xlu0 %1944
  %1946 = vrot.lane.b32.xlu0 %v1901, 64
  %v1947 = vpop.permute.xlu0 %1946
  %1948 = vrot.lane.b32.xlu0 %v1905, 64
  %v1949 = vpop.permute.xlu0 %1948
  %1950 = vrot.lane.b32.xlu0 %v1909, 64
  %v1951 = vpop.permute.xlu0 %1950
  %1952 = vrot.lane.b32.xlu0 %v1913, 64
  %v1953 = vpop.permute.xlu0 %1952
  %v1959 = vmax.f32 %v1897, %v1945
  %v1960 = vmax.f32 %v1901, %v1947
  %v1961 = vmax.f32 %v1905, %v1949
  %v1962 = vmax.f32 %v1909, %v1951
  %v1963 = vmax.f32 %v1913, %v1953
  %v1964 = vmax.f32 %v1934, %v1959
  %v1965 = vmax.f32 %v1935, %v1960
  %v1966 = vmax.f32 %v1936, %v1961
  %v1967 = vmax.f32 %v1937, %v1962
  %v1968 = vmax.f32 %v1938, %v1963
  %vm1969 = vcmask 523264
  %1970 = vst.msk [vmem:[%s5] sm:$0xff] %vm1969, %v1964
  %1971 = vst.msk [vmem:[%s5 + $0x8] sm:$0xff] %vm1969, %v1965
  %1972 = vst.msk [vmem:[%s5 + $0x10] sm:$0xff] %vm1969, %v1966
  %1973 = vst.msk [vmem:[%s5 + $0x18] sm:$0xff] %vm1969, %v1967
  %1974 = vst.msk [vmem:[%s5 + $0x20] sm:$0xff] %vm1969, %v1968
  %s1975 = scalar_lea.vmem %s0, 72
  %v1976 = vld [vmem:[%s1975] sm:$0xff]
  %v1977 = vld [vmem:[%s1975 + $0x8] sm:$0xff]
  %v1978 = vld [vmem:[%s1975 + $0x10] sm:$0xff]
  %v1979 = vld [vmem:[%s1975 + $0x18] sm:$0xff]
  %v1980 = vld [vmem:[%s1975 + $0x20] sm:$0xff]
  %v1981 = vld [vmem:[%s1975 + $0x28] sm:$0xff]
  %v1982 = vld [vmem:[%s1975 + $0x30] sm:$0xff]
  %v1983 = vld [vmem:[%s1975 + $0x38] sm:$0xff]
  %v1984 = vld [vmem:[%s1975 + $0x40] sm:$0xff]
  %v1985 = vld [vmem:[%s1] sm:$0xff]
  %v1986 = vld [vmem:[%s1 + $0x8] sm:$0xff]
  %v1987 = vld [vmem:[%s1 + $0x10] sm:$0xff]
  %v1988 = vld [vmem:[%s1 + $0x18] sm:$0xff]
  %v1989 = vld [vmem:[%s1 + $0x20] sm:$0xff]
  %v1990 = vld [vmem:[%s1 + $0x28] sm:$0xff]
  %v1991 = vld [vmem:[%s1 + $0x30] sm:$0xff]
  %v1992 = vld [vmem:[%s1 + $0x38] sm:$0xff]
  %v1993 = vld [vmem:[%s37] sm:$0xff]
  %v1994 = vld [vmem:[%s37 + $0x8] sm:$0xff]
  %v1995 = vld [vmem:[%s37 + $0x10] sm:$0xff]
  %v1996 = vld [vmem:[%s37 + $0x18] sm:$0xff]
  %v1997 = vld [vmem:[%s37 + $0x20] sm:$0xff]
  %v1998 = vld [vmem:[%s37 + $0x28] sm:$0xff]
  %v1999 = vld [vmem:[%s37 + $0x30] sm:$0xff]
  %v2000 = vld [vmem:[%s37 + $0x38] sm:$0xff]
  %v2009 = vrot.slane %v1976, 1
  %v2010 = vrot.slane %v1977, 1
  %v2011 = vsel %vm54, %v2009, %v2010
  %v2012 = vrot.slane %v1978, 1
  %v2013 = vsel %vm54, %v2010, %v2012
  %v2014 = vrot.slane %v1979, 1
  %v2015 = vsel %vm54, %v2012, %v2014
  %v2016 = vrot.slane %v1980, 1
  %v2017 = vsel %vm54, %v2014, %v2016
  %v2018 = vrot.slane %v1981, 1
  %v2019 = vsel %vm54, %v2016, %v2018
  %v2020 = vrot.slane %v1982, 1
  %v2021 = vsel %vm54, %v2018, %v2020
  %v2022 = vrot.slane %v1983, 1
  %v2023 = vsel %vm54, %v2020, %v2022
  %v2024 = vsel %vm70, %v2011, 0
  %v2026 = vsel %vm70, %v2013, 0
  %v2028 = vsel %vm70, %v2015, 0
  %v2030 = vsel %vm70, %v2017, 0
  %v2032 = vsel %vm70, %v2019, 0
  %v2034 = vsel %vm70, %v2021, 0
  %v2036 = vsel %vm70, %v2023, 0
  %2038 = vmatprep.subr.mxu0 0.0
  %2039 = vmatpush1.msra.mxu0 0.0
  %2040 = vmatprep.subr.mxu0 0.0
  %2041 = vmatpush1.msra.mxu0 0.0
  %2042 = vmatprep.subr.mxu0 0.0
  %2043 = vmatpush1.msra.mxu0 0.0
  %2044 = vmatprep.subr.mxu0 0.0
  %2045 = vmatpush1.msra.mxu0 0.0
  %2046 = vmatprep.subr.mxu0 0.0
  %2047 = vmatpush1.msra.mxu0 0.0
  %2048 = vmatprep.subr.mxu0 0.0
  %2049 = vmatpush1.msra.mxu0 0.0
  %2050 = vmatprep.subr.mxu0 0.0
  %2051 = vmatpush1.msra.mxu0 0.0
  %2052 = vmatprep.subr.mxu0 0.0
  %2053 = vmatpush1.msra.mxu0 0.0
  %2054 = vmatprep.subr.mxu0 0.0
  %2055 = vmatpush1.msra.mxu0 0.0
  %2056 = vmatprep.subr.mxu0 0.0
  %2057 = vmatpush1.msra.mxu0 0.0
  %2058 = vmatprep.subr.mxu0 0.0
  %2059 = vmatpush1.msra.mxu0 0.0
  %2060 = vmatprep.subr.mxu0 0.0
  %2061 = vmatpush1.msra.mxu0 0.0
  %2062 = vmatprep.subr.mxu0 0.0
  %2063 = vmatpush1.msra.mxu0 0.0
  %2064 = vmatprep.subr.mxu0 0.0
  %2065 = vmatpush1.msra.mxu0 0.0
  %2066 = vmatprep.subr.mxu0 %v1998
  %2067 = vmatpush1.msra.mxu0 %v1997
  %2068 = vmatprep.subr.mxu0 %v1994
  %2069 = vmatpush1.msra.mxu0 %v1993
  %2070 = vmatprep.subr.mxu0 0.0
  %2071 = vmatpush2.msra.mxu0 0.0
  %2072 = vmatprep.subr.mxu0 0.0
  %2073 = vmatpush2.msra.mxu0 0.0
  %2074 = vmatprep.subr.mxu0 0.0
  %2075 = vmatpush2.msra.mxu0 0.0
  %2076 = vmatprep.subr.mxu0 0.0
  %2077 = vmatpush2.msra.mxu0 0.0
  %2078 = vmatprep.subr.mxu0 0.0
  %2079 = vmatpush2.msra.mxu0 0.0
  %2080 = vmatprep.subr.mxu0 0.0
  %2081 = vmatpush2.msra.mxu0 0.0
  %2082 = vmatprep.subr.mxu0 0.0
  %2083 = vmatpush2.msra.mxu0 0.0
  %2084 = vmatprep.subr.mxu0 0.0
  %2085 = vmatpush2.msra.mxu0 0.0
  %2086 = vmatprep.subr.mxu0 0.0
  %2087 = vmatpush2.msra.mxu0 0.0
  %2088 = vmatprep.subr.mxu0 0.0
  %2089 = vmatpush2.msra.mxu0 0.0
  %2090 = vmatprep.subr.mxu0 0.0
  %2091 = vmatpush2.msra.mxu0 0.0
  %2092 = vmatprep.subr.mxu0 0.0
  %2093 = vmatpush2.msra.mxu0 0.0
  %2094 = vmatprep.subr.mxu0 0.0
  %2095 = vmatpush2.msra.mxu0 0.0
  %2096 = vmatprep.subr.mxu0 0.0
  %2097 = vmatpush2.msra.mxu0 0.0
  %2098 = vmatprep.subr.mxu0 0.0
  %2099 = vmatpush2.msra.mxu0 0.0
  %2100 = vmatprep.subr.mxu0 0.0
  %2101 = vmatpush2.msra.mxu0 0.0
  %2102 = vmatprep.mubr.f32.mxu0 0.0
  %2103 = vmatmul.mubr.f32.gmra.mxu0 %v2024
  %v2104 = vpop.f32.mrf.mxu0
  %v2105 = vadd.f32 0.0, %v2104
  %v2106 = vpop.f32.mrf.mxu0
  %v2107 = vadd.f32 0.0, %v2106
  %2108 = vmatprep.mubr.f32.mxu0 0.0
  %2109 = vmatmul.mubr.f32.gmra.mxu0 %v2026
  %v2110 = vpop.f32.mrf.mxu0
  %v2111 = vadd.f32 0.0, %v2110
  %v2112 = vpop.f32.mrf.mxu0
  %v2113 = vadd.f32 0.0, %v2112
  %2114 = vmatprep.mubr.f32.mxu0 0.0
  %2115 = vmatmul.mubr.f32.gmra.mxu0 %v2028
  %v2116 = vpop.f32.mrf.mxu0
  %v2117 = vadd.f32 0.0, %v2116
  %v2118 = vpop.f32.mrf.mxu0
  %v2119 = vadd.f32 0.0, %v2118
  %2120 = vmatprep.mubr.f32.mxu0 0.0
  %2121 = vmatmul.mubr.f32.gmra.mxu0 %v2030
  %v2122 = vpop.f32.mrf.mxu0
  %v2123 = vadd.f32 0.0, %v2122
  %v2124 = vpop.f32.mrf.mxu0
  %v2125 = vadd.f32 0.0, %v2124
  %2126 = vmatprep.mubr.f32.mxu0 0.0
  %2127 = vmatmul.mubr.f32.gmra.mxu0 %v2032
  %v2128 = vpop.f32.mrf.mxu0
  %v2129 = vadd.f32 0.0, %v2128
  %v2130 = vpop.f32.mrf.mxu0
  %v2131 = vadd.f32 0.0, %v2130
  %2132 = vmatprep.mubr.f32.mxu0 0.0
  %2133 = vmatmul.mubr.f32.gmra.mxu0 %v2034
  %v2134 = vpop.f32.mrf.mxu0
  %v2135 = vadd.f32 0.0, %v2134
  %v2136 = vpop.f32.mrf.mxu0
  %v2137 = vadd.f32 0.0, %v2136
  %2138 = vmatprep.mubr.f32.mxu0 0.0
  %2139 = vmatmul.mubr.f32.gmra.mxu0 %v2036
  %v2140 = vpop.f32.mrf.mxu0
  %v2141 = vadd.f32 0.0, %v2140
  %v2142 = vpop.f32.mrf.mxu0
  %v2143 = vadd.f32 0.0, %v2142
  %2144 = vdwg.mxu0
  %2145 = vmatprep.subr.mxu0 0.0
  %2146 = vmatpush1.msra.mxu0 0.0
  %2147 = vmatprep.subr.mxu0 0.0
  %2148 = vmatpush1.msra.mxu0 0.0
  %2149 = vmatprep.subr.mxu0 0.0
  %2150 = vmatpush1.msra.mxu0 0.0
  %2151 = vmatprep.subr.mxu0 0.0
  %2152 = vmatpush1.msra.mxu0 0.0
  %2153 = vmatprep.subr.mxu0 0.0
  %2154 = vmatpush1.msra.mxu0 0.0
  %2155 = vmatprep.subr.mxu0 0.0
  %2156 = vmatpush1.msra.mxu0 0.0
  %2157 = vmatprep.subr.mxu0 0.0
  %2158 = vmatpush1.msra.mxu0 0.0
  %2159 = vmatprep.subr.mxu0 0.0
  %2160 = vmatpush1.msra.mxu0 0.0
  %2161 = vmatprep.subr.mxu0 0.0
  %2162 = vmatpush1.msra.mxu0 0.0
  %2163 = vmatprep.subr.mxu0 0.0
  %2164 = vmatpush1.msra.mxu0 0.0
  %2165 = vmatprep.subr.mxu0 0.0
  %2166 = vmatpush1.msra.mxu0 0.0
  %2167 = vmatprep.subr.mxu0 0.0
  %2168 = vmatpush1.msra.mxu0 0.0
  %2169 = vmatprep.subr.mxu0 0.0
  %2170 = vmatpush1.msra.mxu0 0.0
  %2171 = vmatprep.subr.mxu0 0.0
  %2172 = vmatpush1.msra.mxu0 0.0
  %2173 = vmatprep.subr.mxu0 %v2000
  %2174 = vmatpush1.msra.mxu0 %v1999
  %2175 = vmatprep.subr.mxu0 %v1996
  %2176 = vmatpush1.msra.mxu0 %v1995
  %2177 = vmatprep.subr.mxu0 0.0
  %2178 = vmatpush2.msra.mxu0 0.0
  %2179 = vmatprep.subr.mxu0 0.0
  %2180 = vmatpush2.msra.mxu0 0.0
  %2181 = vmatprep.subr.mxu0 0.0
  %2182 = vmatpush2.msra.mxu0 0.0
  %2183 = vmatprep.subr.mxu0 0.0
  %2184 = vmatpush2.msra.mxu0 0.0
  %2185 = vmatprep.subr.mxu0 0.0
  %2186 = vmatpush2.msra.mxu0 0.0
  %2187 = vmatprep.subr.mxu0 0.0
  %2188 = vmatpush2.msra.mxu0 0.0
  %2189 = vmatprep.subr.mxu0 0.0
  %2190 = vmatpush2.msra.mxu0 0.0
  %2191 = vmatprep.subr.mxu0 0.0
  %2192 = vmatpush2.msra.mxu0 0.0
  %2193 = vmatprep.subr.mxu0 0.0
  %2194 = vmatpush2.msra.mxu0 0.0
  %2195 = vmatprep.subr.mxu0 0.0
  %2196 = vmatpush2.msra.mxu0 0.0
  %2197 = vmatprep.subr.mxu0 0.0
  %2198 = vmatpush2.msra.mxu0 0.0
  %2199 = vmatprep.subr.mxu0 0.0
  %2200 = vmatpush2.msra.mxu0 0.0
  %2201 = vmatprep.subr.mxu0 0.0
  %2202 = vmatpush2.msra.mxu0 0.0
  %2203 = vmatprep.subr.mxu0 0.0
  %2204 = vmatpush2.msra.mxu0 0.0
  %2205 = vmatprep.subr.mxu0 0.0
  %2206 = vmatpush2.msra.mxu0 0.0
  %2207 = vmatprep.subr.mxu0 0.0
  %2208 = vmatpush2.msra.mxu0 0.0
  %2209 = vmatprep.mubr.f32.mxu0 0.0
  %2210 = vmatmul.mubr.f32.gmra.mxu0 %v2024
  %v2211 = vpop.f32.mrf.mxu0
  %v2212 = vadd.f32 0.0, %v2211
  %v2213 = vpop.f32.mrf.mxu0
  %v2214 = vadd.f32 0.0, %v2213
  %2215 = vmatprep.mubr.f32.mxu0 0.0
  %2216 = vmatmul.mubr.f32.gmra.mxu0 %v2026
  %v2217 = vpop.f32.mrf.mxu0
  %v2218 = vadd.f32 0.0, %v2217
  %v2219 = vpop.f32.mrf.mxu0
  %v2220 = vadd.f32 0.0, %v2219
  %2221 = vmatprep.mubr.f32.mxu0 0.0
  %2222 = vmatmul.mubr.f32.gmra.mxu0 %v2028
  %v2223 = vpop.f32.mrf.mxu0
  %v2224 = vadd.f32 0.0, %v2223
  %v2225 = vpop.f32.mrf.mxu0
  %v2226 = vadd.f32 0.0, %v2225
  %2227 = vmatprep.mubr.f32.mxu0 0.0
  %2228 = vmatmul.mubr.f32.gmra.mxu0 %v2030
  %v2229 = vpop.f32.mrf.mxu0
  %v2230 = vadd.f32 0.0, %v2229
  %v2231 = vpop.f32.mrf.mxu0
  %v2232 = vadd.f32 0.0, %v2231
  %2233 = vmatprep.mubr.f32.mxu0 0.0
  %2234 = vmatmul.mubr.f32.gmra.mxu0 %v2032
  %v2235 = vpop.f32.mrf.mxu0
  %v2236 = vadd.f32 0.0, %v2235
  %v2237 = vpop.f32.mrf.mxu0
  %v2238 = vadd.f32 0.0, %v2237
  %2239 = vmatprep.mubr.f32.mxu0 0.0
  %2240 = vmatmul.mubr.f32.gmra.mxu0 %v2034
  %v2241 = vpop.f32.mrf.mxu0
  %v2242 = vadd.f32 0.0, %v2241
  %v2243 = vpop.f32.mrf.mxu0
  %v2244 = vadd.f32 0.0, %v2243
  %2245 = vmatprep.mubr.f32.mxu0 0.0
  %2246 = vmatmul.mubr.f32.gmra.mxu0 %v2036
  %v2247 = vpop.f32.mrf.mxu0
  %v2248 = vadd.f32 0.0, %v2247
  %v2249 = vpop.f32.mrf.mxu0
  %v2250 = vadd.f32 0.0, %v2249
  %2251 = vdwg.mxu0
  %v2252 = vsel %vm70, %v1976, 0
  %v2254 = vsel %vm70, %v1977, 0
  %v2256 = vsel %vm70, %v1978, 0
  %v2258 = vsel %vm70, %v1979, 0
  %v2260 = vsel %vm70, %v1980, 0
  %v2262 = vsel %vm70, %v1981, 0
  %v2264 = vsel %vm70, %v1982, 0
  %2266 = vmatprep.subr.mxu0 0.0
  %2267 = vmatpush1.msra.mxu0 0.0
  %2268 = vmatprep.subr.mxu0 0.0
  %2269 = vmatpush1.msra.mxu0 0.0
  %2270 = vmatprep.subr.mxu0 0.0
  %2271 = vmatpush1.msra.mxu0 0.0
  %2272 = vmatprep.subr.mxu0 0.0
  %2273 = vmatpush1.msra.mxu0 0.0
  %2274 = vmatprep.subr.mxu0 0.0
  %2275 = vmatpush1.msra.mxu0 0.0
  %2276 = vmatprep.subr.mxu0 0.0
  %2277 = vmatpush1.msra.mxu0 0.0
  %2278 = vmatprep.subr.mxu0 0.0
  %2279 = vmatpush1.msra.mxu0 0.0
  %2280 = vmatprep.subr.mxu0 0.0
  %2281 = vmatpush1.msra.mxu0 0.0
  %2282 = vmatprep.subr.mxu0 0.0
  %2283 = vmatpush1.msra.mxu0 0.0
  %2284 = vmatprep.subr.mxu0 0.0
  %2285 = vmatpush1.msra.mxu0 0.0
  %2286 = vmatprep.subr.mxu0 0.0
  %2287 = vmatpush1.msra.mxu0 0.0
  %2288 = vmatprep.subr.mxu0 0.0
  %2289 = vmatpush1.msra.mxu0 0.0
  %2290 = vmatprep.subr.mxu0 0.0
  %2291 = vmatpush1.msra.mxu0 0.0
  %2292 = vmatprep.subr.mxu0 0.0
  %2293 = vmatpush1.msra.mxu0 0.0
  %2294 = vmatprep.subr.mxu0 %v1990
  %2295 = vmatpush1.msra.mxu0 %v1989
  %2296 = vmatprep.subr.mxu0 %v1986
  %2297 = vmatpush1.msra.mxu0 %v1985
  %2298 = vmatprep.subr.mxu0 0.0
  %2299 = vmatpush2.msra.mxu0 0.0
  %2300 = vmatprep.subr.mxu0 0.0
  %2301 = vmatpush2.msra.mxu0 0.0
  %2302 = vmatprep.subr.mxu0 0.0
  %2303 = vmatpush2.msra.mxu0 0.0
  %2304 = vmatprep.subr.mxu0 0.0
  %2305 = vmatpush2.msra.mxu0 0.0
  %2306 = vmatprep.subr.mxu0 0.0
  %2307 = vmatpush2.msra.mxu0 0.0
  %2308 = vmatprep.subr.mxu0 0.0
  %2309 = vmatpush2.msra.mxu0 0.0
  %2310 = vmatprep.subr.mxu0 0.0
  %2311 = vmatpush2.msra.mxu0 0.0
  %2312 = vmatprep.subr.mxu0 0.0
  %2313 = vmatpush2.msra.mxu0 0.0
  %2314 = vmatprep.subr.mxu0 0.0
  %2315 = vmatpush2.msra.mxu0 0.0
  %2316 = vmatprep.subr.mxu0 0.0
  %2317 = vmatpush2.msra.mxu0 0.0
  %2318 = vmatprep.subr.mxu0 0.0
  %2319 = vmatpush2.msra.mxu0 0.0
  %2320 = vmatprep.subr.mxu0 0.0
  %2321 = vmatpush2.msra.mxu0 0.0
  %2322 = vmatprep.subr.mxu0 0.0
  %2323 = vmatpush2.msra.mxu0 0.0
  %2324 = vmatprep.subr.mxu0 0.0
  %2325 = vmatpush2.msra.mxu0 0.0
  %2326 = vmatprep.subr.mxu0 0.0
  %2327 = vmatpush2.msra.mxu0 0.0
  %2328 = vmatprep.subr.mxu0 0.0
  %2329 = vmatpush2.msra.mxu0 0.0
  %2330 = vmatprep.mubr.f32.mxu0 0.0
  %2331 = vmatmul.mubr.f32.gmra.mxu0 %v2252
  %v2332 = vpop.f32.mrf.mxu0
  %v2333 = vadd.f32 %v2105, %v2332
  %v2334 = vpop.f32.mrf.mxu0
  %v2335 = vadd.f32 %v2107, %v2334
  %2336 = vmatprep.mubr.f32.mxu0 0.0
  %2337 = vmatmul.mubr.f32.gmra.mxu0 %v2254
  %v2338 = vpop.f32.mrf.mxu0
  %v2339 = vadd.f32 %v2111, %v2338
  %v2340 = vpop.f32.mrf.mxu0
  %v2341 = vadd.f32 %v2113, %v2340
  %2342 = vmatprep.mubr.f32.mxu0 0.0
  %2343 = vmatmul.mubr.f32.gmra.mxu0 %v2256
  %v2344 = vpop.f32.mrf.mxu0
  %v2345 = vadd.f32 %v2117, %v2344
  %v2346 = vpop.f32.mrf.mxu0
  %v2347 = vadd.f32 %v2119, %v2346
  %2348 = vmatprep.mubr.f32.mxu0 0.0
  %2349 = vmatmul.mubr.f32.gmra.mxu0 %v2258
  %v2350 = vpop.f32.mrf.mxu0
  %v2351 = vadd.f32 %v2123, %v2350
  %v2352 = vpop.f32.mrf.mxu0
  %v2353 = vadd.f32 %v2125, %v2352
  %2354 = vmatprep.mubr.f32.mxu0 0.0
  %2355 = vmatmul.mubr.f32.gmra.mxu0 %v2260
  %v2356 = vpop.f32.mrf.mxu0
  %v2357 = vadd.f32 %v2129, %v2356
  %v2358 = vpop.f32.mrf.mxu0
  %v2359 = vadd.f32 %v2131, %v2358
  %2360 = vmatprep.mubr.f32.mxu0 0.0
  %2361 = vmatmul.mubr.f32.gmra.mxu0 %v2262
  %v2362 = vpop.f32.mrf.mxu0
  %v2363 = vadd.f32 %v2135, %v2362
  %v2364 = vpop.f32.mrf.mxu0
  %v2365 = vadd.f32 %v2137, %v2364
  %2366 = vmatprep.mubr.f32.mxu0 0.0
  %2367 = vmatmul.mubr.f32.gmra.mxu0 %v2264
  %v2368 = vpop.f32.mrf.mxu0
  %v2369 = vadd.f32 %v2141, %v2368
  %v2370 = vpop.f32.mrf.mxu0
  %v2371 = vadd.f32 %v2143, %v2370
  %2372 = vdwg.mxu0
  %2373 = vmatprep.subr.mxu0 0.0
  %2374 = vmatpush1.msra.mxu0 0.0
  %2375 = vmatprep.subr.mxu0 0.0
  %2376 = vmatpush1.msra.mxu0 0.0
  %2377 = vmatprep.subr.mxu0 0.0
  %2378 = vmatpush1.msra.mxu0 0.0
  %2379 = vmatprep.subr.mxu0 0.0
  %2380 = vmatpush1.msra.mxu0 0.0
  %2381 = vmatprep.subr.mxu0 0.0
  %2382 = vmatpush1.msra.mxu0 0.0
  %2383 = vmatprep.subr.mxu0 0.0
  %2384 = vmatpush1.msra.mxu0 0.0
  %2385 = vmatprep.subr.mxu0 0.0
  %2386 = vmatpush1.msra.mxu0 0.0
  %2387 = vmatprep.subr.mxu0 0.0
  %2388 = vmatpush1.msra.mxu0 0.0
  %2389 = vmatprep.subr.mxu0 0.0
  %2390 = vmatpush1.msra.mxu0 0.0
  %2391 = vmatprep.subr.mxu0 0.0
  %2392 = vmatpush1.msra.mxu0 0.0
  %2393 = vmatprep.subr.mxu0 0.0
  %2394 = vmatpush1.msra.mxu0 0.0
  %2395 = vmatprep.subr.mxu0 0.0
  %2396 = vmatpush1.msra.mxu0 0.0
  %2397 = vmatprep.subr.mxu0 0.0
  %2398 = vmatpush1.msra.mxu0 0.0
  %2399 = vmatprep.subr.mxu0 0.0
  %2400 = vmatpush1.msra.mxu0 0.0
  %2401 = vmatprep.subr.mxu0 %v1992
  %2402 = vmatpush1.msra.mxu0 %v1991
  %2403 = vmatprep.subr.mxu0 %v1988
  %2404 = vmatpush1.msra.mxu0 %v1987
  %2405 = vmatprep.subr.mxu0 0.0
  %2406 = vmatpush2.msra.mxu0 0.0
  %2407 = vmatprep.subr.mxu0 0.0
  %2408 = vmatpush2.msra.mxu0 0.0
  %2409 = vmatprep.subr.mxu0 0.0
  %2410 = vmatpush2.msra.mxu0 0.0
  %2411 = vmatprep.subr.mxu0 0.0
  %2412 = vmatpush2.msra.mxu0 0.0
  %2413 = vmatprep.subr.mxu0 0.0
  %2414 = vmatpush2.msra.mxu0 0.0
  %2415 = vmatprep.subr.mxu0 0.0
  %2416 = vmatpush2.msra.mxu0 0.0
  %2417 = vmatprep.subr.mxu0 0.0
  %2418 = vmatpush2.msra.mxu0 0.0
  %2419 = vmatprep.subr.mxu0 0.0
  %2420 = vmatpush2.msra.mxu0 0.0
  %2421 = vmatprep.subr.mxu0 0.0
  %2422 = vmatpush2.msra.mxu0 0.0
  %2423 = vmatprep.subr.mxu0 0.0
  %2424 = vmatpush2.msra.mxu0 0.0
  %2425 = vmatprep.subr.mxu0 0.0
  %2426 = vmatpush2.msra.mxu0 0.0
  %2427 = vmatprep.subr.mxu0 0.0
  %2428 = vmatpush2.msra.mxu0 0.0
  %2429 = vmatprep.subr.mxu0 0.0
  %2430 = vmatpush2.msra.mxu0 0.0
  %2431 = vmatprep.subr.mxu0 0.0
  %2432 = vmatpush2.msra.mxu0 0.0
  %2433 = vmatprep.subr.mxu0 0.0
  %2434 = vmatpush2.msra.mxu0 0.0
  %2435 = vmatprep.subr.mxu0 0.0
  %2436 = vmatpush2.msra.mxu0 0.0
  %2437 = vmatprep.mubr.f32.mxu0 0.0
  %2438 = vmatmul.mubr.f32.gmra.mxu0 %v2252
  %v2439 = vpop.f32.mrf.mxu0
  %v2440 = vadd.f32 %v2212, %v2439
  %v2441 = vpop.f32.mrf.mxu0
  %v2442 = vadd.f32 %v2214, %v2441
  %2443 = vmatprep.mubr.f32.mxu0 0.0
  %2444 = vmatmul.mubr.f32.gmra.mxu0 %v2254
  %v2445 = vpop.f32.mrf.mxu0
  %v2446 = vadd.f32 %v2218, %v2445
  %v2447 = vpop.f32.mrf.mxu0
  %v2448 = vadd.f32 %v2220, %v2447
  %2449 = vmatprep.mubr.f32.mxu0 0.0
  %2450 = vmatmul.mubr.f32.gmra.mxu0 %v2256
  %v2451 = vpop.f32.mrf.mxu0
  %v2452 = vadd.f32 %v2224, %v2451
  %v2453 = vpop.f32.mrf.mxu0
  %v2454 = vadd.f32 %v2226, %v2453
  %2455 = vmatprep.mubr.f32.mxu0 0.0
  %2456 = vmatmul.mubr.f32.gmra.mxu0 %v2258
  %v2457 = vpop.f32.mrf.mxu0
  %v2458 = vadd.f32 %v2230, %v2457
  %v2459 = vpop.f32.mrf.mxu0
  %v2460 = vadd.f32 %v2232, %v2459
  %2461 = vmatprep.mubr.f32.mxu0 0.0
  %2462 = vmatmul.mubr.f32.gmra.mxu0 %v2260
  %v2463 = vpop.f32.mrf.mxu0
  %v2464 = vadd.f32 %v2236, %v2463
  %v2465 = vpop.f32.mrf.mxu0
  %v2466 = vadd.f32 %v2238, %v2465
  %2467 = vmatprep.mubr.f32.mxu0 0.0
  %2468 = vmatmul.mubr.f32.gmra.mxu0 %v2262
  %v2469 = vpop.f32.mrf.mxu0
  %v2470 = vadd.f32 %v2242, %v2469
  %v2471 = vpop.f32.mrf.mxu0
  %v2472 = vadd.f32 %v2244, %v2471
  %2473 = vmatprep.mubr.f32.mxu0 0.0
  %2474 = vmatmul.mubr.f32.gmra.mxu0 %v2264
  %v2475 = vpop.f32.mrf.mxu0
  %v2476 = vadd.f32 %v2248, %v2475
  %v2477 = vpop.f32.mrf.mxu0
  %v2478 = vadd.f32 %v2250, %v2477
  %2479 = vdwg.mxu0
  %v2480 = vld [vmem:[%s527] sm:$0xff]
  %v2481 = vld [vmem:[%s527 + $0x8] sm:$0xff]
  %v2482 = vld [vmem:[%s527 + $0x10] sm:$0xff]
  %v2483 = vld [vmem:[%s527 + $0x18] sm:$0xff]
  %v2484 = vld [vmem:[%s527 + $0x20] sm:$0xff]
  %v2485 = vld [vmem:[%s527 + $0x28] sm:$0xff]
  %v2486 = vld [vmem:[%s527 + $0x30] sm:$0xff]
  %v2487 = vld [vmem:[%s527 + $0x38] sm:$0xff]
  %v2488 = vsel %vm70, %v1983, 0
  %2490 = vmatprep.subr.mxu0 0.0
  %2491 = vmatpush1.msra.mxu0 0.0
  %2492 = vmatprep.subr.mxu0 0.0
  %2493 = vmatpush1.msra.mxu0 0.0
  %2494 = vmatprep.subr.mxu0 0.0
  %2495 = vmatpush1.msra.mxu0 0.0
  %2496 = vmatprep.subr.mxu0 0.0
  %2497 = vmatpush1.msra.mxu0 0.0
  %2498 = vmatprep.subr.mxu0 0.0
  %2499 = vmatpush1.msra.mxu0 0.0
  %2500 = vmatprep.subr.mxu0 0.0
  %2501 = vmatpush1.msra.mxu0 0.0
  %2502 = vmatprep.subr.mxu0 0.0
  %2503 = vmatpush1.msra.mxu0 0.0
  %2504 = vmatprep.subr.mxu0 0.0
  %2505 = vmatpush1.msra.mxu0 0.0
  %2506 = vmatprep.subr.mxu0 0.0
  %2507 = vmatpush1.msra.mxu0 0.0
  %2508 = vmatprep.subr.mxu0 0.0
  %2509 = vmatpush1.msra.mxu0 0.0
  %2510 = vmatprep.subr.mxu0 0.0
  %2511 = vmatpush1.msra.mxu0 0.0
  %2512 = vmatprep.subr.mxu0 0.0
  %2513 = vmatpush1.msra.mxu0 0.0
  %2514 = vmatprep.subr.mxu0 0.0
  %2515 = vmatpush1.msra.mxu0 0.0
  %2516 = vmatprep.subr.mxu0 0.0
  %2517 = vmatpush1.msra.mxu0 0.0
  %2518 = vmatprep.subr.mxu0 %v2485
  %2519 = vmatpush1.msra.mxu0 %v2484
  %2520 = vmatprep.subr.mxu0 %v2481
  %2521 = vmatpush1.msra.mxu0 %v2480
  %2522 = vmatprep.subr.mxu0 0.0
  %2523 = vmatpush2.msra.mxu0 0.0
  %2524 = vmatprep.subr.mxu0 0.0
  %2525 = vmatpush2.msra.mxu0 0.0
  %2526 = vmatprep.subr.mxu0 0.0
  %2527 = vmatpush2.msra.mxu0 0.0
  %2528 = vmatprep.subr.mxu0 0.0
  %2529 = vmatpush2.msra.mxu0 0.0
  %2530 = vmatprep.subr.mxu0 0.0
  %2531 = vmatpush2.msra.mxu0 0.0
  %2532 = vmatprep.subr.mxu0 0.0
  %2533 = vmatpush2.msra.mxu0 0.0
  %2534 = vmatprep.subr.mxu0 0.0
  %2535 = vmatpush2.msra.mxu0 0.0
  %2536 = vmatprep.subr.mxu0 0.0
  %2537 = vmatpush2.msra.mxu0 0.0
  %2538 = vmatprep.subr.mxu0 0.0
  %2539 = vmatpush2.msra.mxu0 0.0
  %2540 = vmatprep.subr.mxu0 0.0
  %2541 = vmatpush2.msra.mxu0 0.0
  %2542 = vmatprep.subr.mxu0 0.0
  %2543 = vmatpush2.msra.mxu0 0.0
  %2544 = vmatprep.subr.mxu0 0.0
  %2545 = vmatpush2.msra.mxu0 0.0
  %2546 = vmatprep.subr.mxu0 0.0
  %2547 = vmatpush2.msra.mxu0 0.0
  %2548 = vmatprep.subr.mxu0 0.0
  %2549 = vmatpush2.msra.mxu0 0.0
  %2550 = vmatprep.subr.mxu0 0.0
  %2551 = vmatpush2.msra.mxu0 0.0
  %2552 = vmatprep.subr.mxu0 0.0
  %2553 = vmatpush2.msra.mxu0 0.0
  %2554 = vmatprep.mubr.f32.mxu0 0.0
  %2555 = vmatmul.mubr.f32.gmra.mxu0 %v2254
  %v2556 = vpop.f32.mrf.mxu0
  %v2557 = vadd.f32 0.0, %v2556
  %v2558 = vpop.f32.mrf.mxu0
  %v2559 = vadd.f32 0.0, %v2558
  %2560 = vmatprep.mubr.f32.mxu0 0.0
  %2561 = vmatmul.mubr.f32.gmra.mxu0 %v2256
  %v2562 = vpop.f32.mrf.mxu0
  %v2563 = vadd.f32 0.0, %v2562
  %v2564 = vpop.f32.mrf.mxu0
  %v2565 = vadd.f32 0.0, %v2564
  %2566 = vmatprep.mubr.f32.mxu0 0.0
  %2567 = vmatmul.mubr.f32.gmra.mxu0 %v2258
  %v2568 = vpop.f32.mrf.mxu0
  %v2569 = vadd.f32 0.0, %v2568
  %v2570 = vpop.f32.mrf.mxu0
  %v2571 = vadd.f32 0.0, %v2570
  %2572 = vmatprep.mubr.f32.mxu0 0.0
  %2573 = vmatmul.mubr.f32.gmra.mxu0 %v2260
  %v2574 = vpop.f32.mrf.mxu0
  %v2575 = vadd.f32 0.0, %v2574
  %v2576 = vpop.f32.mrf.mxu0
  %v2577 = vadd.f32 0.0, %v2576
  %2578 = vmatprep.mubr.f32.mxu0 0.0
  %2579 = vmatmul.mubr.f32.gmra.mxu0 %v2262
  %v2580 = vpop.f32.mrf.mxu0
  %v2581 = vadd.f32 0.0, %v2580
  %v2582 = vpop.f32.mrf.mxu0
  %v2583 = vadd.f32 0.0, %v2582
  %2584 = vmatprep.mubr.f32.mxu0 0.0
  %2585 = vmatmul.mubr.f32.gmra.mxu0 %v2264
  %v2586 = vpop.f32.mrf.mxu0
  %v2587 = vadd.f32 0.0, %v2586
  %v2588 = vpop.f32.mrf.mxu0
  %v2589 = vadd.f32 0.0, %v2588
  %2590 = vmatprep.mubr.f32.mxu0 0.0
  %2591 = vmatmul.mubr.f32.gmra.mxu0 %v2488
  %v2592 = vpop.f32.mrf.mxu0
  %v2593 = vadd.f32 0.0, %v2592
  %v2594 = vpop.f32.mrf.mxu0
  %v2595 = vadd.f32 0.0, %v2594
  %2596 = vdwg.mxu0
  %2597 = vmatprep.subr.mxu0 0.0
  %2598 = vmatpush1.msra.mxu0 0.0
  %2599 = vmatprep.subr.mxu0 0.0
  %2600 = vmatpush1.msra.mxu0 0.0
  %2601 = vmatprep.subr.mxu0 0.0
  %2602 = vmatpush1.msra.mxu0 0.0
  %2603 = vmatprep.subr.mxu0 0.0
  %2604 = vmatpush1.msra.mxu0 0.0
  %2605 = vmatprep.subr.mxu0 0.0
  %2606 = vmatpush1.msra.mxu0 0.0
  %2607 = vmatprep.subr.mxu0 0.0
  %2608 = vmatpush1.msra.mxu0 0.0
  %2609 = vmatprep.subr.mxu0 0.0
  %2610 = vmatpush1.msra.mxu0 0.0
  %2611 = vmatprep.subr.mxu0 0.0
  %2612 = vmatpush1.msra.mxu0 0.0
  %2613 = vmatprep.subr.mxu0 0.0
  %2614 = vmatpush1.msra.mxu0 0.0
  %2615 = vmatprep.subr.mxu0 0.0
  %2616 = vmatpush1.msra.mxu0 0.0
  %2617 = vmatprep.subr.mxu0 0.0
  %2618 = vmatpush1.msra.mxu0 0.0
  %2619 = vmatprep.subr.mxu0 0.0
  %2620 = vmatpush1.msra.mxu0 0.0
  %2621 = vmatprep.subr.mxu0 0.0
  %2622 = vmatpush1.msra.mxu0 0.0
  %2623 = vmatprep.subr.mxu0 0.0
  %2624 = vmatpush1.msra.mxu0 0.0
  %2625 = vmatprep.subr.mxu0 %v2487
  %2626 = vmatpush1.msra.mxu0 %v2486
  %2627 = vmatprep.subr.mxu0 %v2483
  %2628 = vmatpush1.msra.mxu0 %v2482
  %2629 = vmatprep.subr.mxu0 0.0
  %2630 = vmatpush2.msra.mxu0 0.0
  %2631 = vmatprep.subr.mxu0 0.0
  %2632 = vmatpush2.msra.mxu0 0.0
  %2633 = vmatprep.subr.mxu0 0.0
  %2634 = vmatpush2.msra.mxu0 0.0
  %2635 = vmatprep.subr.mxu0 0.0
  %2636 = vmatpush2.msra.mxu0 0.0
  %2637 = vmatprep.subr.mxu0 0.0
  %2638 = vmatpush2.msra.mxu0 0.0
  %2639 = vmatprep.subr.mxu0 0.0
  %2640 = vmatpush2.msra.mxu0 0.0
  %2641 = vmatprep.subr.mxu0 0.0
  %2642 = vmatpush2.msra.mxu0 0.0
  %2643 = vmatprep.subr.mxu0 0.0
  %2644 = vmatpush2.msra.mxu0 0.0
  %2645 = vmatprep.subr.mxu0 0.0
  %2646 = vmatpush2.msra.mxu0 0.0
  %2647 = vmatprep.subr.mxu0 0.0
  %2648 = vmatpush2.msra.mxu0 0.0
  %2649 = vmatprep.subr.mxu0 0.0
  %2650 = vmatpush2.msra.mxu0 0.0
  %2651 = vmatprep.subr.mxu0 0.0
  %2652 = vmatpush2.msra.mxu0 0.0
  %2653 = vmatprep.subr.mxu0 0.0
  %2654 = vmatpush2.msra.mxu0 0.0
  %2655 = vmatprep.subr.mxu0 0.0
  %2656 = vmatpush2.msra.mxu0 0.0
  %2657 = vmatprep.subr.mxu0 0.0
  %2658 = vmatpush2.msra.mxu0 0.0
  %2659 = vmatprep.subr.mxu0 0.0
  %2660 = vmatpush2.msra.mxu0 0.0
  %2661 = vmatprep.mubr.f32.mxu0 0.0
  %2662 = vmatmul.mubr.f32.gmra.mxu0 %v2254
  %v2663 = vpop.f32.mrf.mxu0
  %v2664 = vadd.f32 0.0, %v2663
  %v2665 = vpop.f32.mrf.mxu0
  %v2666 = vadd.f32 0.0, %v2665
  %2667 = vmatprep.mubr.f32.mxu0 0.0
  %2668 = vmatmul.mubr.f32.gmra.mxu0 %v2256
  %v2669 = vpop.f32.mrf.mxu0
  %v2670 = vadd.f32 0.0, %v2669
  %v2671 = vpop.f32.mrf.mxu0
  %v2672 = vadd.f32 0.0, %v2671
  %2673 = vmatprep.mubr.f32.mxu0 0.0
  %2674 = vmatmul.mubr.f32.gmra.mxu0 %v2258
  %v2675 = vpop.f32.mrf.mxu0
  %v2676 = vadd.f32 0.0, %v2675
  %v2677 = vpop.f32.mrf.mxu0
  %v2678 = vadd.f32 0.0, %v2677
  %2679 = vmatprep.mubr.f32.mxu0 0.0
  %2680 = vmatmul.mubr.f32.gmra.mxu0 %v2260
  %v2681 = vpop.f32.mrf.mxu0
  %v2682 = vadd.f32 0.0, %v2681
  %v2683 = vpop.f32.mrf.mxu0
  %v2684 = vadd.f32 0.0, %v2683
  %2685 = vmatprep.mubr.f32.mxu0 0.0
  %2686 = vmatmul.mubr.f32.gmra.mxu0 %v2262
  %v2687 = vpop.f32.mrf.mxu0
  %v2688 = vadd.f32 0.0, %v2687
  %v2689 = vpop.f32.mrf.mxu0
  %v2690 = vadd.f32 0.0, %v2689
  %2691 = vmatprep.mubr.f32.mxu0 0.0
  %2692 = vmatmul.mubr.f32.gmra.mxu0 %v2264
  %v2693 = vpop.f32.mrf.mxu0
  %v2694 = vadd.f32 0.0, %v2693
  %v2695 = vpop.f32.mrf.mxu0
  %v2696 = vadd.f32 0.0, %v2695
  %2697 = vmatprep.mubr.f32.mxu0 0.0
  %2698 = vmatmul.mubr.f32.gmra.mxu0 %v2488
  %v2699 = vpop.f32.mrf.mxu0
  %v2700 = vadd.f32 0.0, %v2699
  %v2701 = vpop.f32.mrf.mxu0
  %v2702 = vadd.f32 0.0, %v2701
  %2703 = vdwg.mxu0
  %v2704 = vadd.f32 %v2333, %v2557
  %v2705 = vadd.f32 %v2335, %v2559
  %v2706 = vadd.f32 %v2440, %v2664
  %v2707 = vadd.f32 %v2442, %v2666
  %v2708 = vadd.f32 %v2339, %v2563
  %v2709 = vadd.f32 %v2341, %v2565
  %v2710 = vadd.f32 %v2446, %v2670
  %v2711 = vadd.f32 %v2448, %v2672
  %v2712 = vadd.f32 %v2345, %v2569
  %v2713 = vadd.f32 %v2347, %v2571
  %v2714 = vadd.f32 %v2452, %v2676
  %v2715 = vadd.f32 %v2454, %v2678
  %v2716 = vadd.f32 %v2351, %v2575
  %v2717 = vadd.f32 %v2353, %v2577
  %v2718 = vadd.f32 %v2458, %v2682
  %v2719 = vadd.f32 %v2460, %v2684
  %v2720 = vadd.f32 %v2357, %v2581
  %v2721 = vadd.f32 %v2359, %v2583
  %v2722 = vadd.f32 %v2464, %v2688
  %v2723 = vadd.f32 %v2466, %v2690
  %v2724 = vadd.f32 %v2363, %v2587
  %v2725 = vadd.f32 %v2365, %v2589
  %v2726 = vadd.f32 %v2470, %v2694
  %v2727 = vadd.f32 %v2472, %v2696
  %v2728 = vadd.f32 %v2369, %v2593
  %v2729 = vadd.f32 %v2371, %v2595
  %v2730 = vadd.f32 %v2476, %v2700
  %v2731 = vadd.f32 %v2478, %v2702
  %v2732 = vld [vmem:[%s780] sm:$0xff]
  %v2733 = vld [vmem:[%s780 + $0x8] sm:$0xff]
  %v2734 = vld [vmem:[%s780 + $0x10] sm:$0xff]
  %v2735 = vld [vmem:[%s780 + $0x18] sm:$0xff]
  %v2736 = vld [vmem:[%s780 + $0x20] sm:$0xff]
  %v2737 = vld [vmem:[%s780 + $0x28] sm:$0xff]
  %v2738 = vld [vmem:[%s780 + $0x30] sm:$0xff]
  %v2739 = vld [vmem:[%s780 + $0x38] sm:$0xff]
  %v2741 = vrot.slane %v1984, 1
  %v2742 = vsel %vm54, %v2022, %v2741
  %v2743 = vsel %vm70, %v2742, 0
  %2745 = vmatprep.subr.mxu0 0.0
  %2746 = vmatpush1.msra.mxu0 0.0
  %2747 = vmatprep.subr.mxu0 0.0
  %2748 = vmatpush1.msra.mxu0 0.0
  %2749 = vmatprep.subr.mxu0 0.0
  %2750 = vmatpush1.msra.mxu0 0.0
  %2751 = vmatprep.subr.mxu0 0.0
  %2752 = vmatpush1.msra.mxu0 0.0
  %2753 = vmatprep.subr.mxu0 0.0
  %2754 = vmatpush1.msra.mxu0 0.0
  %2755 = vmatprep.subr.mxu0 0.0
  %2756 = vmatpush1.msra.mxu0 0.0
  %2757 = vmatprep.subr.mxu0 0.0
  %2758 = vmatpush1.msra.mxu0 0.0
  %2759 = vmatprep.subr.mxu0 0.0
  %2760 = vmatpush1.msra.mxu0 0.0
  %2761 = vmatprep.subr.mxu0 0.0
  %2762 = vmatpush1.msra.mxu0 0.0
  %2763 = vmatprep.subr.mxu0 0.0
  %2764 = vmatpush1.msra.mxu0 0.0
  %2765 = vmatprep.subr.mxu0 0.0
  %2766 = vmatpush1.msra.mxu0 0.0
  %2767 = vmatprep.subr.mxu0 0.0
  %2768 = vmatpush1.msra.mxu0 0.0
  %2769 = vmatprep.subr.mxu0 0.0
  %2770 = vmatpush1.msra.mxu0 0.0
  %2771 = vmatprep.subr.mxu0 0.0
  %2772 = vmatpush1.msra.mxu0 0.0
  %2773 = vmatprep.subr.mxu0 %v2737
  %2774 = vmatpush1.msra.mxu0 %v2736
  %2775 = vmatprep.subr.mxu0 %v2733
  %2776 = vmatpush1.msra.mxu0 %v2732
  %2777 = vmatprep.subr.mxu0 0.0
  %2778 = vmatpush2.msra.mxu0 0.0
  %2779 = vmatprep.subr.mxu0 0.0
  %2780 = vmatpush2.msra.mxu0 0.0
  %2781 = vmatprep.subr.mxu0 0.0
  %2782 = vmatpush2.msra.mxu0 0.0
  %2783 = vmatprep.subr.mxu0 0.0
  %2784 = vmatpush2.msra.mxu0 0.0
  %2785 = vmatprep.subr.mxu0 0.0
  %2786 = vmatpush2.msra.mxu0 0.0
  %2787 = vmatprep.subr.mxu0 0.0
  %2788 = vmatpush2.msra.mxu0 0.0
  %2789 = vmatprep.subr.mxu0 0.0
  %2790 = vmatpush2.msra.mxu0 0.0
  %2791 = vmatprep.subr.mxu0 0.0
  %2792 = vmatpush2.msra.mxu0 0.0
  %2793 = vmatprep.subr.mxu0 0.0
  %2794 = vmatpush2.msra.mxu0 0.0
  %2795 = vmatprep.subr.mxu0 0.0
  %2796 = vmatpush2.msra.mxu0 0.0
  %2797 = vmatprep.subr.mxu0 0.0
  %2798 = vmatpush2.msra.mxu0 0.0
  %2799 = vmatprep.subr.mxu0 0.0
  %2800 = vmatpush2.msra.mxu0 0.0
  %2801 = vmatprep.subr.mxu0 0.0
  %2802 = vmatpush2.msra.mxu0 0.0
  %2803 = vmatprep.subr.mxu0 0.0
  %2804 = vmatpush2.msra.mxu0 0.0
  %2805 = vmatprep.subr.mxu0 0.0
  %2806 = vmatpush2.msra.mxu0 0.0
  %2807 = vmatprep.subr.mxu0 0.0
  %2808 = vmatpush2.msra.mxu0 0.0
  %2809 = vmatprep.mubr.f32.mxu0 0.0
  %2810 = vmatmul.mubr.f32.gmra.mxu0 %v2026
  %v2811 = vpop.f32.mrf.mxu0
  %v2812 = vadd.f32 0.0, %v2811
  %v2813 = vpop.f32.mrf.mxu0
  %v2814 = vadd.f32 0.0, %v2813
  %2815 = vmatprep.mubr.f32.mxu0 0.0
  %2816 = vmatmul.mubr.f32.gmra.mxu0 %v2028
  %v2817 = vpop.f32.mrf.mxu0
  %v2818 = vadd.f32 0.0, %v2817
  %v2819 = vpop.f32.mrf.mxu0
  %v2820 = vadd.f32 0.0, %v2819
  %2821 = vmatprep.mubr.f32.mxu0 0.0
  %2822 = vmatmul.mubr.f32.gmra.mxu0 %v2030
  %v2823 = vpop.f32.mrf.mxu0
  %v2824 = vadd.f32 0.0, %v2823
  %v2825 = vpop.f32.mrf.mxu0
  %v2826 = vadd.f32 0.0, %v2825
  %2827 = vmatprep.mubr.f32.mxu0 0.0
  %2828 = vmatmul.mubr.f32.gmra.mxu0 %v2032
  %v2829 = vpop.f32.mrf.mxu0
  %v2830 = vadd.f32 0.0, %v2829
  %v2831 = vpop.f32.mrf.mxu0
  %v2832 = vadd.f32 0.0, %v2831
  %2833 = vmatprep.mubr.f32.mxu0 0.0
  %2834 = vmatmul.mubr.f32.gmra.mxu0 %v2034
  %v2835 = vpop.f32.mrf.mxu0
  %v2836 = vadd.f32 0.0, %v2835
  %v2837 = vpop.f32.mrf.mxu0
  %v2838 = vadd.f32 0.0, %v2837
  %2839 = vmatprep.mubr.f32.mxu0 0.0
  %2840 = vmatmul.mubr.f32.gmra.mxu0 %v2036
  %v2841 = vpop.f32.mrf.mxu0
  %v2842 = vadd.f32 0.0, %v2841
  %v2843 = vpop.f32.mrf.mxu0
  %v2844 = vadd.f32 0.0, %v2843
  %2845 = vmatprep.mubr.f32.mxu0 0.0
  %2846 = vmatmul.mubr.f32.gmra.mxu0 %v2743
  %v2847 = vpop.f32.mrf.mxu0
  %v2848 = vadd.f32 0.0, %v2847
  %v2849 = vpop.f32.mrf.mxu0
  %v2850 = vadd.f32 0.0, %v2849
  %2851 = vdwg.mxu0
  %2852 = vmatprep.subr.mxu0 0.0
  %2853 = vmatpush1.msra.mxu0 0.0
  %2854 = vmatprep.subr.mxu0 0.0
  %2855 = vmatpush1.msra.mxu0 0.0
  %2856 = vmatprep.subr.mxu0 0.0
  %2857 = vmatpush1.msra.mxu0 0.0
  %2858 = vmatprep.subr.mxu0 0.0
  %2859 = vmatpush1.msra.mxu0 0.0
  %2860 = vmatprep.subr.mxu0 0.0
  %2861 = vmatpush1.msra.mxu0 0.0
  %2862 = vmatprep.subr.mxu0 0.0
  %2863 = vmatpush1.msra.mxu0 0.0
  %2864 = vmatprep.subr.mxu0 0.0
  %2865 = vmatpush1.msra.mxu0 0.0
  %2866 = vmatprep.subr.mxu0 0.0
  %2867 = vmatpush1.msra.mxu0 0.0
  %2868 = vmatprep.subr.mxu0 0.0
  %2869 = vmatpush1.msra.mxu0 0.0
  %2870 = vmatprep.subr.mxu0 0.0
  %2871 = vmatpush1.msra.mxu0 0.0
  %2872 = vmatprep.subr.mxu0 0.0
  %2873 = vmatpush1.msra.mxu0 0.0
  %2874 = vmatprep.subr.mxu0 0.0
  %2875 = vmatpush1.msra.mxu0 0.0
  %2876 = vmatprep.subr.mxu0 0.0
  %2877 = vmatpush1.msra.mxu0 0.0
  %2878 = vmatprep.subr.mxu0 0.0
  %2879 = vmatpush1.msra.mxu0 0.0
  %2880 = vmatprep.subr.mxu0 %v2739
  %2881 = vmatpush1.msra.mxu0 %v2738
  %2882 = vmatprep.subr.mxu0 %v2735
  %2883 = vmatpush1.msra.mxu0 %v2734
  %2884 = vmatprep.subr.mxu0 0.0
  %2885 = vmatpush2.msra.mxu0 0.0
  %2886 = vmatprep.subr.mxu0 0.0
  %2887 = vmatpush2.msra.mxu0 0.0
  %2888 = vmatprep.subr.mxu0 0.0
  %2889 = vmatpush2.msra.mxu0 0.0
  %2890 = vmatprep.subr.mxu0 0.0
  %2891 = vmatpush2.msra.mxu0 0.0
  %2892 = vmatprep.subr.mxu0 0.0
  %2893 = vmatpush2.msra.mxu0 0.0
  %2894 = vmatprep.subr.mxu0 0.0
  %2895 = vmatpush2.msra.mxu0 0.0
  %2896 = vmatprep.subr.mxu0 0.0
  %2897 = vmatpush2.msra.mxu0 0.0
  %2898 = vmatprep.subr.mxu0 0.0
  %2899 = vmatpush2.msra.mxu0 0.0
  %2900 = vmatprep.subr.mxu0 0.0
  %2901 = vmatpush2.msra.mxu0 0.0
  %2902 = vmatprep.subr.mxu0 0.0
  %2903 = vmatpush2.msra.mxu0 0.0
  %2904 = vmatprep.subr.mxu0 0.0
  %2905 = vmatpush2.msra.mxu0 0.0
  %2906 = vmatprep.subr.mxu0 0.0
  %2907 = vmatpush2.msra.mxu0 0.0
  %2908 = vmatprep.subr.mxu0 0.0
  %2909 = vmatpush2.msra.mxu0 0.0
  %2910 = vmatprep.subr.mxu0 0.0
  %2911 = vmatpush2.msra.mxu0 0.0
  %2912 = vmatprep.subr.mxu0 0.0
  %2913 = vmatpush2.msra.mxu0 0.0
  %2914 = vmatprep.subr.mxu0 0.0
  %2915 = vmatpush2.msra.mxu0 0.0
  %2916 = vmatprep.mubr.f32.mxu0 0.0
  %2917 = vmatmul.mubr.f32.gmra.mxu0 %v2026
  %v2918 = vpop.f32.mrf.mxu0
  %v2919 = vadd.f32 0.0, %v2918
  %v2920 = vpop.f32.mrf.mxu0
  %v2921 = vadd.f32 0.0, %v2920
  %2922 = vmatprep.mubr.f32.mxu0 0.0
  %2923 = vmatmul.mubr.f32.gmra.mxu0 %v2028
  %v2924 = vpop.f32.mrf.mxu0
  %v2925 = vadd.f32 0.0, %v2924
  %v2926 = vpop.f32.mrf.mxu0
  %v2927 = vadd.f32 0.0, %v2926
  %2928 = vmatprep.mubr.f32.mxu0 0.0
  %2929 = vmatmul.mubr.f32.gmra.mxu0 %v2030
  %v2930 = vpop.f32.mrf.mxu0
  %v2931 = vadd.f32 0.0, %v2930
  %v2932 = vpop.f32.mrf.mxu0
  %v2933 = vadd.f32 0.0, %v2932
  %2934 = vmatprep.mubr.f32.mxu0 0.0
  %2935 = vmatmul.mubr.f32.gmra.mxu0 %v2032
  %v2936 = vpop.f32.mrf.mxu0
  %v2937 = vadd.f32 0.0, %v2936
  %v2938 = vpop.f32.mrf.mxu0
  %v2939 = vadd.f32 0.0, %v2938
  %2940 = vmatprep.mubr.f32.mxu0 0.0
  %2941 = vmatmul.mubr.f32.gmra.mxu0 %v2034
  %v2942 = vpop.f32.mrf.mxu0
  %v2943 = vadd.f32 0.0, %v2942
  %v2944 = vpop.f32.mrf.mxu0
  %v2945 = vadd.f32 0.0, %v2944
  %2946 = vmatprep.mubr.f32.mxu0 0.0
  %2947 = vmatmul.mubr.f32.gmra.mxu0 %v2036
  %v2948 = vpop.f32.mrf.mxu0
  %v2949 = vadd.f32 0.0, %v2948
  %v2950 = vpop.f32.mrf.mxu0
  %v2951 = vadd.f32 0.0, %v2950
  %2952 = vmatprep.mubr.f32.mxu0 0.0
  %2953 = vmatmul.mubr.f32.gmra.mxu0 %v2743
  %v2954 = vpop.f32.mrf.mxu0
  %v2955 = vadd.f32 0.0, %v2954
  %v2956 = vpop.f32.mrf.mxu0
  %v2957 = vadd.f32 0.0, %v2956
  %2958 = vdwg.mxu0
  %v2959 = vadd.f32 %v2704, %v2812
  %v2960 = vadd.f32 %v2705, %v2814
  %v2961 = vadd.f32 %v2706, %v2919
  %v2962 = vadd.f32 %v2707, %v2921
  %v2963 = vadd.f32 %v2708, %v2818
  %v2964 = vadd.f32 %v2709, %v2820
  %v2965 = vadd.f32 %v2710, %v2925
  %v2966 = vadd.f32 %v2711, %v2927
  %v2967 = vadd.f32 %v2712, %v2824
  %v2968 = vadd.f32 %v2713, %v2826
  %v2969 = vadd.f32 %v2714, %v2931
  %v2970 = vadd.f32 %v2715, %v2933
  %v2971 = vadd.f32 %v2716, %v2830
  %v2972 = vadd.f32 %v2717, %v2832
  %v2973 = vadd.f32 %v2718, %v2937
  %v2974 = vadd.f32 %v2719, %v2939
  %v2975 = vadd.f32 %v2720, %v2836
  %v2976 = vadd.f32 %v2721, %v2838
  %v2977 = vadd.f32 %v2722, %v2943
  %v2978 = vadd.f32 %v2723, %v2945
  %v2979 = vadd.f32 %v2724, %v2842
  %v2980 = vadd.f32 %v2725, %v2844
  %v2981 = vadd.f32 %v2726, %v2949
  %v2982 = vadd.f32 %v2727, %v2951
  %v2983 = vadd.f32 %v2728, %v2848
  %v2984 = vadd.f32 %v2729, %v2850
  %v2985 = vadd.f32 %v2730, %v2955
  %v2986 = vadd.f32 %v2731, %v2957
  %v2987 = vld [vmem:[%s2] sm:$0xf]
  %v2989 = vlaneseq
  %v2990 = vshrl.u32 %v2989, 7
  %v2991 = vsub.s32 0, %v2990
  %v2992 = vrot.slane %v2987, %v2991
  %v2993 = vlaneseq
  %v2994 = vshrl.u32 %v2993, 7
  %v2995 = vsub.s32 1, %v2994
  %v2996 = vrot.slane %v2987, %v2995
  %v2997 = vlaneseq
  %v2998 = vshrl.u32 %v2997, 7
  %v2999 = vsub.s32 2, %v2998
  %v3000 = vrot.slane %v2987, %v2999
  %v3001 = vlaneseq
  %v3002 = vshrl.u32 %v3001, 7
  %v3003 = vsub.s32 3, %v3002
  %v3004 = vrot.slane %v2987, %v3003
  %v3009 = vadd.f32 %v2959, %v2992
  %v3010 = vadd.f32 %v2960, %v2996
  %v3011 = vadd.f32 %v2961, %v3000
  %v3012 = vadd.f32 %v2962, %v3004
  %v3013 = vadd.f32 %v2963, %v2992
  %v3014 = vadd.f32 %v2964, %v2996
  %v3015 = vadd.f32 %v2965, %v3000
  %v3016 = vadd.f32 %v2966, %v3004
  %v3017 = vadd.f32 %v2967, %v2992
  %v3018 = vadd.f32 %v2968, %v2996
  %v3019 = vadd.f32 %v2969, %v3000
  %v3020 = vadd.f32 %v2970, %v3004
  %v3021 = vadd.f32 %v2971, %v2992
  %v3022 = vadd.f32 %v2972, %v2996
  %v3023 = vadd.f32 %v2973, %v3000
  %v3024 = vadd.f32 %v2974, %v3004
  %v3025 = vadd.f32 %v2975, %v2992
  %v3026 = vadd.f32 %v2976, %v2996
  %v3027 = vadd.f32 %v2977, %v3000
  %v3028 = vadd.f32 %v2978, %v3004
  %v3029 = vadd.f32 %v2979, %v2992
  %v3030 = vadd.f32 %v2980, %v2996
  %v3031 = vadd.f32 %v2981, %v3000
  %v3032 = vadd.f32 %v2982, %v3004
  %v3033 = vadd.f32 %v2983, %v2992
  %v3034 = vadd.f32 %v2984, %v2996
  %v3035 = vadd.f32 %v2985, %v3000
  %v3036 = vadd.f32 %v2986, %v3004
  %v3037 = vxor.u32 %v3009, 2147483648
  %v3038 = vxor.u32 %v3010, 2147483648
  %v3039 = vxor.u32 %v3011, 2147483648
  %v3040 = vxor.u32 %v3012, 2147483648
  %v3041 = vxor.u32 %v3013, 2147483648
  %v3042 = vxor.u32 %v3014, 2147483648
  %v3043 = vxor.u32 %v3015, 2147483648
  %v3044 = vxor.u32 %v3016, 2147483648
  %v3045 = vxor.u32 %v3017, 2147483648
  %v3046 = vxor.u32 %v3018, 2147483648
  %v3047 = vxor.u32 %v3019, 2147483648
  %v3048 = vxor.u32 %v3020, 2147483648
  %v3049 = vxor.u32 %v3021, 2147483648
  %v3050 = vxor.u32 %v3022, 2147483648
  %v3051 = vxor.u32 %v3023, 2147483648
  %v3052 = vxor.u32 %v3024, 2147483648
  %v3053 = vxor.u32 %v3025, 2147483648
  %v3054 = vxor.u32 %v3026, 2147483648
  %v3055 = vxor.u32 %v3027, 2147483648
  %v3056 = vxor.u32 %v3028, 2147483648
  %v3057 = vxor.u32 %v3029, 2147483648
  %v3058 = vxor.u32 %v3030, 2147483648
  %v3059 = vxor.u32 %v3031, 2147483648
  %v3060 = vxor.u32 %v3032, 2147483648
  %v3061 = vxor.u32 %v3033, 2147483648
  %v3062 = vxor.u32 %v3034, 2147483648
  %v3063 = vxor.u32 %v3035, 2147483648
  %v3064 = vxor.u32 %v3036, 2147483648
  %v3065 = vmul.f32 %v3037, 1.442695
  %v3066 = vpow.pop %v3065
  %v3067 = vmul.f32 %v3038, 1.442695
  %v3068 = vpow.pop %v3067
  %v3069 = vmul.f32 %v3039, 1.442695
  %v3070 = vpow.pop %v3069
  %v3071 = vmul.f32 %v3040, 1.442695
  %v3072 = vpow.pop %v3071
  %v3073 = vmul.f32 %v3041, 1.442695
  %v3074 = vpow.pop %v3073
  %v3075 = vmul.f32 %v3042, 1.442695
  %v3076 = vpow.pop %v3075
  %v3077 = vmul.f32 %v3043, 1.442695
  %v3078 = vpow.pop %v3077
  %v3079 = vmul.f32 %v3044, 1.442695
  %v3080 = vpow.pop %v3079
  %v3081 = vmul.f32 %v3045, 1.442695
  %v3082 = vpow.pop %v3081
  %v3083 = vmul.f32 %v3046, 1.442695
  %v3084 = vpow.pop %v3083
  %v3085 = vmul.f32 %v3047, 1.442695
  %v3086 = vpow.pop %v3085
  %v3087 = vmul.f32 %v3048, 1.442695
  %v3088 = vpow.pop %v3087
  %v3089 = vmul.f32 %v3049, 1.442695
  %v3090 = vpow.pop %v3089
  %v3091 = vmul.f32 %v3050, 1.442695
  %v3092 = vpow.pop %v3091
  %v3093 = vmul.f32 %v3051, 1.442695
  %v3094 = vpow.pop %v3093
  %v3095 = vmul.f32 %v3052, 1.442695
  %v3096 = vpow.pop %v3095
  %v3097 = vmul.f32 %v3053, 1.442695
  %v3098 = vpow.pop %v3097
  %v3099 = vmul.f32 %v3054, 1.442695
  %v3100 = vpow.pop %v3099
  %v3101 = vmul.f32 %v3055, 1.442695
  %v3102 = vpow.pop %v3101
  %v3103 = vmul.f32 %v3056, 1.442695
  %v3104 = vpow.pop %v3103
  %v3105 = vmul.f32 %v3057, 1.442695
  %v3106 = vpow.pop %v3105
  %v3107 = vmul.f32 %v3058, 1.442695
  %v3108 = vpow.pop %v3107
  %v3109 = vmul.f32 %v3059, 1.442695
  %v3110 = vpow.pop %v3109
  %v3111 = vmul.f32 %v3060, 1.442695
  %v3112 = vpow.pop %v3111
  %v3113 = vmul.f32 %v3061, 1.442695
  %v3114 = vpow.pop %v3113
  %v3115 = vmul.f32 %v3062, 1.442695
  %v3116 = vpow.pop %v3115
  %v3117 = vmul.f32 %v3063, 1.442695
  %v3118 = vpow.pop %v3117
  %v3119 = vmul.f32 %v3064, 1.442695
  %v3120 = vpow.pop %v3119
  %v3121 = vadd.f32 %v3066, 1.0
  %v3122 = vadd.f32 %v3068, 1.0
  %v3123 = vadd.f32 %v3070, 1.0
  %v3124 = vadd.f32 %v3072, 1.0
  %v3125 = vadd.f32 %v3074, 1.0
  %v3126 = vadd.f32 %v3076, 1.0
  %v3127 = vadd.f32 %v3078, 1.0
  %v3128 = vadd.f32 %v3080, 1.0
  %v3129 = vadd.f32 %v3082, 1.0
  %v3130 = vadd.f32 %v3084, 1.0
  %v3131 = vadd.f32 %v3086, 1.0
  %v3132 = vadd.f32 %v3088, 1.0
  %v3133 = vadd.f32 %v3090, 1.0
  %v3134 = vadd.f32 %v3092, 1.0
  %v3135 = vadd.f32 %v3094, 1.0
  %v3136 = vadd.f32 %v3096, 1.0
  %v3137 = vadd.f32 %v3098, 1.0
  %v3138 = vadd.f32 %v3100, 1.0
  %v3139 = vadd.f32 %v3102, 1.0
  %v3140 = vadd.f32 %v3104, 1.0
  %v3141 = vadd.f32 %v3106, 1.0
  %v3142 = vadd.f32 %v3108, 1.0
  %v3143 = vadd.f32 %v3110, 1.0
  %v3144 = vadd.f32 %v3112, 1.0
  %v3145 = vadd.f32 %v3114, 1.0
  %v3146 = vadd.f32 %v3116, 1.0
  %v3147 = vadd.f32 %v3118, 1.0
  %v3148 = vadd.f32 %v3120, 1.0
  %v3149 = vrcp.pop %v3121
  %v3150 = vmul.f32 1.0, %v3149
  %v3151 = vrcp.pop %v3122
  %v3152 = vmul.f32 1.0, %v3151
  %v3153 = vrcp.pop %v3123
  %v3154 = vmul.f32 1.0, %v3153
  %v3155 = vrcp.pop %v3124
  %v3156 = vmul.f32 1.0, %v3155
  %v3157 = vrcp.pop %v3125
  %v3158 = vmul.f32 1.0, %v3157
  %v3159 = vrcp.pop %v3126
  %v3160 = vmul.f32 1.0, %v3159
  %v3161 = vrcp.pop %v3127
  %v3162 = vmul.f32 1.0, %v3161
  %v3163 = vrcp.pop %v3128
  %v3164 = vmul.f32 1.0, %v3163
  %v3165 = vrcp.pop %v3129
  %v3166 = vmul.f32 1.0, %v3165
  %v3167 = vrcp.pop %v3130
  %v3168 = vmul.f32 1.0, %v3167
  %v3169 = vrcp.pop %v3131
  %v3170 = vmul.f32 1.0, %v3169
  %v3171 = vrcp.pop %v3132
  %v3172 = vmul.f32 1.0, %v3171
  %v3173 = vrcp.pop %v3133
  %v3174 = vmul.f32 1.0, %v3173
  %v3175 = vrcp.pop %v3134
  %v3176 = vmul.f32 1.0, %v3175
  %v3177 = vrcp.pop %v3135
  %v3178 = vmul.f32 1.0, %v3177
  %v3179 = vrcp.pop %v3136
  %v3180 = vmul.f32 1.0, %v3179
  %v3181 = vrcp.pop %v3137
  %v3182 = vmul.f32 1.0, %v3181
  %v3183 = vrcp.pop %v3138
  %v3184 = vmul.f32 1.0, %v3183
  %v3185 = vrcp.pop %v3139
  %v3186 = vmul.f32 1.0, %v3185
  %v3187 = vrcp.pop %v3140
  %v3188 = vmul.f32 1.0, %v3187
  %v3189 = vrcp.pop %v3141
  %v3190 = vmul.f32 1.0, %v3189
  %v3191 = vrcp.pop %v3142
  %v3192 = vmul.f32 1.0, %v3191
  %v3193 = vrcp.pop %v3143
  %v3194 = vmul.f32 1.0, %v3193
  %v3195 = vrcp.pop %v3144
  %v3196 = vmul.f32 1.0, %v3195
  %v3197 = vrcp.pop %v3145
  %v3198 = vmul.f32 1.0, %v3197
  %v3199 = vrcp.pop %v3146
  %v3200 = vmul.f32 1.0, %v3199
  %v3201 = vrcp.pop %v3147
  %v3202 = vmul.f32 1.0, %v3201
  %v3203 = vrcp.pop %v3148
  %v3204 = vmul.f32 1.0, %v3203
  %v3205 = vmax.f32 %v3150, %v3152
  %v3206 = vmax.f32 %v3158, %v3160
  %v3207 = vmax.f32 %v3166, %v3168
  %v3208 = vmax.f32 %v3174, %v3176
  %v3209 = vmax.f32 %v3182, %v3184
  %v3210 = vmax.f32 %v3190, %v3192
  %v3211 = vmax.f32 %v3198, %v3200
  %v3212 = vmax.f32 %v3154, %v3156
  %v3213 = vmax.f32 %v3162, %v3164
  %v3214 = vmax.f32 %v3170, %v3172
  %v3215 = vmax.f32 %v3178, %v3180
  %v3216 = vmax.f32 %v3186, %v3188
  %v3217 = vmax.f32 %v3194, %v3196
  %v3218 = vmax.f32 %v3202, %v3204
  %v3219 = vmax.f32 %v3205, %v3212
  %v3220 = vmax.f32 %v3206, %v3213
  %v3221 = vmax.f32 %v3207, %v3214
  %v3222 = vmax.f32 %v3208, %v3215
  %v3223 = vmax.f32 %v3209, %v3216
  %v3224 = vmax.f32 %v3210, %v3217
  %v3225 = vmax.f32 %v3211, %v3218
  %v3226 = vld [vmem:[%s3] sm:$0xff]
  %v3227 = vld [vmem:[%s3 + $0x8] sm:$0xff]
  %v3228 = vld [vmem:[%s3 + $0x10] sm:$0xff]
  %v3229 = vld [vmem:[%s3 + $0x18] sm:$0xff]
  %v3230 = vld [vmem:[%s3 + $0x20] sm:$0xff]
  %v3231 = vld [vmem:[%s3 + $0x28] sm:$0xff]
  %v3232 = vld [vmem:[%s3 + $0x30] sm:$0xff]
  %v3233 = vld [vmem:[%s3 + $0x38] sm:$0xff]
  %v3234 = vld [vmem:[%s3 + $0x40] sm:$0xff]
  %v3235 = vld [vmem:[%s3 + $0x48] sm:$0xff]
  %v3236 = vld [vmem:[%s3 + $0x50] sm:$0xff]
  %v3237 = vld [vmem:[%s3 + $0x58] sm:$0xff]
  %v3238 = vld [vmem:[%s3 + $0x60] sm:$0xff]
  %v3239 = vld [vmem:[%s3 + $0x68] sm:$0xff]
  %v3240 = vld [vmem:[%s3 + $0x70] sm:$0xff]
  %v3241 = vld [vmem:[%s3 + $0x78] sm:$0xff]
  %v3242 = vld [vmem:[%s3 + $0x80] sm:$0xff]
  %v3243 = vld [vmem:[%s3 + $0x88] sm:$0xff]
  %v3244 = vld [vmem:[%s3 + $0x90] sm:$0xff]
  %v3245 = vld [vmem:[%s3 + $0x98] sm:$0xff]
  %v3246 = vld [vmem:[%s3 + $0xa0] sm:$0xff]
  %v3247 = vld [vmem:[%s3 + $0xa8] sm:$0xff]
  %v3248 = vld [vmem:[%s3 + $0xb0] sm:$0xff]
  %v3249 = vld [vmem:[%s3 + $0xb8] sm:$0xff]
  %v3250 = vld [vmem:[%s3 + $0xc0] sm:$0xff]
  %v3251 = vld [vmem:[%s3 + $0xc8] sm:$0xff]
  %v3252 = vld [vmem:[%s3 + $0xd0] sm:$0xff]
  %v3253 = vld [vmem:[%s3 + $0xd8] sm:$0xff]
  %v3254 = vld [vmem:[%s3 + $0xe0] sm:$0xff]
  %v3255 = vld [vmem:[%s3 + $0xe8] sm:$0xff]
  %v3256 = vld [vmem:[%s3 + $0xf0] sm:$0xff]
  %v3257 = vld [vmem:[%s3 + $0xf8] sm:$0xff]
  %v3258 = vld [vmem:[%s1307] sm:$0xff]
  %v3259 = vld [vmem:[%s1307 + $0x8] sm:$0xff]
  %v3260 = vld [vmem:[%s1307 + $0x10] sm:$0xff]
  %v3261 = vld [vmem:[%s1307 + $0x18] sm:$0xff]
  %v3262 = vld [vmem:[%s1307 + $0x20] sm:$0xff]
  %v3263 = vld [vmem:[%s1307 + $0x28] sm:$0xff]
  %v3264 = vld [vmem:[%s1307 + $0x30] sm:$0xff]
  %v3265 = vld [vmem:[%s1307 + $0x38] sm:$0xff]
  %v3266 = vld [vmem:[%s1307 + $0x40] sm:$0xff]
  %v3267 = vld [vmem:[%s1307 + $0x48] sm:$0xff]
  %v3268 = vld [vmem:[%s1307 + $0x50] sm:$0xff]
  %v3269 = vld [vmem:[%s1307 + $0x58] sm:$0xff]
  %v3270 = vld [vmem:[%s1307 + $0x60] sm:$0xff]
  %v3271 = vld [vmem:[%s1307 + $0x68] sm:$0xff]
  %v3272 = vld [vmem:[%s1307 + $0x70] sm:$0xff]
  %v3273 = vld [vmem:[%s1307 + $0x78] sm:$0xff]
  %v3274 = vld [vmem:[%s1307 + $0x80] sm:$0xff]
  %v3275 = vld [vmem:[%s1307 + $0x88] sm:$0xff]
  %v3276 = vld [vmem:[%s1307 + $0x90] sm:$0xff]
  %v3277 = vld [vmem:[%s1307 + $0x98] sm:$0xff]
  %v3278 = vld [vmem:[%s1307 + $0xa0] sm:$0xff]
  %v3279 = vld [vmem:[%s1307 + $0xa8] sm:$0xff]
  %v3280 = vld [vmem:[%s1307 + $0xb0] sm:$0xff]
  %v3281 = vld [vmem:[%s1307 + $0xb8] sm:$0xff]
  %v3282 = vld [vmem:[%s1307 + $0xc0] sm:$0xff]
  %v3283 = vld [vmem:[%s1307 + $0xc8] sm:$0xff]
  %v3284 = vld [vmem:[%s1307 + $0xd0] sm:$0xff]
  %v3285 = vld [vmem:[%s1307 + $0xd8] sm:$0xff]
  %v3286 = vld [vmem:[%s1307 + $0xe0] sm:$0xff]
  %v3287 = vld [vmem:[%s1307 + $0xe8] sm:$0xff]
  %v3288 = vld [vmem:[%s1307 + $0xf0] sm:$0xff]
  %v3289 = vld [vmem:[%s1307 + $0xf8] sm:$0xff]
  %v3296 = vrot.slane %v3219, 1
  %v3297 = vrot.slane %v3220, 1
  %v3298 = vsel %vm54, %v3296, %v3297
  %v3299 = vrot.slane %v3221, 1
  %v3300 = vsel %vm54, %v3297, %v3299
  %v3301 = vrot.slane %v3222, 1
  %v3302 = vsel %vm54, %v3299, %v3301
  %v3303 = vrot.slane %v3223, 1
  %v3304 = vsel %vm54, %v3301, %v3303
  %v3305 = vrot.slane %v3224, 1
  %v3306 = vsel %vm54, %v3303, %v3305
  %3312 = vmatprep.subr.mxu0 %v3289
  %3313 = vmatpush1.msra.mxu0 %v3288
  %3314 = vmatprep.subr.mxu0 %v3287
  %3315 = vmatpush1.msra.mxu0 %v3286
  %3316 = vmatprep.subr.mxu0 %v3285
  %3317 = vmatpush1.msra.mxu0 %v3284
  %3318 = vmatprep.subr.mxu0 %v3283
  %3319 = vmatpush1.msra.mxu0 %v3282
  %3320 = vmatprep.subr.mxu0 %v3281
  %3321 = vmatpush1.msra.mxu0 %v3280
  %3322 = vmatprep.subr.mxu0 %v3279
  %3323 = vmatpush1.msra.mxu0 %v3278
  %3324 = vmatprep.subr.mxu0 %v3277
  %3325 = vmatpush1.msra.mxu0 %v3276
  %3326 = vmatprep.subr.mxu0 %v3275
  %3327 = vmatpush1.msra.mxu0 %v3274
  %3328 = vmatprep.subr.mxu0 %v3273
  %3329 = vmatpush1.msra.mxu0 %v3272
  %3330 = vmatprep.subr.mxu0 %v3271
  %3331 = vmatpush1.msra.mxu0 %v3270
  %3332 = vmatprep.subr.mxu0 %v3269
  %3333 = vmatpush1.msra.mxu0 %v3268
  %3334 = vmatprep.subr.mxu0 %v3267
  %3335 = vmatpush1.msra.mxu0 %v3266
  %3336 = vmatprep.subr.mxu0 %v3265
  %3337 = vmatpush1.msra.mxu0 %v3264
  %3338 = vmatprep.subr.mxu0 %v3263
  %3339 = vmatpush1.msra.mxu0 %v3262
  %3340 = vmatprep.subr.mxu0 %v3261
  %3341 = vmatpush1.msra.mxu0 %v3260
  %3342 = vmatprep.subr.mxu0 %v3259
  %3343 = vmatpush1.msra.mxu0 %v3258
  %3344 = vmatprep.subr.mxu0 0.0
  %3345 = vmatpush2.msra.mxu0 0.0
  %3346 = vmatprep.subr.mxu0 0.0
  %3347 = vmatpush2.msra.mxu0 0.0
  %3348 = vmatprep.subr.mxu0 0.0
  %3349 = vmatpush2.msra.mxu0 0.0
  %3350 = vmatprep.subr.mxu0 0.0
  %3351 = vmatpush2.msra.mxu0 0.0
  %3352 = vmatprep.subr.mxu0 0.0
  %3353 = vmatpush2.msra.mxu0 0.0
  %3354 = vmatprep.subr.mxu0 0.0
  %3355 = vmatpush2.msra.mxu0 0.0
  %3356 = vmatprep.subr.mxu0 0.0
  %3357 = vmatpush2.msra.mxu0 0.0
  %3358 = vmatprep.subr.mxu0 0.0
  %3359 = vmatpush2.msra.mxu0 0.0
  %3360 = vmatprep.subr.mxu0 0.0
  %3361 = vmatpush2.msra.mxu0 0.0
  %3362 = vmatprep.subr.mxu0 0.0
  %3363 = vmatpush2.msra.mxu0 0.0
  %3364 = vmatprep.subr.mxu0 0.0
  %3365 = vmatpush2.msra.mxu0 0.0
  %3366 = vmatprep.subr.mxu0 0.0
  %3367 = vmatpush2.msra.mxu0 0.0
  %3368 = vmatprep.subr.mxu0 0.0
  %3369 = vmatpush2.msra.mxu0 0.0
  %3370 = vmatprep.subr.mxu0 0.0
  %3371 = vmatpush2.msra.mxu0 0.0
  %3372 = vmatprep.subr.mxu0 0.0
  %3373 = vmatpush2.msra.mxu0 0.0
  %3374 = vmatprep.subr.mxu0 0.0
  %3375 = vmatpush2.msra.mxu0 0.0
  %3376 = vmatprep.mubr.f32.mxu0 0.0
  %3377 = vmatmul.mubr.f32.gmra.mxu0 %v3298
  %v3378 = vpop.f32.mrf.mxu0
  %v3379 = vadd.f32 0.0, %v3378
  %v3380 = vpop.f32.mrf.mxu0
  %v3381 = vadd.f32 0.0, %v3380
  %3382 = vmatprep.mubr.f32.mxu0 0.0
  %3383 = vmatmul.mubr.f32.gmra.mxu0 %v3300
  %v3384 = vpop.f32.mrf.mxu0
  %v3385 = vadd.f32 0.0, %v3384
  %v3386 = vpop.f32.mrf.mxu0
  %v3387 = vadd.f32 0.0, %v3386
  %3388 = vmatprep.mubr.f32.mxu0 0.0
  %3389 = vmatmul.mubr.f32.gmra.mxu0 %v3302
  %v3390 = vpop.f32.mrf.mxu0
  %v3391 = vadd.f32 0.0, %v3390
  %v3392 = vpop.f32.mrf.mxu0
  %v3393 = vadd.f32 0.0, %v3392
  %3394 = vmatprep.mubr.f32.mxu0 0.0
  %3395 = vmatmul.mubr.f32.gmra.mxu0 %v3304
  %v3396 = vpop.f32.mrf.mxu0
  %v3397 = vadd.f32 0.0, %v3396
  %v3398 = vpop.f32.mrf.mxu0
  %v3399 = vadd.f32 0.0, %v3398
  %3400 = vmatprep.mubr.f32.mxu0 0.0
  %3401 = vmatmul.mubr.f32.gmra.mxu0 %v3306
  %v3402 = vpop.f32.mrf.mxu0
  %v3403 = vadd.f32 0.0, %v3402
  %v3404 = vpop.f32.mrf.mxu0
  %v3405 = vadd.f32 0.0, %v3404
  %3406 = vdwg.mxu0
  %3407 = vmatprep.subr.mxu0 %v3257
  %3408 = vmatpush1.msra.mxu0 %v3256
  %3409 = vmatprep.subr.mxu0 %v3255
  %3410 = vmatpush1.msra.mxu0 %v3254
  %3411 = vmatprep.subr.mxu0 %v3253
  %3412 = vmatpush1.msra.mxu0 %v3252
  %3413 = vmatprep.subr.mxu0 %v3251
  %3414 = vmatpush1.msra.mxu0 %v3250
  %3415 = vmatprep.subr.mxu0 %v3249
  %3416 = vmatpush1.msra.mxu0 %v3248
  %3417 = vmatprep.subr.mxu0 %v3247
  %3418 = vmatpush1.msra.mxu0 %v3246
  %3419 = vmatprep.subr.mxu0 %v3245
  %3420 = vmatpush1.msra.mxu0 %v3244
  %3421 = vmatprep.subr.mxu0 %v3243
  %3422 = vmatpush1.msra.mxu0 %v3242
  %3423 = vmatprep.subr.mxu0 %v3241
  %3424 = vmatpush1.msra.mxu0 %v3240
  %3425 = vmatprep.subr.mxu0 %v3239
  %3426 = vmatpush1.msra.mxu0 %v3238
  %3427 = vmatprep.subr.mxu0 %v3237
  %3428 = vmatpush1.msra.mxu0 %v3236
  %3429 = vmatprep.subr.mxu0 %v3235
  %3430 = vmatpush1.msra.mxu0 %v3234
  %3431 = vmatprep.subr.mxu0 %v3233
  %3432 = vmatpush1.msra.mxu0 %v3232
  %3433 = vmatprep.subr.mxu0 %v3231
  %3434 = vmatpush1.msra.mxu0 %v3230
  %3435 = vmatprep.subr.mxu0 %v3229
  %3436 = vmatpush1.msra.mxu0 %v3228
  %3437 = vmatprep.subr.mxu0 %v3227
  %3438 = vmatpush1.msra.mxu0 %v3226
  %3439 = vmatprep.subr.mxu0 0.0
  %3440 = vmatpush2.msra.mxu0 0.0
  %3441 = vmatprep.subr.mxu0 0.0
  %3442 = vmatpush2.msra.mxu0 0.0
  %3443 = vmatprep.subr.mxu0 0.0
  %3444 = vmatpush2.msra.mxu0 0.0
  %3445 = vmatprep.subr.mxu0 0.0
  %3446 = vmatpush2.msra.mxu0 0.0
  %3447 = vmatprep.subr.mxu0 0.0
  %3448 = vmatpush2.msra.mxu0 0.0
  %3449 = vmatprep.subr.mxu0 0.0
  %3450 = vmatpush2.msra.mxu0 0.0
  %3451 = vmatprep.subr.mxu0 0.0
  %3452 = vmatpush2.msra.mxu0 0.0
  %3453 = vmatprep.subr.mxu0 0.0
  %3454 = vmatpush2.msra.mxu0 0.0
  %3455 = vmatprep.subr.mxu0 0.0
  %3456 = vmatpush2.msra.mxu0 0.0
  %3457 = vmatprep.subr.mxu0 0.0
  %3458 = vmatpush2.msra.mxu0 0.0
  %3459 = vmatprep.subr.mxu0 0.0
  %3460 = vmatpush2.msra.mxu0 0.0
  %3461 = vmatprep.subr.mxu0 0.0
  %3462 = vmatpush2.msra.mxu0 0.0
  %3463 = vmatprep.subr.mxu0 0.0
  %3464 = vmatpush2.msra.mxu0 0.0
  %3465 = vmatprep.subr.mxu0 0.0
  %3466 = vmatpush2.msra.mxu0 0.0
  %3467 = vmatprep.subr.mxu0 0.0
  %3468 = vmatpush2.msra.mxu0 0.0
  %3469 = vmatprep.subr.mxu0 0.0
  %3470 = vmatpush2.msra.mxu0 0.0
  %3471 = vmatprep.mubr.f32.mxu0 0.0
  %3472 = vmatmul.mubr.f32.gmra.mxu0 %v3219
  %v3473 = vpop.f32.mrf.mxu0
  %v3474 = vadd.f32 %v3379, %v3473
  %v3475 = vpop.f32.mrf.mxu0
  %v3476 = vadd.f32 %v3381, %v3475
  %3477 = vmatprep.mubr.f32.mxu0 0.0
  %3478 = vmatmul.mubr.f32.gmra.mxu0 %v3220
  %v3479 = vpop.f32.mrf.mxu0
  %v3480 = vadd.f32 %v3385, %v3479
  %v3481 = vpop.f32.mrf.mxu0
  %v3482 = vadd.f32 %v3387, %v3481
  %3483 = vmatprep.mubr.f32.mxu0 0.0
  %3484 = vmatmul.mubr.f32.gmra.mxu0 %v3221
  %v3485 = vpop.f32.mrf.mxu0
  %v3486 = vadd.f32 %v3391, %v3485
  %v3487 = vpop.f32.mrf.mxu0
  %v3488 = vadd.f32 %v3393, %v3487
  %3489 = vmatprep.mubr.f32.mxu0 0.0
  %3490 = vmatmul.mubr.f32.gmra.mxu0 %v3222
  %v3491 = vpop.f32.mrf.mxu0
  %v3492 = vadd.f32 %v3397, %v3491
  %v3493 = vpop.f32.mrf.mxu0
  %v3494 = vadd.f32 %v3399, %v3493
  %3495 = vmatprep.mubr.f32.mxu0 0.0
  %3496 = vmatmul.mubr.f32.gmra.mxu0 %v3223
  %v3497 = vpop.f32.mrf.mxu0
  %v3498 = vadd.f32 %v3403, %v3497
  %v3499 = vpop.f32.mrf.mxu0
  %v3500 = vadd.f32 %v3405, %v3499
  %3501 = vdwg.mxu0
  %v3502 = vld [vmem:[%s1552] sm:$0xff]
  %v3503 = vld [vmem:[%s1552 + $0x8] sm:$0xff]
  %v3504 = vld [vmem:[%s1552 + $0x10] sm:$0xff]
  %v3505 = vld [vmem:[%s1552 + $0x18] sm:$0xff]
  %v3506 = vld [vmem:[%s1552 + $0x20] sm:$0xff]
  %v3507 = vld [vmem:[%s1552 + $0x28] sm:$0xff]
  %v3508 = vld [vmem:[%s1552 + $0x30] sm:$0xff]
  %v3509 = vld [vmem:[%s1552 + $0x38] sm:$0xff]
  %v3510 = vld [vmem:[%s1552 + $0x40] sm:$0xff]
  %v3511 = vld [vmem:[%s1552 + $0x48] sm:$0xff]
  %v3512 = vld [vmem:[%s1552 + $0x50] sm:$0xff]
  %v3513 = vld [vmem:[%s1552 + $0x58] sm:$0xff]
  %v3514 = vld [vmem:[%s1552 + $0x60] sm:$0xff]
  %v3515 = vld [vmem:[%s1552 + $0x68] sm:$0xff]
  %v3516 = vld [vmem:[%s1552 + $0x70] sm:$0xff]
  %v3517 = vld [vmem:[%s1552 + $0x78] sm:$0xff]
  %v3518 = vld [vmem:[%s1552 + $0x80] sm:$0xff]
  %v3519 = vld [vmem:[%s1552 + $0x88] sm:$0xff]
  %v3520 = vld [vmem:[%s1552 + $0x90] sm:$0xff]
  %v3521 = vld [vmem:[%s1552 + $0x98] sm:$0xff]
  %v3522 = vld [vmem:[%s1552 + $0xa0] sm:$0xff]
  %v3523 = vld [vmem:[%s1552 + $0xa8] sm:$0xff]
  %v3524 = vld [vmem:[%s1552 + $0xb0] sm:$0xff]
  %v3525 = vld [vmem:[%s1552 + $0xb8] sm:$0xff]
  %v3526 = vld [vmem:[%s1552 + $0xc0] sm:$0xff]
  %v3527 = vld [vmem:[%s1552 + $0xc8] sm:$0xff]
  %v3528 = vld [vmem:[%s1552 + $0xd0] sm:$0xff]
  %v3529 = vld [vmem:[%s1552 + $0xd8] sm:$0xff]
  %v3530 = vld [vmem:[%s1552 + $0xe0] sm:$0xff]
  %v3531 = vld [vmem:[%s1552 + $0xe8] sm:$0xff]
  %v3532 = vld [vmem:[%s1552 + $0xf0] sm:$0xff]
  %v3533 = vld [vmem:[%s1552 + $0xf8] sm:$0xff]
  %3534 = vmatprep.subr.mxu0 %v3533
  %3535 = vmatpush1.msra.mxu0 %v3532
  %3536 = vmatprep.subr.mxu0 %v3531
  %3537 = vmatpush1.msra.mxu0 %v3530
  %3538 = vmatprep.subr.mxu0 %v3529
  %3539 = vmatpush1.msra.mxu0 %v3528
  %3540 = vmatprep.subr.mxu0 %v3527
  %3541 = vmatpush1.msra.mxu0 %v3526
  %3542 = vmatprep.subr.mxu0 %v3525
  %3543 = vmatpush1.msra.mxu0 %v3524
  %3544 = vmatprep.subr.mxu0 %v3523
  %3545 = vmatpush1.msra.mxu0 %v3522
  %3546 = vmatprep.subr.mxu0 %v3521
  %3547 = vmatpush1.msra.mxu0 %v3520
  %3548 = vmatprep.subr.mxu0 %v3519
  %3549 = vmatpush1.msra.mxu0 %v3518
  %3550 = vmatprep.subr.mxu0 %v3517
  %3551 = vmatpush1.msra.mxu0 %v3516
  %3552 = vmatprep.subr.mxu0 %v3515
  %3553 = vmatpush1.msra.mxu0 %v3514
  %3554 = vmatprep.subr.mxu0 %v3513
  %3555 = vmatpush1.msra.mxu0 %v3512
  %3556 = vmatprep.subr.mxu0 %v3511
  %3557 = vmatpush1.msra.mxu0 %v3510
  %3558 = vmatprep.subr.mxu0 %v3509
  %3559 = vmatpush1.msra.mxu0 %v3508
  %3560 = vmatprep.subr.mxu0 %v3507
  %3561 = vmatpush1.msra.mxu0 %v3506
  %3562 = vmatprep.subr.mxu0 %v3505
  %3563 = vmatpush1.msra.mxu0 %v3504
  %3564 = vmatprep.subr.mxu0 %v3503
  %3565 = vmatpush1.msra.mxu0 %v3502
  %3566 = vmatprep.subr.mxu0 0.0
  %3567 = vmatpush2.msra.mxu0 0.0
  %3568 = vmatprep.subr.mxu0 0.0
  %3569 = vmatpush2.msra.mxu0 0.0
  %3570 = vmatprep.subr.mxu0 0.0
  %3571 = vmatpush2.msra.mxu0 0.0
  %3572 = vmatprep.subr.mxu0 0.0
  %3573 = vmatpush2.msra.mxu0 0.0
  %3574 = vmatprep.subr.mxu0 0.0
  %3575 = vmatpush2.msra.mxu0 0.0
  %3576 = vmatprep.subr.mxu0 0.0
  %3577 = vmatpush2.msra.mxu0 0.0
  %3578 = vmatprep.subr.mxu0 0.0
  %3579 = vmatpush2.msra.mxu0 0.0
  %3580 = vmatprep.subr.mxu0 0.0
  %3581 = vmatpush2.msra.mxu0 0.0
  %3582 = vmatprep.subr.mxu0 0.0
  %3583 = vmatpush2.msra.mxu0 0.0
  %3584 = vmatprep.subr.mxu0 0.0
  %3585 = vmatpush2.msra.mxu0 0.0
  %3586 = vmatprep.subr.mxu0 0.0
  %3587 = vmatpush2.msra.mxu0 0.0
  %3588 = vmatprep.subr.mxu0 0.0
  %3589 = vmatpush2.msra.mxu0 0.0
  %3590 = vmatprep.subr.mxu0 0.0
  %3591 = vmatpush2.msra.mxu0 0.0
  %3592 = vmatprep.subr.mxu0 0.0
  %3593 = vmatpush2.msra.mxu0 0.0
  %3594 = vmatprep.subr.mxu0 0.0
  %3595 = vmatpush2.msra.mxu0 0.0
  %3596 = vmatprep.subr.mxu0 0.0
  %3597 = vmatpush2.msra.mxu0 0.0
  %3598 = vmatprep.mubr.f32.mxu0 0.0
  %3599 = vmatmul.mubr.f32.gmra.mxu0 %v3220
  %v3600 = vpop.f32.mrf.mxu0
  %v3601 = vadd.f32 0.0, %v3600
  %v3602 = vpop.f32.mrf.mxu0
  %v3603 = vadd.f32 0.0, %v3602
  %3604 = vmatprep.mubr.f32.mxu0 0.0
  %3605 = vmatmul.mubr.f32.gmra.mxu0 %v3221
  %v3606 = vpop.f32.mrf.mxu0
  %v3607 = vadd.f32 0.0, %v3606
  %v3608 = vpop.f32.mrf.mxu0
  %v3609 = vadd.f32 0.0, %v3608
  %3610 = vmatprep.mubr.f32.mxu0 0.0
  %3611 = vmatmul.mubr.f32.gmra.mxu0 %v3222
  %v3612 = vpop.f32.mrf.mxu0
  %v3613 = vadd.f32 0.0, %v3612
  %v3614 = vpop.f32.mrf.mxu0
  %v3615 = vadd.f32 0.0, %v3614
  %3616 = vmatprep.mubr.f32.mxu0 0.0
  %3617 = vmatmul.mubr.f32.gmra.mxu0 %v3223
  %v3618 = vpop.f32.mrf.mxu0
  %v3619 = vadd.f32 0.0, %v3618
  %v3620 = vpop.f32.mrf.mxu0
  %v3621 = vadd.f32 0.0, %v3620
  %3622 = vmatprep.mubr.f32.mxu0 0.0
  %3623 = vmatmul.mubr.f32.gmra.mxu0 %v3224
  %v3624 = vpop.f32.mrf.mxu0
  %v3625 = vadd.f32 0.0, %v3624
  %v3626 = vpop.f32.mrf.mxu0
  %v3627 = vadd.f32 0.0, %v3626
  %3628 = vdwg.mxu0
  %v3629 = vadd.f32 %v3474, %v3601
  %v3630 = vadd.f32 %v3476, %v3603
  %v3631 = vadd.f32 %v3480, %v3607
  %v3632 = vadd.f32 %v3482, %v3609
  %v3633 = vadd.f32 %v3486, %v3613
  %v3634 = vadd.f32 %v3488, %v3615
  %v3635 = vadd.f32 %v3492, %v3619
  %v3636 = vadd.f32 %v3494, %v3621
  %v3637 = vadd.f32 %v3498, %v3625
  %v3638 = vadd.f32 %v3500, %v3627
  %v3639 = vld [vmem:[%s1690] sm:$0xff]
  %v3640 = vld [vmem:[%s1690 + $0x8] sm:$0xff]
  %v3641 = vld [vmem:[%s1690 + $0x10] sm:$0xff]
  %v3642 = vld [vmem:[%s1690 + $0x18] sm:$0xff]
  %v3643 = vld [vmem:[%s1690 + $0x20] sm:$0xff]
  %v3644 = vld [vmem:[%s1690 + $0x28] sm:$0xff]
  %v3645 = vld [vmem:[%s1690 + $0x30] sm:$0xff]
  %v3646 = vld [vmem:[%s1690 + $0x38] sm:$0xff]
  %v3647 = vld [vmem:[%s1690 + $0x40] sm:$0xff]
  %v3648 = vld [vmem:[%s1690 + $0x48] sm:$0xff]
  %v3649 = vld [vmem:[%s1690 + $0x50] sm:$0xff]
  %v3650 = vld [vmem:[%s1690 + $0x58] sm:$0xff]
  %v3651 = vld [vmem:[%s1690 + $0x60] sm:$0xff]
  %v3652 = vld [vmem:[%s1690 + $0x68] sm:$0xff]
  %v3653 = vld [vmem:[%s1690 + $0x70] sm:$0xff]
  %v3654 = vld [vmem:[%s1690 + $0x78] sm:$0xff]
  %v3655 = vld [vmem:[%s1690 + $0x80] sm:$0xff]
  %v3656 = vld [vmem:[%s1690 + $0x88] sm:$0xff]
  %v3657 = vld [vmem:[%s1690 + $0x90] sm:$0xff]
  %v3658 = vld [vmem:[%s1690 + $0x98] sm:$0xff]
  %v3659 = vld [vmem:[%s1690 + $0xa0] sm:$0xff]
  %v3660 = vld [vmem:[%s1690 + $0xa8] sm:$0xff]
  %v3661 = vld [vmem:[%s1690 + $0xb0] sm:$0xff]
  %v3662 = vld [vmem:[%s1690 + $0xb8] sm:$0xff]
  %v3663 = vld [vmem:[%s1690 + $0xc0] sm:$0xff]
  %v3664 = vld [vmem:[%s1690 + $0xc8] sm:$0xff]
  %v3665 = vld [vmem:[%s1690 + $0xd0] sm:$0xff]
  %v3666 = vld [vmem:[%s1690 + $0xd8] sm:$0xff]
  %v3667 = vld [vmem:[%s1690 + $0xe0] sm:$0xff]
  %v3668 = vld [vmem:[%s1690 + $0xe8] sm:$0xff]
  %v3669 = vld [vmem:[%s1690 + $0xf0] sm:$0xff]
  %v3670 = vld [vmem:[%s1690 + $0xf8] sm:$0xff]
  %v3672 = vrot.slane %v3225, 1
  %v3673 = vsel %vm54, %v3305, %v3672
  %3675 = vmatprep.subr.mxu0 %v3670
  %3676 = vmatpush1.msra.mxu0 %v3669
  %3677 = vmatprep.subr.mxu0 %v3668
  %3678 = vmatpush1.msra.mxu0 %v3667
  %3679 = vmatprep.subr.mxu0 %v3666
  %3680 = vmatpush1.msra.mxu0 %v3665
  %3681 = vmatprep.subr.mxu0 %v3664
  %3682 = vmatpush1.msra.mxu0 %v3663
  %3683 = vmatprep.subr.mxu0 %v3662
  %3684 = vmatpush1.msra.mxu0 %v3661
  %3685 = vmatprep.subr.mxu0 %v3660
  %3686 = vmatpush1.msra.mxu0 %v3659
  %3687 = vmatprep.subr.mxu0 %v3658
  %3688 = vmatpush1.msra.mxu0 %v3657
  %3689 = vmatprep.subr.mxu0 %v3656
  %3690 = vmatpush1.msra.mxu0 %v3655
  %3691 = vmatprep.subr.mxu0 %v3654
  %3692 = vmatpush1.msra.mxu0 %v3653
  %3693 = vmatprep.subr.mxu0 %v3652
  %3694 = vmatpush1.msra.mxu0 %v3651
  %3695 = vmatprep.subr.mxu0 %v3650
  %3696 = vmatpush1.msra.mxu0 %v3649
  %3697 = vmatprep.subr.mxu0 %v3648
  %3698 = vmatpush1.msra.mxu0 %v3647
  %3699 = vmatprep.subr.mxu0 %v3646
  %3700 = vmatpush1.msra.mxu0 %v3645
  %3701 = vmatprep.subr.mxu0 %v3644
  %3702 = vmatpush1.msra.mxu0 %v3643
  %3703 = vmatprep.subr.mxu0 %v3642
  %3704 = vmatpush1.msra.mxu0 %v3641
  %3705 = vmatprep.subr.mxu0 %v3640
  %3706 = vmatpush1.msra.mxu0 %v3639
  %3707 = vmatprep.subr.mxu0 0.0
  %3708 = vmatpush2.msra.mxu0 0.0
  %3709 = vmatprep.subr.mxu0 0.0
  %3710 = vmatpush2.msra.mxu0 0.0
  %3711 = vmatprep.subr.mxu0 0.0
  %3712 = vmatpush2.msra.mxu0 0.0
  %3713 = vmatprep.subr.mxu0 0.0
  %3714 = vmatpush2.msra.mxu0 0.0
  %3715 = vmatprep.subr.mxu0 0.0
  %3716 = vmatpush2.msra.mxu0 0.0
  %3717 = vmatprep.subr.mxu0 0.0
  %3718 = vmatpush2.msra.mxu0 0.0
  %3719 = vmatprep.subr.mxu0 0.0
  %3720 = vmatpush2.msra.mxu0 0.0
  %3721 = vmatprep.subr.mxu0 0.0
  %3722 = vmatpush2.msra.mxu0 0.0
  %3723 = vmatprep.subr.mxu0 0.0
  %3724 = vmatpush2.msra.mxu0 0.0
  %3725 = vmatprep.subr.mxu0 0.0
  %3726 = vmatpush2.msra.mxu0 0.0
  %3727 = vmatprep.subr.mxu0 0.0
  %3728 = vmatpush2.msra.mxu0 0.0
  %3729 = vmatprep.subr.mxu0 0.0
  %3730 = vmatpush2.msra.mxu0 0.0
  %3731 = vmatprep.subr.mxu0 0.0
  %3732 = vmatpush2.msra.mxu0 0.0
  %3733 = vmatprep.subr.mxu0 0.0
  %3734 = vmatpush2.msra.mxu0 0.0
  %3735 = vmatprep.subr.mxu0 0.0
  %3736 = vmatpush2.msra.mxu0 0.0
  %3737 = vmatprep.subr.mxu0 0.0
  %3738 = vmatpush2.msra.mxu0 0.0
  %3739 = vmatprep.mubr.f32.mxu0 0.0
  %3740 = vmatmul.mubr.f32.gmra.mxu0 %v3300
  %v3741 = vpop.f32.mrf.mxu0
  %v3742 = vadd.f32 0.0, %v3741
  %v3743 = vpop.f32.mrf.mxu0
  %v3744 = vadd.f32 0.0, %v3743
  %3745 = vmatprep.mubr.f32.mxu0 0.0
  %3746 = vmatmul.mubr.f32.gmra.mxu0 %v3302
  %v3747 = vpop.f32.mrf.mxu0
  %v3748 = vadd.f32 0.0, %v3747
  %v3749 = vpop.f32.mrf.mxu0
  %v3750 = vadd.f32 0.0, %v3749
  %3751 = vmatprep.mubr.f32.mxu0 0.0
  %3752 = vmatmul.mubr.f32.gmra.mxu0 %v3304
  %v3753 = vpop.f32.mrf.mxu0
  %v3754 = vadd.f32 0.0, %v3753
  %v3755 = vpop.f32.mrf.mxu0
  %v3756 = vadd.f32 0.0, %v3755
  %3757 = vmatprep.mubr.f32.mxu0 0.0
  %3758 = vmatmul.mubr.f32.gmra.mxu0 %v3306
  %v3759 = vpop.f32.mrf.mxu0
  %v3760 = vadd.f32 0.0, %v3759
  %v3761 = vpop.f32.mrf.mxu0
  %v3762 = vadd.f32 0.0, %v3761
  %3763 = vmatprep.mubr.f32.mxu0 0.0
  %3764 = vmatmul.mubr.f32.gmra.mxu0 %v3673
  %v3765 = vpop.f32.mrf.mxu0
  %v3766 = vadd.f32 0.0, %v3765
  %v3767 = vpop.f32.mrf.mxu0
  %v3768 = vadd.f32 0.0, %v3767
  %3769 = vdwg.mxu0
  %v3770 = vadd.f32 %v3629, %v3742
  %v3771 = vadd.f32 %v3630, %v3744
  %v3772 = vadd.f32 %v3631, %v3748
  %v3773 = vadd.f32 %v3632, %v3750
  %v3774 = vadd.f32 %v3633, %v3754
  %v3775 = vadd.f32 %v3634, %v3756
  %v3776 = vadd.f32 %v3635, %v3760
  %v3777 = vadd.f32 %v3636, %v3762
  %v3778 = vadd.f32 %v3637, %v3766
  %v3779 = vadd.f32 %v3638, %v3768
  %v3780 = vld [vmem:[%s4] sm:$0x3]
  %v3782 = vlaneseq
  %v3783 = vshrl.u32 %v3782, 7
  %v3784 = vsub.s32 0, %v3783
  %v3785 = vrot.slane %v3780, %v3784
  %v3786 = vlaneseq
  %v3787 = vshrl.u32 %v3786, 7
  %v3788 = vsub.s32 1, %v3787
  %v3789 = vrot.slane %v3780, %v3788
  %v3792 = vadd.f32 %v3770, %v3785
  %v3793 = vadd.f32 %v3771, %v3789
  %v3794 = vadd.f32 %v3772, %v3785
  %v3795 = vadd.f32 %v3773, %v3789
  %v3796 = vadd.f32 %v3774, %v3785
  %v3797 = vadd.f32 %v3775, %v3789
  %v3798 = vadd.f32 %v3776, %v3785
  %v3799 = vadd.f32 %v3777, %v3789
  %v3800 = vadd.f32 %v3778, %v3785
  %v3801 = vadd.f32 %v3779, %v3789
  %v3802 = vxor.u32 %v3792, 2147483648
  %v3803 = vxor.u32 %v3793, 2147483648
  %v3804 = vxor.u32 %v3794, 2147483648
  %v3805 = vxor.u32 %v3795, 2147483648
  %v3806 = vxor.u32 %v3796, 2147483648
  %v3807 = vxor.u32 %v3797, 2147483648
  %v3808 = vxor.u32 %v3798, 2147483648
  %v3809 = vxor.u32 %v3799, 2147483648
  %v3810 = vxor.u32 %v3800, 2147483648
  %v3811 = vxor.u32 %v3801, 2147483648
  %v3812 = vmul.f32 %v3802, 1.442695
  %v3813 = vpow.pop %v3812
  %v3814 = vmul.f32 %v3803, 1.442695
  %v3815 = vpow.pop %v3814
  %v3816 = vmul.f32 %v3804, 1.442695
  %v3817 = vpow.pop %v3816
  %v3818 = vmul.f32 %v3805, 1.442695
  %v3819 = vpow.pop %v3818
  %v3820 = vmul.f32 %v3806, 1.442695
  %v3821 = vpow.pop %v3820
  %v3822 = vmul.f32 %v3807, 1.442695
  %v3823 = vpow.pop %v3822
  %v3824 = vmul.f32 %v3808, 1.442695
  %v3825 = vpow.pop %v3824
  %v3826 = vmul.f32 %v3809, 1.442695
  %v3827 = vpow.pop %v3826
  %v3828 = vmul.f32 %v3810, 1.442695
  %v3829 = vpow.pop %v3828
  %v3830 = vmul.f32 %v3811, 1.442695
  %v3831 = vpow.pop %v3830
  %v3832 = vadd.f32 %v3813, 1.0
  %v3833 = vadd.f32 %v3815, 1.0
  %v3834 = vadd.f32 %v3817, 1.0
  %v3835 = vadd.f32 %v3819, 1.0
  %v3836 = vadd.f32 %v3821, 1.0
  %v3837 = vadd.f32 %v3823, 1.0
  %v3838 = vadd.f32 %v3825, 1.0
  %v3839 = vadd.f32 %v3827, 1.0
  %v3840 = vadd.f32 %v3829, 1.0
  %v3841 = vadd.f32 %v3831, 1.0
  %v3842 = vrcp.pop %v3832
  %v3843 = vmul.f32 1.0, %v3842
  %v3844 = vrcp.pop %v3833
  %v3845 = vmul.f32 1.0, %v3844
  %v3846 = vrcp.pop %v3834
  %v3847 = vmul.f32 1.0, %v3846
  %v3848 = vrcp.pop %v3835
  %v3849 = vmul.f32 1.0, %v3848
  %v3850 = vrcp.pop %v3836
  %v3851 = vmul.f32 1.0, %v3850
  %v3852 = vrcp.pop %v3837
  %v3853 = vmul.f32 1.0, %v3852
  %v3854 = vrcp.pop %v3838
  %v3855 = vmul.f32 1.0, %v3854
  %v3856 = vrcp.pop %v3839
  %v3857 = vmul.f32 1.0, %v3856
  %v3858 = vrcp.pop %v3840
  %v3859 = vmul.f32 1.0, %v3858
  %v3860 = vrcp.pop %v3841
  %v3861 = vmul.f32 1.0, %v3860
  %3867 = vrot.lane.b32.xlu0 %v3843, 64
  %v3868 = vpop.permute.xlu0 %3867
  %3869 = vrot.lane.b32.xlu0 %v3847, 64
  %v3870 = vpop.permute.xlu0 %3869
  %3871 = vrot.lane.b32.xlu0 %v3851, 64
  %v3872 = vpop.permute.xlu0 %3871
  %3873 = vrot.lane.b32.xlu0 %v3855, 64
  %v3874 = vpop.permute.xlu0 %3873
  %3875 = vrot.lane.b32.xlu0 %v3859, 64
  %v3876 = vpop.permute.xlu0 %3875
  %v3882 = vmax.f32 %v3843, %v3868
  %v3883 = vmax.f32 %v3847, %v3870
  %v3884 = vmax.f32 %v3851, %v3872
  %v3885 = vmax.f32 %v3855, %v3874
  %v3886 = vmax.f32 %v3859, %v3876
  %3892 = vrot.lane.b32.xlu0 %v3845, 64
  %v3893 = vpop.permute.xlu0 %3892
  %3894 = vrot.lane.b32.xlu0 %v3849, 64
  %v3895 = vpop.permute.xlu0 %3894
  %3896 = vrot.lane.b32.xlu0 %v3853, 64
  %v3897 = vpop.permute.xlu0 %3896
  %3898 = vrot.lane.b32.xlu0 %v3857, 64
  %v3899 = vpop.permute.xlu0 %3898
  %3900 = vrot.lane.b32.xlu0 %v3861, 64
  %v3901 = vpop.permute.xlu0 %3900
  %v3907 = vmax.f32 %v3845, %v3893
  %v3908 = vmax.f32 %v3849, %v3895
  %v3909 = vmax.f32 %v3853, %v3897
  %v3910 = vmax.f32 %v3857, %v3899
  %v3911 = vmax.f32 %v3861, %v3901
  %v3912 = vmax.f32 %v3882, %v3907
  %v3913 = vmax.f32 %v3883, %v3908
  %v3914 = vmax.f32 %v3884, %v3909
  %v3915 = vmax.f32 %v3885, %v3910
  %v3916 = vmax.f32 %v3886, %v3911
  %s3917 = scalar_lea.vmem %s5, 40
  %3918 = vst.msk [vmem:[%s3917] sm:$0xff] %vm1969, %v3912
  %3919 = vst.msk [vmem:[%s3917 + $0x8] sm:$0xff] %vm1969, %v3913
  %3920 = vst.msk [vmem:[%s3917 + $0x10] sm:$0xff] %vm1969, %v3914
  %3921 = vst.msk [vmem:[%s3917 + $0x18] sm:$0xff] %vm1969, %v3915
  %3922 = vst.msk [vmem:[%s3917 + $0x20] sm:$0xff] %vm1969, %v3916
  // Predicated region
  $region22: #{net_sigmoid_forward.2} parent=0 // pred_check
    _
  $region23: #{net_sigmoid_forward.2} parent=0 // pred_check_branch
    %3924 = sbr.rel (0) target = $region25
  $region24: #{net_sigmoid_forward.2} parent=0 // pred_region
    _
  $region25: #{net_sigmoid_forward.2} parent=0 // pred_fallthru
    _
  // Predicated region
  $region26: #{net_sigmoid_forward.2} parent=0 // pred_check
    _
  $region27: #{net_sigmoid_forward.2} parent=0 // pred_check_branch
    %3926 = sbr.rel (0) target = $region29
  $region28: #{net_sigmoid_forward.2} parent=0 // pred_region
    _
  $region29: #{net_sigmoid_forward.2} parent=0 // pred_fallthru
    _

</llo_original>
